<compile_context>
chip_gen: v7x
topology: tpu7x:2x2x1
jax: 0.10.0
libtpu: 0.0.40
codegen_flags: <defaults>
</compile_context>

<pallas_src>
import functools
import math

import jax
import jax.numpy as jnp
import numpy as np
from jax.experimental import pallas as pl
from jax.experimental.pallas import tpu as pltpu


def _split_attention_kernel(x_ref, wqkv_ref, bqkv_ref, wp_ref, bp_ref,
                            y_ref, ent_ref, y_acc_ref,
                            *, n_head, compute_dtype):
    """One grid step processes a block of Bb batch elements.

    x_ref:    (Bb, T, C)       VMEM
    wqkv_ref: (C, 3C)          VMEM  ([Wq | Wk | Wv], pre-transposed in x out)
    bqkv_ref: (1, 3C)          VMEM  (f32)
    wp_ref:   (C, C)           VMEM
    bp_ref:   (1, C)           VMEM  (f32)
    y_ref:    (Bb, T, C)       VMEM
    ent_ref:  (1, 1, 128)      VMEM  (per-block mean attention entropy, replicated)
    y_acc_ref:(Bb*T, C)        VMEM scratch (f32) - assembled head outputs
    """
    Bb, T, C = x_ref.shape
    D = C // n_head
    scale = 1.0 / math.sqrt(D)
    f32 = jnp.float32

    # Fused QKV projection: a single (Bb*T, C) @ (C, 3C) MXU pass, f32 accumulate.
    x = x_ref[...].reshape(Bb * T, C).astype(compute_dtype)
    qkv = jnp.dot(x, wqkv_ref[...], preferred_element_type=f32) + bqkv_ref[...]

    # Causal mask (the registered tril `bias` buffer), shared by all heads/batches.
    row = jax.lax.broadcasted_iota(jnp.int32, (T, T), 0)
    col = jax.lax.broadcasted_iota(jnp.int32, (T, T), 1)
    causal = row >= col
    neg_inf = jnp.float32(-jnp.inf)

    ent_sum = jnp.float32(0.0)
    # Bb * n_head is small & static -> unrolled Python loop.
    # (Switch to lax.fori_loop writing into the scratch slab for n_head >= 16.)
    for b in range(Bb):
        r0 = b * T
        for h in range(n_head):
            c0 = h * D
            qh = qkv[r0:r0 + T, c0:c0 + D]                    # (T, D) f32
            kh = qkv[r0:r0 + T, C + c0:C + c0 + D]            # (T, D) f32
            vh = qkv[r0:r0 + T, 2 * C + c0:2 * C + c0 + D]    # (T, D) f32

            # Scores: contract last dim of both operands (no explicit kh.T).
            s = jax.lax.dot_general(
                qh.astype(compute_dtype), kh.astype(compute_dtype),
                dimension_numbers=(((1,), (1,)), ((), ())),
                preferred_element_type=f32) * scale           # (T, T) f32
            s = jnp.where(causal, s, neg_inf)

            # Softmax (f32 elementwise math on the VPU/EUP).
            m = jnp.max(s, axis=-1, keepdims=True)
            e = jnp.exp(s - m)
            z = jnp.sum(e, axis=-1, keepdims=True)
            p = e / z                                         # (T, T) f32

            # Entropy per row = log(Z) - sum_j p_j * (s_j - m); masked entries
            # contribute exactly 0 (p = 0, shifted score forced to 0).
            # One log per row instead of T logs per row.
            s_shift = jnp.where(causal, s - m, 0.0)
            ent_sum += jnp.sum(jnp.log(z)) - jnp.sum(p * s_shift)

            # Head output, written straight into the (Bb*T, C) scratch slab
            # (no concatenate, no transpose).
            yh = jnp.dot(p.astype(compute_dtype), vh.astype(compute_dtype),
                         preferred_element_type=f32)          # (T, D) f32
            y_acc_ref[r0:r0 + T, c0:c0 + D] = yh

    # Output projection c_proj: a single (Bb*T, C) @ (C, C) MXU pass.
    y = y_acc_ref[...].astype(compute_dtype)
    out = jnp.dot(y, wp_ref[...], preferred_element_type=f32) + bp_ref[...]
    y_ref[...] = out.reshape(Bb, T, C).astype(y_ref.dtype)

    # Per-block mean entropy over (Bb, n_head, T), replicated into one lane tile.
    ent_mean = ent_sum / jnp.float32(Bb * n_head * T)
    ent_ref[...] = jnp.full(ent_ref.shape, ent_mean, dtype=jnp.float32)


def split_attention(x, params, n_head, *, compute_dtype=jnp.float32,
                    batch_block=None):
    """Returns (y, entropy_scalar) matching SplitAttention.forward + self.entropy.

    compute_dtype: dtype fed to the MXU matmuls (f32 or bf16). Accumulation,
    softmax and entropy math stay in f32 regardless (v5e-safe).
    """
    B, T, C = x.shape
    wq, bq, wk, bk, wv, bv, wp, bp = params

    # Fuse the three projections into one weight / bias so the kernel runs a
    # single MXU pass for Q/K/V.
    wqkv = jnp.concatenate([wq, wk, wv], axis=1).astype(compute_dtype)  # (C, 3C)
    bqkv = jnp.concatenate([bq, bk, bv], axis=1).astype(jnp.float32)    # (1, 3C)
    wp_c = wp.astype(compute_dtype)
    bp_c = bp.astype(jnp.float32)

    # Block multiple batch elements per grid step so the big GEMMs see >= ~256
    # rows (fills the 128/256-wide MXU when T is small).
    if batch_block is None:
        target = max(1, (256 + T - 1) // T)
        batch_block = 1
        for cand in range(1, B + 1):
            if B % cand == 0 and cand <= target:
                batch_block = cand
    Bb = batch_block
    assert B % Bb == 0, "batch_block must divide the batch size"
    num_blocks = B // Bb

    # Explicit scoped-VMEM budget: working set (x/y blocks, weights assumed
    # double-buffered, fused qkv activation, scratch slab, score temporaries)
    # with 2x headroom, clamped to the v7x-safe 64 MiB ceiling.
    wd = jnp.dtype(compute_dtype).itemsize
    xd = jnp.dtype(x.dtype).itemsize
    est = (2 * 2 * Bb * T * C * xd            # x + y blocks, double-buffered
           + 2 * (3 * C * C + C * C) * wd     # weights
           + 2 * 4 * C * 4                    # biases
           + Bb * T * 3 * C * 4               # qkv activation (f32)
           + Bb * T * C * 4                   # y scratch slab (f32)
           + 6 * T * T * 4)                   # score / prob temporaries
    vmem_limit = int(min(max(2 * est, 32 * 1024 * 1024), 64 * 1024 * 1024))

    kernel = functools.partial(_split_attention_kernel, n_head=n_head,
                               compute_dtype=compute_dtype)

    def build(weight_mode):
        wkw = {} if weight_mode is None else {"pipeline_mode": weight_mode}

        def wspec(shape):
            return pl.BlockSpec(shape, lambda i: (0, 0), **wkw)

        grid_spec = pltpu.PrefetchScalarGridSpec(
            num_scalar_prefetch=0,
            grid=(num_blocks,),
            in_specs=[
                pl.BlockSpec((Bb, T, C), lambda i: (i, 0, 0)),   # x
                wspec((C, 3 * C)),                               # [Wq|Wk|Wv]^T
                wspec((1, 3 * C)),                               # [bq|bk|bv]
                wspec((C, C)),                                   # Wproj^T
                wspec((1, C)),                                   # bproj
            ],
            out_specs=[
                pl.BlockSpec((Bb, T, C), lambda i: (i, 0, 0)),
                pl.BlockSpec((1, 1, 128), lambda i: (i, 0, 0)),
            ],
            scratch_shapes=[pltpu.VMEM((Bb * T, C), jnp.float32)],
        )
        return pl.pallas_call(
            kernel,
            out_shape=(jax.ShapeDtypeStruct((B, T, C), x.dtype),
                       jax.ShapeDtypeStruct((num_blocks, 1, 128), jnp.float32)),
            grid_spec=grid_spec,
            compiler_params=pltpu.CompilerParams(
                dimension_semantics=("parallel",),
                vmem_limit_bytes=vmem_limit),
        )

    args = (x, wqkv, bqkv, wp_c, bp_c)
    # Weights/biases never change across the grid -> request single-buffering
    # (saves a 2x copy of every (C,*C) tile; matters on v7x's 64 MiB VMEM).
    weight_mode = pl.Buffered(1) if hasattr(pl, "Buffered") else None
    if weight_mode is not None:
        try:
            y, ent = build(weight_mode)(*args)
        except Exception:
            y, ent = build(None)(*args)
    else:
        y, ent = build(None)(*args)

    # Mean of per-block means is exact: every block covers the same
    # Bb * n_head * T attention rows.
    entropy = jnp.mean(ent[:, 0, 0])
    return y, entropy


def _reference(x, params, n_head):
    """Pure-JAX reference mirroring the PyTorch forward (dropout = identity)."""
    B, T, C = x.shape
    D = C // n_head
    wq, bq, wk, bk, wv, bv, wp, bp = params
    q = x @ wq + bq[0]
    k = x @ wk + bk[0]
    v = x @ wv + bv[0]
    q = q.reshape(B, T, n_head, D).transpose(0, 2, 1, 3)
    k = k.reshape(B, T, n_head, D).transpose(0, 2, 1, 3)
    v = v.reshape(B, T, n_head, D).transpose(0, 2, 1, 3)
    att = (q @ jnp.swapaxes(k, -2, -1)) * (1.0 / math.sqrt(D))
    mask = jnp.tril(jnp.ones((T, T), dtype=bool))
    att = jnp.where(mask[None, None], att, -jnp.inf)
    att = jax.nn.softmax(att, axis=-1)
    ent = jnp.mean(-jnp.sum(att * jnp.log(att + 1e-8), axis=-1))
    y = (att @ v).transpose(0, 2, 1, 3).reshape(B, T, C)
    y = y @ wp + bp[0]
    return y, ent


if __name__ == "__main__":
    B, T, C, n_head = 2, 8, 32, 4   # block_size == T

    key = jax.random.PRNGKey(0)
    ks = jax.random.split(key, 9)
    s = 0.1
    x = jax.random.normal(ks[0], (B, T, C), dtype=jnp.float32)

    # Parameters (torch nn.Linear stores weight as (out, in); we keep the
    # transposed (in, out) form so the kernel computes x @ W + b).
    wq = s * jax.random.normal(ks[1], (C, C), dtype=jnp.float32)
    wk = s * jax.random.normal(ks[2], (C, C), dtype=jnp.float32)
    wv = s * jax.random.normal(ks[3], (C, C), dtype=jnp.float32)
    wp = s * jax.random.normal(ks[4], (C, C), dtype=jnp.float32)
    bq = s * jax.random.normal(ks[5], (1, C), dtype=jnp.float32)
    bk = s * jax.random.normal(ks[6], (1, C), dtype=jnp.float32)
    bv = s * jax.random.normal(ks[7], (1, C), dtype=jnp.float32)
    bp = s * jax.random.normal(ks[8], (1, C), dtype=jnp.float32)

    params = (wq, bq, wk, bk, wv, bv, wp, bp)

    # f32 path: tight check against the PyTorch-equivalent reference.
    y, entropy = split_attention(x, params, n_head)
    jax.block_until_ready((y, entropy))

    y_ref, ent_ref = _reference(x, params, n_head)
    np.testing.assert_allclose(np.asarray(y), np.asarray(y_ref), rtol=1e-5, atol=1e-5)
    np.testing.assert_allclose(float(entropy), float(ent_ref), rtol=1e-5, atol=1e-5)

    # bf16 MXU-operand path (v6e/v7x recommendation): loose smoke check.
    y16, ent16 = split_attention(x, params, n_head, compute_dtype=jnp.bfloat16)
    jax.block_until_ready((y16, ent16))
    np.testing.assert_allclose(np.asarray(y16), np.asarray(y_ref), rtol=5e-2, atol=5e-2)
    np.testing.assert_allclose(float(ent16), float(ent_ref), rtol=5e-2, atol=5e-2)

    print("KERNEL_OK")
</pallas_src>

<mosaic_0001>
module attributes {stable_mosaic.version = 11 : i64} {
  func.func @_split_attention_kernel(%arg0: i32, %arg1: memref<2x8x32xf32, #tpu.memory_space<vmem>>, %arg2: memref<32x96xf32, #tpu.memory_space<vmem>>, %arg3: memref<1x96xf32, #tpu.memory_space<vmem>>, %arg4: memref<32x32xf32, #tpu.memory_space<vmem>>, %arg5: memref<1x32xf32, #tpu.memory_space<vmem>>, %arg6: memref<2x8x32xf32, #tpu.memory_space<vmem>>, %arg7: memref<1x1x128xf32, #tpu.memory_space<vmem>>, %arg8: memref<16x32xf32, #tpu.memory_space<vmem>>) attributes {dimension_semantics = [#tpu.dimension_semantics<parallel>], iteration_bounds = array<i64: 1>, scalar_prefetch = 0 : i64, scratch_operands = 1 : i64, tpu.core_type = #tpu.core_type<tc>, window_params = [{transform_indices = @transform_0, window_bounds = array<i64: 2, 8, 32>}, {pipeline_mode = #tpu.pipeline_mode<synchronous>, transform_indices = @transform_1, window_bounds = array<i64: 32, 96>}, {pipeline_mode = #tpu.pipeline_mode<synchronous>, transform_indices = @transform_2, window_bounds = array<i64: 1, 96>}, {pipeline_mode = #tpu.pipeline_mode<synchronous>, transform_indices = @transform_3, window_bounds = array<i64: 32, 32>}, {pipeline_mode = #tpu.pipeline_mode<synchronous>, transform_indices = @transform_4, window_bounds = array<i64: 1, 32>}, {transform_indices = @transform_5, window_bounds = array<i64: 2, 8, 32>}, {transform_indices = @transform_6, window_bounds = array<i64: 1, 1, 128>}]} {
    %c0 = arith.constant 0 : index
    %c0_0 = arith.constant 0 : index
    %c0_1 = arith.constant 0 : index
    %0 = vector.load %arg1[%c0, %c0_0, %c0_1] : memref<2x8x32xf32, #tpu.memory_space<vmem>>, vector<2x8x32xf32>
    %1 = vector.shape_cast %0 : vector<2x8x32xf32> to vector<16x32xf32>
    %c0_2 = arith.constant 0 : index
    %c0_3 = arith.constant 0 : index
    %2 = vector.load %arg2[%c0_2, %c0_3] : memref<32x96xf32, #tpu.memory_space<vmem>>, vector<32x96xf32>
    %cst = arith.constant dense<0.000000e+00> : vector<16x96xf32>
    %3 = tpu.matmul %1, %2, %cst {dimension_numbers = #tpu.dot_dimension_numbers<[1], [0], [0], [1], [0, 0, 1, 1], [], []>} : vector<16x32xf32>, vector<32x96xf32>, vector<16x96xf32> -> vector<16x96xf32>
    %c0_4 = arith.constant 0 : index
    %c0_5 = arith.constant 0 : index
    %4 = vector.load %arg3[%c0_4, %c0_5] : memref<1x96xf32, #tpu.memory_space<vmem>>, vector<1x96xf32>
    %5 = vector.broadcast %4 : vector<1x96xf32> to vector<16x96xf32>
    %6 = arith.addf %3, %5 : vector<16x96xf32>
    %7 = tpu.iota {dimensions = array<i32: 0>} : vector<8x8xi32>
    %8 = tpu.iota {dimensions = array<i32: 1>} : vector<8x8xi32>
    %9 = arith.cmpi sge, %7, %8 : vector<8x8xi32>
    %10 = vector.extract_strided_slice %6 {offsets = [0, 0], sizes = [8, 8], strides = [1, 1]} : vector<16x96xf32> to vector<8x8xf32>
    %11 = vector.extract_strided_slice %6 {offsets = [0, 32], sizes = [8, 8], strides = [1, 1]} : vector<16x96xf32> to vector<8x8xf32>
    %12 = vector.extract_strided_slice %6 {offsets = [0, 64], sizes = [8, 8], strides = [1, 1]} : vector<16x96xf32> to vector<8x8xf32>
    %cst_6 = arith.constant dense<0.000000e+00> : vector<8x8xf32>
    %13 = tpu.matmul %10, %11, %cst_6 {dimension_numbers = #tpu.dot_dimension_numbers<[1], [1], [0], [0], [0, 0, 1, 0], [], []>} : vector<8x8xf32>, vector<8x8xf32>, vector<8x8xf32> -> vector<8x8xf32>
    %cst_7 = arith.constant 0.353553385 : f32
    %14 = vector.broadcast %cst_7 : f32 to vector<8x8xf32>
    %15 = arith.mulf %13, %14 : vector<8x8xf32>
    %cst_8 = arith.constant 0xFF800000 : f32
    %16 = vector.broadcast %cst_8 : f32 to vector<8x8xf32>
    %17 = arith.select %9, %15, %16 : vector<8x8xi1>, vector<8x8xf32>
    %cst_9 = arith.constant dense<0xFF800000> : vector<8xf32>
    %18 = vector.multi_reduction <maximumf>, %17, %cst_9 [1] : vector<8x8xf32> to vector<8xf32>
    %19 = vector.shape_cast %18 : vector<8xf32> to vector<8x1xf32>
    %20 = vector.broadcast %19 : vector<8x1xf32> to vector<8x8xf32>
    %21 = arith.subf %17, %20 : vector<8x8xf32>
    %22 = math.exp %21 : vector<8x8xf32>
    %cst_10 = arith.constant dense<0.000000e+00> : vector<8xf32>
    %23 = vector.multi_reduction <add>, %22, %cst_10 [1] : vector<8x8xf32> to vector<8xf32>
    %24 = vector.shape_cast %23 : vector<8xf32> to vector<8x1xf32>
    %25 = vector.broadcast %24 : vector<8x1xf32> to vector<8x8xf32>
    %26 = arith.divf %22, %25 : vector<8x8xf32>
    %27 = vector.broadcast %19 : vector<8x1xf32> to vector<8x8xf32>
    %28 = arith.subf %17, %27 : vector<8x8xf32>
    %cst_11 = arith.constant 0.000000e+00 : f32
    %29 = vector.broadcast %cst_11 : f32 to vector<8x8xf32>
    %30 = arith.select %9, %28, %29 : vector<8x8xi1>, vector<8x8xf32>
    %31 = math.log %24 : vector<8x1xf32>
    %32 = vector.shape_cast %31 : vector<8x1xf32> to vector<1x8x1xf32>
    %cst_12 = arith.constant dense<0.000000e+00> : vector<1xf32>
    %33 = vector.multi_reduction <add>, %32, %cst_12 [1, 2] : vector<1x8x1xf32> to vector<1xf32>
    %34 = vector.shape_cast %33 : vector<1xf32> to vector<1x1x1xf32>
    %35 = vector.extract %34[0, 0, 0] : f32 from vector<1x1x1xf32>
    %36 = arith.mulf %26, %30 : vector<8x8xf32>
    %37 = vector.shape_cast %36 : vector<8x8xf32> to vector<1x8x8xf32>
    %cst_13 = arith.constant dense<0.000000e+00> : vector<1xf32>
    %38 = vector.multi_reduction <add>, %37, %cst_13 [1, 2] : vector<1x8x8xf32> to vector<1xf32>
    %39 = vector.shape_cast %38 : vector<1xf32> to vector<1x1x1xf32>
    %40 = vector.extract %39[0, 0, 0] : f32 from vector<1x1x1xf32>
    %41 = arith.subf %35, %40 : f32
    %cst_14 = arith.constant 0.000000e+00 : f32
    %42 = arith.addf %cst_14, %41 : f32
    %cst_15 = arith.constant dense<0.000000e+00> : vector<8x8xf32>
    %43 = tpu.matmul %26, %12, %cst_15 {dimension_numbers = #tpu.dot_dimension_numbers<[1], [0], [0], [1], [0, 0, 1, 1], [], []>} : vector<8x8xf32>, vector<8x8xf32>, vector<8x8xf32> -> vector<8x8xf32>
    %c0_16 = arith.constant 0 : index
    %c0_17 = arith.constant 0 : index
    %44 = vector.load %arg8[%c0_16, %c0_17] : memref<16x32xf32, #tpu.memory_space<vmem>>, vector<8x8xf32>
    tpu.vector_store %arg8[%c0_16, %c0_17], %43 {strides = array<i32>} : memref<16x32xf32, #tpu.memory_space<vmem>>, vector<8x8xf32>,
    %45 = vector.extract_strided_slice %6 {offsets = [0, 8], sizes = [8, 8], strides = [1, 1]} : vector<16x96xf32> to vector<8x8xf32>
    %46 = vector.extract_strided_slice %6 {offsets = [0, 40], sizes = [8, 8], strides = [1, 1]} : vector<16x96xf32> to vector<8x8xf32>
    %47 = vector.extract_strided_slice %6 {offsets = [0, 72], sizes = [8, 8], strides = [1, 1]} : vector<16x96xf32> to vector<8x8xf32>
    %cst_18 = arith.constant dense<0.000000e+00> : vector<8x8xf32>
    %48 = tpu.matmul %45, %46, %cst_18 {dimension_numbers = #tpu.dot_dimension_numbers<[1], [1], [0], [0], [0, 0, 1, 0], [], []>} : vector<8x8xf32>, vector<8x8xf32>, vector<8x8xf32> -> vector<8x8xf32>
    %cst_19 = arith.constant 0.353553385 : f32
    %49 = vector.broadcast %cst_19 : f32 to vector<8x8xf32>
    %50 = arith.mulf %48, %49 : vector<8x8xf32>
    %cst_20 = arith.constant 0xFF800000 : f32
    %51 = vector.broadcast %cst_20 : f32 to vector<8x8xf32>
    %52 = arith.select %9, %50, %51 : vector<8x8xi1>, vector<8x8xf32>
    %cst_21 = arith.constant dense<0xFF800000> : vector<8xf32>
    %53 = vector.multi_reduction <maximumf>, %52, %cst_21 [1] : vector<8x8xf32> to vector<8xf32>
    %54 = vector.shape_cast %53 : vector<8xf32> to vector<8x1xf32>
    %55 = vector.broadcast %54 : vector<8x1xf32> to vector<8x8xf32>
    %56 = arith.subf %52, %55 : vector<8x8xf32>
    %57 = math.exp %56 : vector<8x8xf32>
    %cst_22 = arith.constant dense<0.000000e+00> : vector<8xf32>
    %58 = vector.multi_reduction <add>, %57, %cst_22 [1] : vector<8x8xf32> to vector<8xf32>
    %59 = vector.shape_cast %58 : vector<8xf32> to vector<8x1xf32>
    %60 = vector.broadcast %59 : vector<8x1xf32> to vector<8x8xf32>
    %61 = arith.divf %57, %60 : vector<8x8xf32>
    %62 = vector.broadcast %54 : vector<8x1xf32> to vector<8x8xf32>
    %63 = arith.subf %52, %62 : vector<8x8xf32>
    %cst_23 = arith.constant 0.000000e+00 : f32
    %64 = vector.broadcast %cst_23 : f32 to vector<8x8xf32>
    %65 = arith.select %9, %63, %64 : vector<8x8xi1>, vector<8x8xf32>
    %66 = math.log %59 : vector<8x1xf32>
    %67 = vector.shape_cast %66 : vector<8x1xf32> to vector<1x8x1xf32>
    %cst_24 = arith.constant dense<0.000000e+00> : vector<1xf32>
    %68 = vector.multi_reduction <add>, %67, %cst_24 [1, 2] : vector<1x8x1xf32> to vector<1xf32>
    %69 = vector.shape_cast %68 : vector<1xf32> to vector<1x1x1xf32>
    %70 = vector.extract %69[0, 0, 0] : f32 from vector<1x1x1xf32>
    %71 = arith.mulf %61, %65 : vector<8x8xf32>
    %72 = vector.shape_cast %71 : vector<8x8xf32> to vector<1x8x8xf32>
    %cst_25 = arith.constant dense<0.000000e+00> : vector<1xf32>
    %73 = vector.multi_reduction <add>, %72, %cst_25 [1, 2] : vector<1x8x8xf32> to vector<1xf32>
    %74 = vector.shape_cast %73 : vector<1xf32> to vector<1x1x1xf32>
    %75 = vector.extract %74[0, 0, 0] : f32 from vector<1x1x1xf32>
    %76 = arith.subf %70, %75 : f32
    %77 = arith.addf %42, %76 : f32
    %cst_26 = arith.constant dense<0.000000e+00> : vector<8x8xf32>
    %78 = tpu.matmul %61, %47, %cst_26 {dimension_numbers = #tpu.dot_dimension_numbers<[1], [0], [0], [1], [0, 0, 1, 1], [], []>} : vector<8x8xf32>, vector<8x8xf32>, vector<8x8xf32> -> vector<8x8xf32>
    %c0_27 = arith.constant 0 : index
    %c8 = arith.constant 8 : index
    %79 = vector.load %arg8[%c0_27, %c8] : memref<16x32xf32, #tpu.memory_space<vmem>>, vector<8x8xf32>
    tpu.vector_store %arg8[%c0_27, %c8], %78 {strides = array<i32>} : memref<16x32xf32, #tpu.memory_space<vmem>>, vector<8x8xf32>,
    %80 = vector.extract_strided_slice %6 {offsets = [0, 16], sizes = [8, 8], strides = [1, 1]} : vector<16x96xf32> to vector<8x8xf32>
    %81 = vector.extract_strided_slice %6 {offsets = [0, 48], sizes = [8, 8], strides = [1, 1]} : vector<16x96xf32> to vector<8x8xf32>
    %82 = vector.extract_strided_slice %6 {offsets = [0, 80], sizes = [8, 8], strides = [1, 1]} : vector<16x96xf32> to vector<8x8xf32>
    %cst_28 = arith.constant dense<0.000000e+00> : vector<8x8xf32>
    %83 = tpu.matmul %80, %81, %cst_28 {dimension_numbers = #tpu.dot_dimension_numbers<[1], [1], [0], [0], [0, 0, 1, 0], [], []>} : vector<8x8xf32>, vector<8x8xf32>, vector<8x8xf32> -> vector<8x8xf32>
    %cst_29 = arith.constant 0.353553385 : f32
    %84 = vector.broadcast %cst_29 : f32 to vector<8x8xf32>
    %85 = arith.mulf %83, %84 : vector<8x8xf32>
    %cst_30 = arith.constant 0xFF800000 : f32
    %86 = vector.broadcast %cst_30 : f32 to vector<8x8xf32>
    %87 = arith.select %9, %85, %86 : vector<8x8xi1>, vector<8x8xf32>
    %cst_31 = arith.constant dense<0xFF800000> : vector<8xf32>
    %88 = vector.multi_reduction <maximumf>, %87, %cst_31 [1] : vector<8x8xf32> to vector<8xf32>
    %89 = vector.shape_cast %88 : vector<8xf32> to vector<8x1xf32>
    %90 = vector.broadcast %89 : vector<8x1xf32> to vector<8x8xf32>
    %91 = arith.subf %87, %90 : vector<8x8xf32>
    %92 = math.exp %91 : vector<8x8xf32>
    %cst_32 = arith.constant dense<0.000000e+00> : vector<8xf32>
    %93 = vector.multi_reduction <add>, %92, %cst_32 [1] : vector<8x8xf32> to vector<8xf32>
    %94 = vector.shape_cast %93 : vector<8xf32> to vector<8x1xf32>
    %95 = vector.broadcast %94 : vector<8x1xf32> to vector<8x8xf32>
    %96 = arith.divf %92, %95 : vector<8x8xf32>
    %97 = vector.broadcast %89 : vector<8x1xf32> to vector<8x8xf32>
    %98 = arith.subf %87, %97 : vector<8x8xf32>
    %cst_33 = arith.constant 0.000000e+00 : f32
    %99 = vector.broadcast %cst_33 : f32 to vector<8x8xf32>
    %100 = arith.select %9, %98, %99 : vector<8x8xi1>, vector<8x8xf32>
    %101 = math.log %94 : vector<8x1xf32>
    %102 = vector.shape_cast %101 : vector<8x1xf32> to vector<1x8x1xf32>
    %cst_34 = arith.constant dense<0.000000e+00> : vector<1xf32>
    %103 = vector.multi_reduction <add>, %102, %cst_34 [1, 2] : vector<1x8x1xf32> to vector<1xf32>
    %104 = vector.shape_cast %103 : vector<1xf32> to vector<1x1x1xf32>
    %105 = vector.extract %104[0, 0, 0] : f32 from vector<1x1x1xf32>
    %106 = arith.mulf %96, %100 : vector<8x8xf32>
    %107 = vector.shape_cast %106 : vector<8x8xf32> to vector<1x8x8xf32>
    %cst_35 = arith.constant dense<0.000000e+00> : vector<1xf32>
    %108 = vector.multi_reduction <add>, %107, %cst_35 [1, 2] : vector<1x8x8xf32> to vector<1xf32>
    %109 = vector.shape_cast %108 : vector<1xf32> to vector<1x1x1xf32>
    %110 = vector.extract %109[0, 0, 0] : f32 from vector<1x1x1xf32>
    %111 = arith.subf %105, %110 : f32
    %112 = arith.addf %77, %111 : f32
    %cst_36 = arith.constant dense<0.000000e+00> : vector<8x8xf32>
    %113 = tpu.matmul %96, %82, %cst_36 {dimension_numbers = #tpu.dot_dimension_numbers<[1], [0], [0], [1], [0, 0, 1, 1], [], []>} : vector<8x8xf32>, vector<8x8xf32>, vector<8x8xf32> -> vector<8x8xf32>
    %c0_37 = arith.constant 0 : index
    %c16 = arith.constant 16 : index
    %114 = vector.load %arg8[%c0_37, %c16] : memref<16x32xf32, #tpu.memory_space<vmem>>, vector<8x8xf32>
    tpu.vector_store %arg8[%c0_37, %c16], %113 {strides = array<i32>} : memref<16x32xf32, #tpu.memory_space<vmem>>, vector<8x8xf32>,
    %115 = vector.extract_strided_slice %6 {offsets = [0, 24], sizes = [8, 8], strides = [1, 1]} : vector<16x96xf32> to vector<8x8xf32>
    %116 = vector.extract_strided_slice %6 {offsets = [0, 56], sizes = [8, 8], strides = [1, 1]} : vector<16x96xf32> to vector<8x8xf32>
    %117 = vector.extract_strided_slice %6 {offsets = [0, 88], sizes = [8, 8], strides = [1, 1]} : vector<16x96xf32> to vector<8x8xf32>
    %cst_38 = arith.constant dense<0.000000e+00> : vector<8x8xf32>
    %118 = tpu.matmul %115, %116, %cst_38 {dimension_numbers = #tpu.dot_dimension_numbers<[1], [1], [0], [0], [0, 0, 1, 0], [], []>} : vector<8x8xf32>, vector<8x8xf32>, vector<8x8xf32> -> vector<8x8xf32>
    %cst_39 = arith.constant 0.353553385 : f32
    %119 = vector.broadcast %cst_39 : f32 to vector<8x8xf32>
    %120 = arith.mulf %118, %119 : vector<8x8xf32>
    %cst_40 = arith.constant 0xFF800000 : f32
    %121 = vector.broadcast %cst_40 : f32 to vector<8x8xf32>
    %122 = arith.select %9, %120, %121 : vector<8x8xi1>, vector<8x8xf32>
    %cst_41 = arith.constant dense<0xFF800000> : vector<8xf32>
    %123 = vector.multi_reduction <maximumf>, %122, %cst_41 [1] : vector<8x8xf32> to vector<8xf32>
    %124 = vector.shape_cast %123 : vector<8xf32> to vector<8x1xf32>
    %125 = vector.broadcast %124 : vector<8x1xf32> to vector<8x8xf32>
    %126 = arith.subf %122, %125 : vector<8x8xf32>
    %127 = math.exp %126 : vector<8x8xf32>
    %cst_42 = arith.constant dense<0.000000e+00> : vector<8xf32>
    %128 = vector.multi_reduction <add>, %127, %cst_42 [1] : vector<8x8xf32> to vector<8xf32>
    %129 = vector.shape_cast %128 : vector<8xf32> to vector<8x1xf32>
    %130 = vector.broadcast %129 : vector<8x1xf32> to vector<8x8xf32>
    %131 = arith.divf %127, %130 : vector<8x8xf32>
    %132 = vector.broadcast %124 : vector<8x1xf32> to vector<8x8xf32>
    %133 = arith.subf %122, %132 : vector<8x8xf32>
    %cst_43 = arith.constant 0.000000e+00 : f32
    %134 = vector.broadcast %cst_43 : f32 to vector<8x8xf32>
    %135 = arith.select %9, %133, %134 : vector<8x8xi1>, vector<8x8xf32>
    %136 = math.log %129 : vector<8x1xf32>
    %137 = vector.shape_cast %136 : vector<8x1xf32> to vector<1x8x1xf32>
    %cst_44 = arith.constant dense<0.000000e+00> : vector<1xf32>
    %138 = vector.multi_reduction <add>, %137, %cst_44 [1, 2] : vector<1x8x1xf32> to vector<1xf32>
    %139 = vector.shape_cast %138 : vector<1xf32> to vector<1x1x1xf32>
    %140 = vector.extract %139[0, 0, 0] : f32 from vector<1x1x1xf32>
    %141 = arith.mulf %131, %135 : vector<8x8xf32>
    %142 = vector.shape_cast %141 : vector<8x8xf32> to vector<1x8x8xf32>
    %cst_45 = arith.constant dense<0.000000e+00> : vector<1xf32>
    %143 = vector.multi_reduction <add>, %142, %cst_45 [1, 2] : vector<1x8x8xf32> to vector<1xf32>
    %144 = vector.shape_cast %143 : vector<1xf32> to vector<1x1x1xf32>
    %145 = vector.extract %144[0, 0, 0] : f32 from vector<1x1x1xf32>
    %146 = arith.subf %140, %145 : f32
    %147 = arith.addf %112, %146 : f32
    %cst_46 = arith.constant dense<0.000000e+00> : vector<8x8xf32>
    %148 = tpu.matmul %131, %117, %cst_46 {dimension_numbers = #tpu.dot_dimension_numbers<[1], [0], [0], [1], [0, 0, 1, 1], [], []>} : vector<8x8xf32>, vector<8x8xf32>, vector<8x8xf32> -> vector<8x8xf32>
    %c0_47 = arith.constant 0 : index
    %c24 = arith.constant 24 : index
    %149 = vector.load %arg8[%c0_47, %c24] : memref<16x32xf32, #tpu.memory_space<vmem>>, vector<8x8xf32>
    tpu.vector_store %arg8[%c0_47, %c24], %148 {strides = array<i32>} : memref<16x32xf32, #tpu.memory_space<vmem>>, vector<8x8xf32>,
    %150 = vector.extract_strided_slice %6 {offsets = [8, 0], sizes = [8, 8], strides = [1, 1]} : vector<16x96xf32> to vector<8x8xf32>
    %151 = vector.extract_strided_slice %6 {offsets = [8, 32], sizes = [8, 8], strides = [1, 1]} : vector<16x96xf32> to vector<8x8xf32>
    %152 = vector.extract_strided_slice %6 {offsets = [8, 64], sizes = [8, 8], strides = [1, 1]} : vector<16x96xf32> to vector<8x8xf32>
    %cst_48 = arith.constant dense<0.000000e+00> : vector<8x8xf32>
    %153 = tpu.matmul %150, %151, %cst_48 {dimension_numbers = #tpu.dot_dimension_numbers<[1], [1], [0], [0], [0, 0, 1, 0], [], []>} : vector<8x8xf32>, vector<8x8xf32>, vector<8x8xf32> -> vector<8x8xf32>
    %cst_49 = arith.constant 0.353553385 : f32
    %154 = vector.broadcast %cst_49 : f32 to vector<8x8xf32>
    %155 = arith.mulf %153, %154 : vector<8x8xf32>
    %cst_50 = arith.constant 0xFF800000 : f32
    %156 = vector.broadcast %cst_50 : f32 to vector<8x8xf32>
    %157 = arith.select %9, %155, %156 : vector<8x8xi1>, vector<8x8xf32>
    %cst_51 = arith.constant dense<0xFF800000> : vector<8xf32>
    %158 = vector.multi_reduction <maximumf>, %157, %cst_51 [1] : vector<8x8xf32> to vector<8xf32>
    %159 = vector.shape_cast %158 : vector<8xf32> to vector<8x1xf32>
    %160 = vector.broadcast %159 : vector<8x1xf32> to vector<8x8xf32>
    %161 = arith.subf %157, %160 : vector<8x8xf32>
    %162 = math.exp %161 : vector<8x8xf32>
    %cst_52 = arith.constant dense<0.000000e+00> : vector<8xf32>
    %163 = vector.multi_reduction <add>, %162, %cst_52 [1] : vector<8x8xf32> to vector<8xf32>
    %164 = vector.shape_cast %163 : vector<8xf32> to vector<8x1xf32>
    %165 = vector.broadcast %164 : vector<8x1xf32> to vector<8x8xf32>
    %166 = arith.divf %162, %165 : vector<8x8xf32>
    %167 = vector.broadcast %159 : vector<8x1xf32> to vector<8x8xf32>
    %168 = arith.subf %157, %167 : vector<8x8xf32>
    %cst_53 = arith.constant 0.000000e+00 : f32
    %169 = vector.broadcast %cst_53 : f32 to vector<8x8xf32>
    %170 = arith.select %9, %168, %169 : vector<8x8xi1>, vector<8x8xf32>
    %171 = math.log %164 : vector<8x1xf32>
    %172 = vector.shape_cast %171 : vector<8x1xf32> to vector<1x8x1xf32>
    %cst_54 = arith.constant dense<0.000000e+00> : vector<1xf32>
    %173 = vector.multi_reduction <add>, %172, %cst_54 [1, 2] : vector<1x8x1xf32> to vector<1xf32>
    %174 = vector.shape_cast %173 : vector<1xf32> to vector<1x1x1xf32>
    %175 = vector.extract %174[0, 0, 0] : f32 from vector<1x1x1xf32>
    %176 = arith.mulf %166, %170 : vector<8x8xf32>
    %177 = vector.shape_cast %176 : vector<8x8xf32> to vector<1x8x8xf32>
    %cst_55 = arith.constant dense<0.000000e+00> : vector<1xf32>
    %178 = vector.multi_reduction <add>, %177, %cst_55 [1, 2] : vector<1x8x8xf32> to vector<1xf32>
    %179 = vector.shape_cast %178 : vector<1xf32> to vector<1x1x1xf32>
    %180 = vector.extract %179[0, 0, 0] : f32 from vector<1x1x1xf32>
    %181 = arith.subf %175, %180 : f32
    %182 = arith.addf %147, %181 : f32
    %cst_56 = arith.constant dense<0.000000e+00> : vector<8x8xf32>
    %183 = tpu.matmul %166, %152, %cst_56 {dimension_numbers = #tpu.dot_dimension_numbers<[1], [0], [0], [1], [0, 0, 1, 1], [], []>} : vector<8x8xf32>, vector<8x8xf32>, vector<8x8xf32> -> vector<8x8xf32>
    %c8_57 = arith.constant 8 : index
    %c0_58 = arith.constant 0 : index
    %184 = vector.load %arg8[%c8_57, %c0_58] : memref<16x32xf32, #tpu.memory_space<vmem>>, vector<8x8xf32>
    tpu.vector_store %arg8[%c8_57, %c0_58], %183 {strides = array<i32>} : memref<16x32xf32, #tpu.memory_space<vmem>>, vector<8x8xf32>,
    %185 = vector.extract_strided_slice %6 {offsets = [8, 8], sizes = [8, 8], strides = [1, 1]} : vector<16x96xf32> to vector<8x8xf32>
    %186 = vector.extract_strided_slice %6 {offsets = [8, 40], sizes = [8, 8], strides = [1, 1]} : vector<16x96xf32> to vector<8x8xf32>
    %187 = vector.extract_strided_slice %6 {offsets = [8, 72], sizes = [8, 8], strides = [1, 1]} : vector<16x96xf32> to vector<8x8xf32>
    %cst_59 = arith.constant dense<0.000000e+00> : vector<8x8xf32>
    %188 = tpu.matmul %185, %186, %cst_59 {dimension_numbers = #tpu.dot_dimension_numbers<[1], [1], [0], [0], [0, 0, 1, 0], [], []>} : vector<8x8xf32>, vector<8x8xf32>, vector<8x8xf32> -> vector<8x8xf32>
    %cst_60 = arith.constant 0.353553385 : f32
    %189 = vector.broadcast %cst_60 : f32 to vector<8x8xf32>
    %190 = arith.mulf %188, %189 : vector<8x8xf32>
    %cst_61 = arith.constant 0xFF800000 : f32
    %191 = vector.broadcast %cst_61 : f32 to vector<8x8xf32>
    %192 = arith.select %9, %190, %191 : vector<8x8xi1>, vector<8x8xf32>
    %cst_62 = arith.constant dense<0xFF800000> : vector<8xf32>
    %193 = vector.multi_reduction <maximumf>, %192, %cst_62 [1] : vector<8x8xf32> to vector<8xf32>
    %194 = vector.shape_cast %193 : vector<8xf32> to vector<8x1xf32>
    %195 = vector.broadcast %194 : vector<8x1xf32> to vector<8x8xf32>
    %196 = arith.subf %192, %195 : vector<8x8xf32>
    %197 = math.exp %196 : vector<8x8xf32>
    %cst_63 = arith.constant dense<0.000000e+00> : vector<8xf32>
    %198 = vector.multi_reduction <add>, %197, %cst_63 [1] : vector<8x8xf32> to vector<8xf32>
    %199 = vector.shape_cast %198 : vector<8xf32> to vector<8x1xf32>
    %200 = vector.broadcast %199 : vector<8x1xf32> to vector<8x8xf32>
    %201 = arith.divf %197, %200 : vector<8x8xf32>
    %202 = vector.broadcast %194 : vector<8x1xf32> to vector<8x8xf32>
    %203 = arith.subf %192, %202 : vector<8x8xf32>
    %cst_64 = arith.constant 0.000000e+00 : f32
    %204 = vector.broadcast %cst_64 : f32 to vector<8x8xf32>
    %205 = arith.select %9, %203, %204 : vector<8x8xi1>, vector<8x8xf32>
    %206 = math.log %199 : vector<8x1xf32>
    %207 = vector.shape_cast %206 : vector<8x1xf32> to vector<1x8x1xf32>
    %cst_65 = arith.constant dense<0.000000e+00> : vector<1xf32>
    %208 = vector.multi_reduction <add>, %207, %cst_65 [1, 2] : vector<1x8x1xf32> to vector<1xf32>
    %209 = vector.shape_cast %208 : vector<1xf32> to vector<1x1x1xf32>
    %210 = vector.extract %209[0, 0, 0] : f32 from vector<1x1x1xf32>
    %211 = arith.mulf %201, %205 : vector<8x8xf32>
    %212 = vector.shape_cast %211 : vector<8x8xf32> to vector<1x8x8xf32>
    %cst_66 = arith.constant dense<0.000000e+00> : vector<1xf32>
    %213 = vector.multi_reduction <add>, %212, %cst_66 [1, 2] : vector<1x8x8xf32> to vector<1xf32>
    %214 = vector.shape_cast %213 : vector<1xf32> to vector<1x1x1xf32>
    %215 = vector.extract %214[0, 0, 0] : f32 from vector<1x1x1xf32>
    %216 = arith.subf %210, %215 : f32
    %217 = arith.addf %182, %216 : f32
    %cst_67 = arith.constant dense<0.000000e+00> : vector<8x8xf32>
    %218 = tpu.matmul %201, %187, %cst_67 {dimension_numbers = #tpu.dot_dimension_numbers<[1], [0], [0], [1], [0, 0, 1, 1], [], []>} : vector<8x8xf32>, vector<8x8xf32>, vector<8x8xf32> -> vector<8x8xf32>
    %c8_68 = arith.constant 8 : index
    %c8_69 = arith.constant 8 : index
    %219 = vector.load %arg8[%c8_68, %c8_69] : memref<16x32xf32, #tpu.memory_space<vmem>>, vector<8x8xf32>
    tpu.vector_store %arg8[%c8_68, %c8_69], %218 {strides = array<i32>} : memref<16x32xf32, #tpu.memory_space<vmem>>, vector<8x8xf32>,
    %220 = vector.extract_strided_slice %6 {offsets = [8, 16], sizes = [8, 8], strides = [1, 1]} : vector<16x96xf32> to vector<8x8xf32>
    %221 = vector.extract_strided_slice %6 {offsets = [8, 48], sizes = [8, 8], strides = [1, 1]} : vector<16x96xf32> to vector<8x8xf32>
    %222 = vector.extract_strided_slice %6 {offsets = [8, 80], sizes = [8, 8], strides = [1, 1]} : vector<16x96xf32> to vector<8x8xf32>
    %cst_70 = arith.constant dense<0.000000e+00> : vector<8x8xf32>
    %223 = tpu.matmul %220, %221, %cst_70 {dimension_numbers = #tpu.dot_dimension_numbers<[1], [1], [0], [0], [0, 0, 1, 0], [], []>} : vector<8x8xf32>, vector<8x8xf32>, vector<8x8xf32> -> vector<8x8xf32>
    %cst_71 = arith.constant 0.353553385 : f32
    %224 = vector.broadcast %cst_71 : f32 to vector<8x8xf32>
    %225 = arith.mulf %223, %224 : vector<8x8xf32>
    %cst_72 = arith.constant 0xFF800000 : f32
    %226 = vector.broadcast %cst_72 : f32 to vector<8x8xf32>
    %227 = arith.select %9, %225, %226 : vector<8x8xi1>, vector<8x8xf32>
    %cst_73 = arith.constant dense<0xFF800000> : vector<8xf32>
    %228 = vector.multi_reduction <maximumf>, %227, %cst_73 [1] : vector<8x8xf32> to vector<8xf32>
    %229 = vector.shape_cast %228 : vector<8xf32> to vector<8x1xf32>
    %230 = vector.broadcast %229 : vector<8x1xf32> to vector<8x8xf32>
    %231 = arith.subf %227, %230 : vector<8x8xf32>
    %232 = math.exp %231 : vector<8x8xf32>
    %cst_74 = arith.constant dense<0.000000e+00> : vector<8xf32>
    %233 = vector.multi_reduction <add>, %232, %cst_74 [1] : vector<8x8xf32> to vector<8xf32>
    %234 = vector.shape_cast %233 : vector<8xf32> to vector<8x1xf32>
    %235 = vector.broadcast %234 : vector<8x1xf32> to vector<8x8xf32>
    %236 = arith.divf %232, %235 : vector<8x8xf32>
    %237 = vector.broadcast %229 : vector<8x1xf32> to vector<8x8xf32>
    %238 = arith.subf %227, %237 : vector<8x8xf32>
    %cst_75 = arith.constant 0.000000e+00 : f32
    %239 = vector.broadcast %cst_75 : f32 to vector<8x8xf32>
    %240 = arith.select %9, %238, %239 : vector<8x8xi1>, vector<8x8xf32>
    %241 = math.log %234 : vector<8x1xf32>
    %242 = vector.shape_cast %241 : vector<8x1xf32> to vector<1x8x1xf32>
    %cst_76 = arith.constant dense<0.000000e+00> : vector<1xf32>
    %243 = vector.multi_reduction <add>, %242, %cst_76 [1, 2] : vector<1x8x1xf32> to vector<1xf32>
    %244 = vector.shape_cast %243 : vector<1xf32> to vector<1x1x1xf32>
    %245 = vector.extract %244[0, 0, 0] : f32 from vector<1x1x1xf32>
    %246 = arith.mulf %236, %240 : vector<8x8xf32>
    %247 = vector.shape_cast %246 : vector<8x8xf32> to vector<1x8x8xf32>
    %cst_77 = arith.constant dense<0.000000e+00> : vector<1xf32>
    %248 = vector.multi_reduction <add>, %247, %cst_77 [1, 2] : vector<1x8x8xf32> to vector<1xf32>
    %249 = vector.shape_cast %248 : vector<1xf32> to vector<1x1x1xf32>
    %250 = vector.extract %249[0, 0, 0] : f32 from vector<1x1x1xf32>
    %251 = arith.subf %245, %250 : f32
    %252 = arith.addf %217, %251 : f32
    %cst_78 = arith.constant dense<0.000000e+00> : vector<8x8xf32>
    %253 = tpu.matmul %236, %222, %cst_78 {dimension_numbers = #tpu.dot_dimension_numbers<[1], [0], [0], [1], [0, 0, 1, 1], [], []>} : vector<8x8xf32>, vector<8x8xf32>, vector<8x8xf32> -> vector<8x8xf32>
    %c8_79 = arith.constant 8 : index
    %c16_80 = arith.constant 16 : index
    %254 = vector.load %arg8[%c8_79, %c16_80] : memref<16x32xf32, #tpu.memory_space<vmem>>, vector<8x8xf32>
    tpu.vector_store %arg8[%c8_79, %c16_80], %253 {strides = array<i32>} : memref<16x32xf32, #tpu.memory_space<vmem>>, vector<8x8xf32>,
    %255 = vector.extract_strided_slice %6 {offsets = [8, 24], sizes = [8, 8], strides = [1, 1]} : vector<16x96xf32> to vector<8x8xf32>
    %256 = vector.extract_strided_slice %6 {offsets = [8, 56], sizes = [8, 8], strides = [1, 1]} : vector<16x96xf32> to vector<8x8xf32>
    %257 = vector.extract_strided_slice %6 {offsets = [8, 88], sizes = [8, 8], strides = [1, 1]} : vector<16x96xf32> to vector<8x8xf32>
    %cst_81 = arith.constant dense<0.000000e+00> : vector<8x8xf32>
    %258 = tpu.matmul %255, %256, %cst_81 {dimension_numbers = #tpu.dot_dimension_numbers<[1], [1], [0], [0], [0, 0, 1, 0], [], []>} : vector<8x8xf32>, vector<8x8xf32>, vector<8x8xf32> -> vector<8x8xf32>
    %cst_82 = arith.constant 0.353553385 : f32
    %259 = vector.broadcast %cst_82 : f32 to vector<8x8xf32>
    %260 = arith.mulf %258, %259 : vector<8x8xf32>
    %cst_83 = arith.constant 0xFF800000 : f32
    %261 = vector.broadcast %cst_83 : f32 to vector<8x8xf32>
    %262 = arith.select %9, %260, %261 : vector<8x8xi1>, vector<8x8xf32>
    %cst_84 = arith.constant dense<0xFF800000> : vector<8xf32>
    %263 = vector.multi_reduction <maximumf>, %262, %cst_84 [1] : vector<8x8xf32> to vector<8xf32>
    %264 = vector.shape_cast %263 : vector<8xf32> to vector<8x1xf32>
    %265 = vector.broadcast %264 : vector<8x1xf32> to vector<8x8xf32>
    %266 = arith.subf %262, %265 : vector<8x8xf32>
    %267 = math.exp %266 : vector<8x8xf32>
    %cst_85 = arith.constant dense<0.000000e+00> : vector<8xf32>
    %268 = vector.multi_reduction <add>, %267, %cst_85 [1] : vector<8x8xf32> to vector<8xf32>
    %269 = vector.shape_cast %268 : vector<8xf32> to vector<8x1xf32>
    %270 = vector.broadcast %269 : vector<8x1xf32> to vector<8x8xf32>
    %271 = arith.divf %267, %270 : vector<8x8xf32>
    %272 = vector.broadcast %264 : vector<8x1xf32> to vector<8x8xf32>
    %273 = arith.subf %262, %272 : vector<8x8xf32>
    %cst_86 = arith.constant 0.000000e+00 : f32
    %274 = vector.broadcast %cst_86 : f32 to vector<8x8xf32>
    %275 = arith.select %9, %273, %274 : vector<8x8xi1>, vector<8x8xf32>
    %276 = math.log %269 : vector<8x1xf32>
    %277 = vector.shape_cast %276 : vector<8x1xf32> to vector<1x8x1xf32>
    %cst_87 = arith.constant dense<0.000000e+00> : vector<1xf32>
    %278 = vector.multi_reduction <add>, %277, %cst_87 [1, 2] : vector<1x8x1xf32> to vector<1xf32>
    %279 = vector.shape_cast %278 : vector<1xf32> to vector<1x1x1xf32>
    %280 = vector.extract %279[0, 0, 0] : f32 from vector<1x1x1xf32>
    %281 = arith.mulf %271, %275 : vector<8x8xf32>
    %282 = vector.shape_cast %281 : vector<8x8xf32> to vector<1x8x8xf32>
    %cst_88 = arith.constant dense<0.000000e+00> : vector<1xf32>
    %283 = vector.multi_reduction <add>, %282, %cst_88 [1, 2] : vector<1x8x8xf32> to vector<1xf32>
    %284 = vector.shape_cast %283 : vector<1xf32> to vector<1x1x1xf32>
    %285 = vector.extract %284[0, 0, 0] : f32 from vector<1x1x1xf32>
    %286 = arith.subf %280, %285 : f32
    %287 = arith.addf %252, %286 : f32
    %cst_89 = arith.constant dense<0.000000e+00> : vector<8x8xf32>
    %288 = tpu.matmul %271, %257, %cst_89 {dimension_numbers = #tpu.dot_dimension_numbers<[1], [0], [0], [1], [0, 0, 1, 1], [], []>} : vector<8x8xf32>, vector<8x8xf32>, vector<8x8xf32> -> vector<8x8xf32>
    %c8_90 = arith.constant 8 : index
    %c24_91 = arith.constant 24 : index
    %289 = vector.load %arg8[%c8_90, %c24_91] : memref<16x32xf32, #tpu.memory_space<vmem>>, vector<8x8xf32>
    tpu.vector_store %arg8[%c8_90, %c24_91], %288 {strides = array<i32>} : memref<16x32xf32, #tpu.memory_space<vmem>>, vector<8x8xf32>,
    %c0_92 = arith.constant 0 : index
    %c0_93 = arith.constant 0 : index
    %290 = vector.load %arg8[%c0_92, %c0_93] : memref<16x32xf32, #tpu.memory_space<vmem>>, vector<16x32xf32>
    %c0_94 = arith.constant 0 : index
    %c0_95 = arith.constant 0 : index
    %291 = vector.load %arg4[%c0_94, %c0_95] : memref<32x32xf32, #tpu.memory_space<vmem>>, vector<32x32xf32>
    %cst_96 = arith.constant dense<0.000000e+00> : vector<16x32xf32>
    %292 = tpu.matmul %290, %291, %cst_96 {dimension_numbers = #tpu.dot_dimension_numbers<[1], [0], [0], [1], [0, 0, 1, 1], [], []>} : vector<16x32xf32>, vector<32x32xf32>, vector<16x32xf32> -> vector<16x32xf32>
    %c0_97 = arith.constant 0 : index
    %c0_98 = arith.constant 0 : index
    %293 = vector.load %arg5[%c0_97, %c0_98] : memref<1x32xf32, #tpu.memory_space<vmem>>, vector<1x32xf32>
    %294 = vector.broadcast %293 : vector<1x32xf32> to vector<16x32xf32>
    %295 = arith.addf %292, %294 : vector<16x32xf32>
    %296 = vector.shape_cast %295 : vector<16x32xf32> to vector<2x8x32xf32>
    %c0_99 = arith.constant 0 : index
    %c0_100 = arith.constant 0 : index
    %c0_101 = arith.constant 0 : index
    %297 = vector.load %arg6[%c0_99, %c0_100, %c0_101] : memref<2x8x32xf32, #tpu.memory_space<vmem>>, vector<2x8x32xf32>
    tpu.vector_store %arg6[%c0_99, %c0_100, %c0_101], %296 {strides = array<i32>} : memref<2x8x32xf32, #tpu.memory_space<vmem>>, vector<2x8x32xf32>,
    %cst_102 = arith.constant 6.400000e+01 : f32
    %298 = arith.divf %287, %cst_102 : f32
    %299 = vector.broadcast %298 : f32 to vector<1x1x128xf32>
    %c0_103 = arith.constant 0 : index
    %c0_104 = arith.constant 0 : index
    %c0_105 = arith.constant 0 : index
    %300 = vector.load %arg7[%c0_103, %c0_104, %c0_105] : memref<1x1x128xf32, #tpu.memory_space<vmem>>, vector<1x1x128xf32>
    tpu.vector_store %arg7[%c0_103, %c0_104, %c0_105], %299 {strides = array<i32>} : memref<1x1x128xf32, #tpu.memory_space<vmem>>, vector<1x1x128xf32>,
    return
  }
  func.func @transform_0(%arg0: i32) -> (i32, i32, i32) {
    %c0_i32 = arith.constant 0 : i32
    %c0_i32_0 = arith.constant 0 : i32
    %c0_i32_1 = arith.constant 0 : i32
    return %arg0, %c0_i32, %c0_i32_0 : i32, i32, i32
  }
  func.func @transform_1(%arg0: i32) -> (i32, i32) {
    %c0_i32 = arith.constant 0 : i32
    %c0_i32_0 = arith.constant 0 : i32
    %c0_i32_1 = arith.constant 0 : i32
    return %c0_i32, %c0_i32_0 : i32, i32
  }
  func.func @transform_2(%arg0: i32) -> (i32, i32) {
    %c0_i32 = arith.constant 0 : i32
    %c0_i32_0 = arith.constant 0 : i32
    %c0_i32_1 = arith.constant 0 : i32
    return %c0_i32, %c0_i32_0 : i32, i32
  }
  func.func @transform_3(%arg0: i32) -> (i32, i32) {
    %c0_i32 = arith.constant 0 : i32
    %c0_i32_0 = arith.constant 0 : i32
    %c0_i32_1 = arith.constant 0 : i32
    return %c0_i32, %c0_i32_0 : i32, i32
  }
  func.func @transform_4(%arg0: i32) -> (i32, i32) {
    %c0_i32 = arith.constant 0 : i32
    %c0_i32_0 = arith.constant 0 : i32
    %c0_i32_1 = arith.constant 0 : i32
    return %c0_i32, %c0_i32_0 : i32, i32
  }
  func.func @transform_5(%arg0: i32) -> (i32, i32, i32) {
    %c0_i32 = arith.constant 0 : i32
    %c0_i32_0 = arith.constant 0 : i32
    %c0_i32_1 = arith.constant 0 : i32
    return %arg0, %c0_i32, %c0_i32_0 : i32, i32, i32
  }
  func.func @transform_6(%arg0: i32) -> (i32, i32, i32) {
    %c0_i32 = arith.constant 0 : i32
    %c0_i32_0 = arith.constant 0 : i32
    %c0_i32_1 = arith.constant 0 : i32
    return %arg0, %c0_i32, %c0_i32_0 : i32, i32, i32
  }
}

module attributes {stable_mosaic.version = 11 : i64} {
  func.func @_split_attention_kernel(%arg0: i32, %arg1: memref<2x8x32xf32, #tpu.memory_space<vmem>>, %arg2: memref<32x96xf32, #tpu.memory_space<vmem>>, %arg3: memref<1x96xf32, #tpu.memory_space<vmem>>, %arg4: memref<32x32xf32, #tpu.memory_space<vmem>>, %arg5: memref<1x32xf32, #tpu.memory_space<vmem>>, %arg6: memref<2x8x32xf32, #tpu.memory_space<vmem>>, %arg7: memref<1x1x128xf32, #tpu.memory_space<vmem>>, %arg8: memref<16x32xf32, #tpu.memory_space<vmem>>) attributes {dimension_semantics = [#tpu.dimension_semantics<parallel>], iteration_bounds = array<i64: 1>, scalar_prefetch = 0 : i64, scratch_operands = 1 : i64, tpu.core_type = #tpu.core_type<tc>, window_params = [{transform_indices = @transform_0, window_bounds = array<i64: 2, 8, 32>}, {pipeline_mode = #tpu.pipeline_mode<synchronous>, transform_indices = @transform_1, window_bounds = array<i64: 32, 96>}, {pipeline_mode = #tpu.pipeline_mode<synchronous>, transform_indices = @transform_2, window_bounds = array<i64: 1, 96>}, {pipeline_mode = #tpu.pipeline_mode<synchronous>, transform_indices = @transform_3, window_bounds = array<i64: 32, 32>}, {pipeline_mode = #tpu.pipeline_mode<synchronous>, transform_indices = @transform_4, window_bounds = array<i64: 1, 32>}, {transform_indices = @transform_5, window_bounds = array<i64: 2, 8, 32>}, {transform_indices = @transform_6, window_bounds = array<i64: 1, 1, 128>}]} {
    %c0 = arith.constant 0 : index
    %c0_0 = arith.constant 0 : index
    %c0_1 = arith.constant 0 : index
    %0 = vector.load %arg1[%c0, %c0_0, %c0_1] : memref<2x8x32xf32, #tpu.memory_space<vmem>>, vector<2x8x32xf32>
    %1 = vector.shape_cast %0 : vector<2x8x32xf32> to vector<16x32xf32>
    %c0_2 = arith.constant 0 : index
    %c0_3 = arith.constant 0 : index
    %2 = vector.load %arg2[%c0_2, %c0_3] : memref<32x96xf32, #tpu.memory_space<vmem>>, vector<32x96xf32>
    %cst = arith.constant dense<0.000000e+00> : vector<16x96xf32>
    %3 = tpu.matmul %1, %2, %cst {dimension_numbers = #tpu.dot_dimension_numbers<[1], [0], [0], [1], [0, 0, 1, 1], [], []>} : vector<16x32xf32>, vector<32x96xf32>, vector<16x96xf32> -> vector<16x96xf32>
    %c0_4 = arith.constant 0 : index
    %c0_5 = arith.constant 0 : index
    %4 = vector.load %arg3[%c0_4, %c0_5] : memref<1x96xf32, #tpu.memory_space<vmem>>, vector<1x96xf32>
    %5 = vector.broadcast %4 : vector<1x96xf32> to vector<16x96xf32>
    %6 = arith.addf %3, %5 : vector<16x96xf32>
    %7 = tpu.iota {dimensions = array<i32: 0>} : vector<8x8xi32>
    %8 = tpu.iota {dimensions = array<i32: 1>} : vector<8x8xi32>
    %9 = arith.cmpi sge, %7, %8 : vector<8x8xi32>
    %10 = vector.extract_strided_slice %6 {offsets = [0, 0], sizes = [8, 8], strides = [1, 1]} : vector<16x96xf32> to vector<8x8xf32>
    %11 = vector.extract_strided_slice %6 {offsets = [0, 32], sizes = [8, 8], strides = [1, 1]} : vector<16x96xf32> to vector<8x8xf32>
    %12 = vector.extract_strided_slice %6 {offsets = [0, 64], sizes = [8, 8], strides = [1, 1]} : vector<16x96xf32> to vector<8x8xf32>
    %cst_6 = arith.constant dense<0.000000e+00> : vector<8x8xf32>
    %13 = tpu.matmul %10, %11, %cst_6 {dimension_numbers = #tpu.dot_dimension_numbers<[1], [1], [0], [0], [0, 0, 1, 0], [], []>} : vector<8x8xf32>, vector<8x8xf32>, vector<8x8xf32> -> vector<8x8xf32>
    %cst_7 = arith.constant 0.353553385 : f32
    %14 = vector.broadcast %cst_7 : f32 to vector<8x8xf32>
    %15 = arith.mulf %13, %14 : vector<8x8xf32>
    %cst_8 = arith.constant 0xFF800000 : f32
    %16 = vector.broadcast %cst_8 : f32 to vector<8x8xf32>
    %17 = arith.select %9, %15, %16 : vector<8x8xi1>, vector<8x8xf32>
    %cst_9 = arith.constant dense<0xFF800000> : vector<8xf32>
    %18 = vector.multi_reduction <maximumf>, %17, %cst_9 [1] : vector<8x8xf32> to vector<8xf32>
    %19 = vector.shape_cast %18 : vector<8xf32> to vector<8x1xf32>
    %20 = vector.broadcast %19 : vector<8x1xf32> to vector<8x8xf32>
    %21 = arith.subf %17, %20 : vector<8x8xf32>
    %22 = math.exp %21 : vector<8x8xf32>
    %cst_10 = arith.constant dense<0.000000e+00> : vector<8xf32>
    %23 = vector.multi_reduction <add>, %22, %cst_10 [1] : vector<8x8xf32> to vector<8xf32>
    %24 = vector.shape_cast %23 : vector<8xf32> to vector<8x1xf32>
    %25 = vector.broadcast %24 : vector<8x1xf32> to vector<8x8xf32>
    %26 = arith.divf %22, %25 : vector<8x8xf32>
    %27 = vector.broadcast %19 : vector<8x1xf32> to vector<8x8xf32>
    %28 = arith.subf %17, %27 : vector<8x8xf32>
    %cst_11 = arith.constant 0.000000e+00 : f32
    %29 = vector.broadcast %cst_11 : f32 to vector<8x8xf32>
    %30 = arith.select %9, %28, %29 : vector<8x8xi1>, vector<8x8xf32>
    %31 = math.log %24 : vector<8x1xf32>
    %32 = vector.shape_cast %31 : vector<8x1xf32> to vector<1x8x1xf32>
    %cst_12 = arith.constant dense<0.000000e+00> : vector<1xf32>
    %33 = vector.multi_reduction <add>, %32, %cst_12 [1, 2] : vector<1x8x1xf32> to vector<1xf32>
    %34 = vector.shape_cast %33 : vector<1xf32> to vector<1x1x1xf32>
    %35 = vector.extract %34[0, 0, 0] : f32 from vector<1x1x1xf32>
    %36 = arith.mulf %26, %30 : vector<8x8xf32>
    %37 = vector.shape_cast %36 : vector<8x8xf32> to vector<1x8x8xf32>
    %cst_13 = arith.constant dense<0.000000e+00> : vector<1xf32>
    %38 = vector.multi_reduction <add>, %37, %cst_13 [1, 2] : vector<1x8x8xf32> to vector<1xf32>
    %39 = vector.shape_cast %38 : vector<1xf32> to vector<1x1x1xf32>
    %40 = vector.extract %39[0, 0, 0] : f32 from vector<1x1x1xf32>
    %41 = arith.subf %35, %40 : f32
    %cst_14 = arith.constant 0.000000e+00 : f32
    %42 = arith.addf %cst_14, %41 : f32
    %cst_15 = arith.constant dense<0.000000e+00> : vector<8x8xf32>
    %43 = tpu.matmul %26, %12, %cst_15 {dimension_numbers = #tpu.dot_dimension_numbers<[1], [0], [0], [1], [0, 0, 1, 1], [], []>} : vector<8x8xf32>, vector<8x8xf32>, vector<8x8xf32> -> vector<8x8xf32>
    %c0_16 = arith.constant 0 : index
    %c0_17 = arith.constant 0 : index
    %44 = vector.load %arg8[%c0_16, %c0_17] : memref<16x32xf32, #tpu.memory_space<vmem>>, vector<8x8xf32>
    tpu.vector_store %arg8[%c0_16, %c0_17], %43 {strides = array<i32>} : memref<16x32xf32, #tpu.memory_space<vmem>>, vector<8x8xf32>,
    %45 = vector.extract_strided_slice %6 {offsets = [0, 8], sizes = [8, 8], strides = [1, 1]} : vector<16x96xf32> to vector<8x8xf32>
    %46 = vector.extract_strided_slice %6 {offsets = [0, 40], sizes = [8, 8], strides = [1, 1]} : vector<16x96xf32> to vector<8x8xf32>
    %47 = vector.extract_strided_slice %6 {offsets = [0, 72], sizes = [8, 8], strides = [1, 1]} : vector<16x96xf32> to vector<8x8xf32>
    %cst_18 = arith.constant dense<0.000000e+00> : vector<8x8xf32>
    %48 = tpu.matmul %45, %46, %cst_18 {dimension_numbers = #tpu.dot_dimension_numbers<[1], [1], [0], [0], [0, 0, 1, 0], [], []>} : vector<8x8xf32>, vector<8x8xf32>, vector<8x8xf32> -> vector<8x8xf32>
    %cst_19 = arith.constant 0.353553385 : f32
    %49 = vector.broadcast %cst_19 : f32 to vector<8x8xf32>
    %50 = arith.mulf %48, %49 : vector<8x8xf32>
    %cst_20 = arith.constant 0xFF800000 : f32
    %51 = vector.broadcast %cst_20 : f32 to vector<8x8xf32>
    %52 = arith.select %9, %50, %51 : vector<8x8xi1>, vector<8x8xf32>
    %cst_21 = arith.constant dense<0xFF800000> : vector<8xf32>
    %53 = vector.multi_reduction <maximumf>, %52, %cst_21 [1] : vector<8x8xf32> to vector<8xf32>
    %54 = vector.shape_cast %53 : vector<8xf32> to vector<8x1xf32>
    %55 = vector.broadcast %54 : vector<8x1xf32> to vector<8x8xf32>
    %56 = arith.subf %52, %55 : vector<8x8xf32>
    %57 = math.exp %56 : vector<8x8xf32>
    %cst_22 = arith.constant dense<0.000000e+00> : vector<8xf32>
    %58 = vector.multi_reduction <add>, %57, %cst_22 [1] : vector<8x8xf32> to vector<8xf32>
    %59 = vector.shape_cast %58 : vector<8xf32> to vector<8x1xf32>
    %60 = vector.broadcast %59 : vector<8x1xf32> to vector<8x8xf32>
    %61 = arith.divf %57, %60 : vector<8x8xf32>
    %62 = vector.broadcast %54 : vector<8x1xf32> to vector<8x8xf32>
    %63 = arith.subf %52, %62 : vector<8x8xf32>
    %cst_23 = arith.constant 0.000000e+00 : f32
    %64 = vector.broadcast %cst_23 : f32 to vector<8x8xf32>
    %65 = arith.select %9, %63, %64 : vector<8x8xi1>, vector<8x8xf32>
    %66 = math.log %59 : vector<8x1xf32>
    %67 = vector.shape_cast %66 : vector<8x1xf32> to vector<1x8x1xf32>
    %cst_24 = arith.constant dense<0.000000e+00> : vector<1xf32>
    %68 = vector.multi_reduction <add>, %67, %cst_24 [1, 2] : vector<1x8x1xf32> to vector<1xf32>
    %69 = vector.shape_cast %68 : vector<1xf32> to vector<1x1x1xf32>
    %70 = vector.extract %69[0, 0, 0] : f32 from vector<1x1x1xf32>
    %71 = arith.mulf %61, %65 : vector<8x8xf32>
    %72 = vector.shape_cast %71 : vector<8x8xf32> to vector<1x8x8xf32>
    %cst_25 = arith.constant dense<0.000000e+00> : vector<1xf32>
    %73 = vector.multi_reduction <add>, %72, %cst_25 [1, 2] : vector<1x8x8xf32> to vector<1xf32>
    %74 = vector.shape_cast %73 : vector<1xf32> to vector<1x1x1xf32>
    %75 = vector.extract %74[0, 0, 0] : f32 from vector<1x1x1xf32>
    %76 = arith.subf %70, %75 : f32
    %77 = arith.addf %42, %76 : f32
    %cst_26 = arith.constant dense<0.000000e+00> : vector<8x8xf32>
    %78 = tpu.matmul %61, %47, %cst_26 {dimension_numbers = #tpu.dot_dimension_numbers<[1], [0], [0], [1], [0, 0, 1, 1], [], []>} : vector<8x8xf32>, vector<8x8xf32>, vector<8x8xf32> -> vector<8x8xf32>
    %c0_27 = arith.constant 0 : index
    %c8 = arith.constant 8 : index
    %79 = vector.load %arg8[%c0_27, %c8] : memref<16x32xf32, #tpu.memory_space<vmem>>, vector<8x8xf32>
    tpu.vector_store %arg8[%c0_27, %c8], %78 {strides = array<i32>} : memref<16x32xf32, #tpu.memory_space<vmem>>, vector<8x8xf32>,
    %80 = vector.extract_strided_slice %6 {offsets = [0, 16], sizes = [8, 8], strides = [1, 1]} : vector<16x96xf32> to vector<8x8xf32>
    %81 = vector.extract_strided_slice %6 {offsets = [0, 48], sizes = [8, 8], strides = [1, 1]} : vector<16x96xf32> to vector<8x8xf32>
    %82 = vector.extract_strided_slice %6 {offsets = [0, 80], sizes = [8, 8], strides = [1, 1]} : vector<16x96xf32> to vector<8x8xf32>
    %cst_28 = arith.constant dense<0.000000e+00> : vector<8x8xf32>
    %83 = tpu.matmul %80, %81, %cst_28 {dimension_numbers = #tpu.dot_dimension_numbers<[1], [1], [0], [0], [0, 0, 1, 0], [], []>} : vector<8x8xf32>, vector<8x8xf32>, vector<8x8xf32> -> vector<8x8xf32>
    %cst_29 = arith.constant 0.353553385 : f32
    %84 = vector.broadcast %cst_29 : f32 to vector<8x8xf32>
    %85 = arith.mulf %83, %84 : vector<8x8xf32>
    %cst_30 = arith.constant 0xFF800000 : f32
    %86 = vector.broadcast %cst_30 : f32 to vector<8x8xf32>
    %87 = arith.select %9, %85, %86 : vector<8x8xi1>, vector<8x8xf32>
    %cst_31 = arith.constant dense<0xFF800000> : vector<8xf32>
    %88 = vector.multi_reduction <maximumf>, %87, %cst_31 [1] : vector<8x8xf32> to vector<8xf32>
    %89 = vector.shape_cast %88 : vector<8xf32> to vector<8x1xf32>
    %90 = vector.broadcast %89 : vector<8x1xf32> to vector<8x8xf32>
    %91 = arith.subf %87, %90 : vector<8x8xf32>
    %92 = math.exp %91 : vector<8x8xf32>
    %cst_32 = arith.constant dense<0.000000e+00> : vector<8xf32>
    %93 = vector.multi_reduction <add>, %92, %cst_32 [1] : vector<8x8xf32> to vector<8xf32>
    %94 = vector.shape_cast %93 : vector<8xf32> to vector<8x1xf32>
    %95 = vector.broadcast %94 : vector<8x1xf32> to vector<8x8xf32>
    %96 = arith.divf %92, %95 : vector<8x8xf32>
    %97 = vector.broadcast %89 : vector<8x1xf32> to vector<8x8xf32>
    %98 = arith.subf %87, %97 : vector<8x8xf32>
    %cst_33 = arith.constant 0.000000e+00 : f32
    %99 = vector.broadcast %cst_33 : f32 to vector<8x8xf32>
    %100 = arith.select %9, %98, %99 : vector<8x8xi1>, vector<8x8xf32>
    %101 = math.log %94 : vector<8x1xf32>
    %102 = vector.shape_cast %101 : vector<8x1xf32> to vector<1x8x1xf32>
    %cst_34 = arith.constant dense<0.000000e+00> : vector<1xf32>
    %103 = vector.multi_reduction <add>, %102, %cst_34 [1, 2] : vector<1x8x1xf32> to vector<1xf32>
    %104 = vector.shape_cast %103 : vector<1xf32> to vector<1x1x1xf32>
    %105 = vector.extract %104[0, 0, 0] : f32 from vector<1x1x1xf32>
    %106 = arith.mulf %96, %100 : vector<8x8xf32>
    %107 = vector.shape_cast %106 : vector<8x8xf32> to vector<1x8x8xf32>
    %cst_35 = arith.constant dense<0.000000e+00> : vector<1xf32>
    %108 = vector.multi_reduction <add>, %107, %cst_35 [1, 2] : vector<1x8x8xf32> to vector<1xf32>
    %109 = vector.shape_cast %108 : vector<1xf32> to vector<1x1x1xf32>
    %110 = vector.extract %109[0, 0, 0] : f32 from vector<1x1x1xf32>
    %111 = arith.subf %105, %110 : f32
    %112 = arith.addf %77, %111 : f32
    %cst_36 = arith.constant dense<0.000000e+00> : vector<8x8xf32>
    %113 = tpu.matmul %96, %82, %cst_36 {dimension_numbers = #tpu.dot_dimension_numbers<[1], [0], [0], [1], [0, 0, 1, 1], [], []>} : vector<8x8xf32>, vector<8x8xf32>, vector<8x8xf32> -> vector<8x8xf32>
    %c0_37 = arith.constant 0 : index
    %c16 = arith.constant 16 : index
    %114 = vector.load %arg8[%c0_37, %c16] : memref<16x32xf32, #tpu.memory_space<vmem>>, vector<8x8xf32>
    tpu.vector_store %arg8[%c0_37, %c16], %113 {strides = array<i32>} : memref<16x32xf32, #tpu.memory_space<vmem>>, vector<8x8xf32>,
    %115 = vector.extract_strided_slice %6 {offsets = [0, 24], sizes = [8, 8], strides = [1, 1]} : vector<16x96xf32> to vector<8x8xf32>
    %116 = vector.extract_strided_slice %6 {offsets = [0, 56], sizes = [8, 8], strides = [1, 1]} : vector<16x96xf32> to vector<8x8xf32>
    %117 = vector.extract_strided_slice %6 {offsets = [0, 88], sizes = [8, 8], strides = [1, 1]} : vector<16x96xf32> to vector<8x8xf32>
    %cst_38 = arith.constant dense<0.000000e+00> : vector<8x8xf32>
    %118 = tpu.matmul %115, %116, %cst_38 {dimension_numbers = #tpu.dot_dimension_numbers<[1], [1], [0], [0], [0, 0, 1, 0], [], []>} : vector<8x8xf32>, vector<8x8xf32>, vector<8x8xf32> -> vector<8x8xf32>
    %cst_39 = arith.constant 0.353553385 : f32
    %119 = vector.broadcast %cst_39 : f32 to vector<8x8xf32>
    %120 = arith.mulf %118, %119 : vector<8x8xf32>
    %cst_40 = arith.constant 0xFF800000 : f32
    %121 = vector.broadcast %cst_40 : f32 to vector<8x8xf32>
    %122 = arith.select %9, %120, %121 : vector<8x8xi1>, vector<8x8xf32>
    %cst_41 = arith.constant dense<0xFF800000> : vector<8xf32>
    %123 = vector.multi_reduction <maximumf>, %122, %cst_41 [1] : vector<8x8xf32> to vector<8xf32>
    %124 = vector.shape_cast %123 : vector<8xf32> to vector<8x1xf32>
    %125 = vector.broadcast %124 : vector<8x1xf32> to vector<8x8xf32>
    %126 = arith.subf %122, %125 : vector<8x8xf32>
    %127 = math.exp %126 : vector<8x8xf32>
    %cst_42 = arith.constant dense<0.000000e+00> : vector<8xf32>
    %128 = vector.multi_reduction <add>, %127, %cst_42 [1] : vector<8x8xf32> to vector<8xf32>
    %129 = vector.shape_cast %128 : vector<8xf32> to vector<8x1xf32>
    %130 = vector.broadcast %129 : vector<8x1xf32> to vector<8x8xf32>
    %131 = arith.divf %127, %130 : vector<8x8xf32>
    %132 = vector.broadcast %124 : vector<8x1xf32> to vector<8x8xf32>
    %133 = arith.subf %122, %132 : vector<8x8xf32>
    %cst_43 = arith.constant 0.000000e+00 : f32
    %134 = vector.broadcast %cst_43 : f32 to vector<8x8xf32>
    %135 = arith.select %9, %133, %134 : vector<8x8xi1>, vector<8x8xf32>
    %136 = math.log %129 : vector<8x1xf32>
    %137 = vector.shape_cast %136 : vector<8x1xf32> to vector<1x8x1xf32>
    %cst_44 = arith.constant dense<0.000000e+00> : vector<1xf32>
    %138 = vector.multi_reduction <add>, %137, %cst_44 [1, 2] : vector<1x8x1xf32> to vector<1xf32>
    %139 = vector.shape_cast %138 : vector<1xf32> to vector<1x1x1xf32>
    %140 = vector.extract %139[0, 0, 0] : f32 from vector<1x1x1xf32>
    %141 = arith.mulf %131, %135 : vector<8x8xf32>
    %142 = vector.shape_cast %141 : vector<8x8xf32> to vector<1x8x8xf32>
    %cst_45 = arith.constant dense<0.000000e+00> : vector<1xf32>
    %143 = vector.multi_reduction <add>, %142, %cst_45 [1, 2] : vector<1x8x8xf32> to vector<1xf32>
    %144 = vector.shape_cast %143 : vector<1xf32> to vector<1x1x1xf32>
    %145 = vector.extract %144[0, 0, 0] : f32 from vector<1x1x1xf32>
    %146 = arith.subf %140, %145 : f32
    %147 = arith.addf %112, %146 : f32
    %cst_46 = arith.constant dense<0.000000e+00> : vector<8x8xf32>
    %148 = tpu.matmul %131, %117, %cst_46 {dimension_numbers = #tpu.dot_dimension_numbers<[1], [0], [0], [1], [0, 0, 1, 1], [], []>} : vector<8x8xf32>, vector<8x8xf32>, vector<8x8xf32> -> vector<8x8xf32>
    %c0_47 = arith.constant 0 : index
    %c24 = arith.constant 24 : index
    %149 = vector.load %arg8[%c0_47, %c24] : memref<16x32xf32, #tpu.memory_space<vmem>>, vector<8x8xf32>
    tpu.vector_store %arg8[%c0_47, %c24], %148 {strides = array<i32>} : memref<16x32xf32, #tpu.memory_space<vmem>>, vector<8x8xf32>,
    %150 = vector.extract_strided_slice %6 {offsets = [8, 0], sizes = [8, 8], strides = [1, 1]} : vector<16x96xf32> to vector<8x8xf32>
    %151 = vector.extract_strided_slice %6 {offsets = [8, 32], sizes = [8, 8], strides = [1, 1]} : vector<16x96xf32> to vector<8x8xf32>
    %152 = vector.extract_strided_slice %6 {offsets = [8, 64], sizes = [8, 8], strides = [1, 1]} : vector<16x96xf32> to vector<8x8xf32>
    %cst_48 = arith.constant dense<0.000000e+00> : vector<8x8xf32>
    %153 = tpu.matmul %150, %151, %cst_48 {dimension_numbers = #tpu.dot_dimension_numbers<[1], [1], [0], [0], [0, 0, 1, 0], [], []>} : vector<8x8xf32>, vector<8x8xf32>, vector<8x8xf32> -> vector<8x8xf32>
    %cst_49 = arith.constant 0.353553385 : f32
    %154 = vector.broadcast %cst_49 : f32 to vector<8x8xf32>
    %155 = arith.mulf %153, %154 : vector<8x8xf32>
    %cst_50 = arith.constant 0xFF800000 : f32
    %156 = vector.broadcast %cst_50 : f32 to vector<8x8xf32>
    %157 = arith.select %9, %155, %156 : vector<8x8xi1>, vector<8x8xf32>
    %cst_51 = arith.constant dense<0xFF800000> : vector<8xf32>
    %158 = vector.multi_reduction <maximumf>, %157, %cst_51 [1] : vector<8x8xf32> to vector<8xf32>
    %159 = vector.shape_cast %158 : vector<8xf32> to vector<8x1xf32>
    %160 = vector.broadcast %159 : vector<8x1xf32> to vector<8x8xf32>
    %161 = arith.subf %157, %160 : vector<8x8xf32>
    %162 = math.exp %161 : vector<8x8xf32>
    %cst_52 = arith.constant dense<0.000000e+00> : vector<8xf32>
    %163 = vector.multi_reduction <add>, %162, %cst_52 [1] : vector<8x8xf32> to vector<8xf32>
    %164 = vector.shape_cast %163 : vector<8xf32> to vector<8x1xf32>
    %165 = vector.broadcast %164 : vector<8x1xf32> to vector<8x8xf32>
    %166 = arith.divf %162, %165 : vector<8x8xf32>
    %167 = vector.broadcast %159 : vector<8x1xf32> to vector<8x8xf32>
    %168 = arith.subf %157, %167 : vector<8x8xf32>
    %cst_53 = arith.constant 0.000000e+00 : f32
    %169 = vector.broadcast %cst_53 : f32 to vector<8x8xf32>
    %170 = arith.select %9, %168, %169 : vector<8x8xi1>, vector<8x8xf32>
    %171 = math.log %164 : vector<8x1xf32>
    %172 = vector.shape_cast %171 : vector<8x1xf32> to vector<1x8x1xf32>
    %cst_54 = arith.constant dense<0.000000e+00> : vector<1xf32>
    %173 = vector.multi_reduction <add>, %172, %cst_54 [1, 2] : vector<1x8x1xf32> to vector<1xf32>
    %174 = vector.shape_cast %173 : vector<1xf32> to vector<1x1x1xf32>
    %175 = vector.extract %174[0, 0, 0] : f32 from vector<1x1x1xf32>
    %176 = arith.mulf %166, %170 : vector<8x8xf32>
    %177 = vector.shape_cast %176 : vector<8x8xf32> to vector<1x8x8xf32>
    %cst_55 = arith.constant dense<0.000000e+00> : vector<1xf32>
    %178 = vector.multi_reduction <add>, %177, %cst_55 [1, 2] : vector<1x8x8xf32> to vector<1xf32>
    %179 = vector.shape_cast %178 : vector<1xf32> to vector<1x1x1xf32>
    %180 = vector.extract %179[0, 0, 0] : f32 from vector<1x1x1xf32>
    %181 = arith.subf %175, %180 : f32
    %182 = arith.addf %147, %181 : f32
    %cst_56 = arith.constant dense<0.000000e+00> : vector<8x8xf32>
    %183 = tpu.matmul %166, %152, %cst_56 {dimension_numbers = #tpu.dot_dimension_numbers<[1], [0], [0], [1], [0, 0, 1, 1], [], []>} : vector<8x8xf32>, vector<8x8xf32>, vector<8x8xf32> -> vector<8x8xf32>
    %c8_57 = arith.constant 8 : index
    %c0_58 = arith.constant 0 : index
    %184 = vector.load %arg8[%c8_57, %c0_58] : memref<16x32xf32, #tpu.memory_space<vmem>>, vector<8x8xf32>
    tpu.vector_store %arg8[%c8_57, %c0_58], %183 {strides = array<i32>} : memref<16x32xf32, #tpu.memory_space<vmem>>, vector<8x8xf32>,
    %185 = vector.extract_strided_slice %6 {offsets = [8, 8], sizes = [8, 8], strides = [1, 1]} : vector<16x96xf32> to vector<8x8xf32>
    %186 = vector.extract_strided_slice %6 {offsets = [8, 40], sizes = [8, 8], strides = [1, 1]} : vector<16x96xf32> to vector<8x8xf32>
    %187 = vector.extract_strided_slice %6 {offsets = [8, 72], sizes = [8, 8], strides = [1, 1]} : vector<16x96xf32> to vector<8x8xf32>
    %cst_59 = arith.constant dense<0.000000e+00> : vector<8x8xf32>
    %188 = tpu.matmul %185, %186, %cst_59 {dimension_numbers = #tpu.dot_dimension_numbers<[1], [1], [0], [0], [0, 0, 1, 0], [], []>} : vector<8x8xf32>, vector<8x8xf32>, vector<8x8xf32> -> vector<8x8xf32>
    %cst_60 = arith.constant 0.353553385 : f32
    %189 = vector.broadcast %cst_60 : f32 to vector<8x8xf32>
    %190 = arith.mulf %188, %189 : vector<8x8xf32>
    %cst_61 = arith.constant 0xFF800000 : f32
    %191 = vector.broadcast %cst_61 : f32 to vector<8x8xf32>
    %192 = arith.select %9, %190, %191 : vector<8x8xi1>, vector<8x8xf32>
    %cst_62 = arith.constant dense<0xFF800000> : vector<8xf32>
    %193 = vector.multi_reduction <maximumf>, %192, %cst_62 [1] : vector<8x8xf32> to vector<8xf32>
    %194 = vector.shape_cast %193 : vector<8xf32> to vector<8x1xf32>
    %195 = vector.broadcast %194 : vector<8x1xf32> to vector<8x8xf32>
    %196 = arith.subf %192, %195 : vector<8x8xf32>
    %197 = math.exp %196 : vector<8x8xf32>
    %cst_63 = arith.constant dense<0.000000e+00> : vector<8xf32>
    %198 = vector.multi_reduction <add>, %197, %cst_63 [1] : vector<8x8xf32> to vector<8xf32>
    %199 = vector.shape_cast %198 : vector<8xf32> to vector<8x1xf32>
    %200 = vector.broadcast %199 : vector<8x1xf32> to vector<8x8xf32>
    %201 = arith.divf %197, %200 : vector<8x8xf32>
    %202 = vector.broadcast %194 : vector<8x1xf32> to vector<8x8xf32>
    %203 = arith.subf %192, %202 : vector<8x8xf32>
    %cst_64 = arith.constant 0.000000e+00 : f32
    %204 = vector.broadcast %cst_64 : f32 to vector<8x8xf32>
    %205 = arith.select %9, %203, %204 : vector<8x8xi1>, vector<8x8xf32>
    %206 = math.log %199 : vector<8x1xf32>
    %207 = vector.shape_cast %206 : vector<8x1xf32> to vector<1x8x1xf32>
    %cst_65 = arith.constant dense<0.000000e+00> : vector<1xf32>
    %208 = vector.multi_reduction <add>, %207, %cst_65 [1, 2] : vector<1x8x1xf32> to vector<1xf32>
    %209 = vector.shape_cast %208 : vector<1xf32> to vector<1x1x1xf32>
    %210 = vector.extract %209[0, 0, 0] : f32 from vector<1x1x1xf32>
    %211 = arith.mulf %201, %205 : vector<8x8xf32>
    %212 = vector.shape_cast %211 : vector<8x8xf32> to vector<1x8x8xf32>
    %cst_66 = arith.constant dense<0.000000e+00> : vector<1xf32>
    %213 = vector.multi_reduction <add>, %212, %cst_66 [1, 2] : vector<1x8x8xf32> to vector<1xf32>
    %214 = vector.shape_cast %213 : vector<1xf32> to vector<1x1x1xf32>
    %215 = vector.extract %214[0, 0, 0] : f32 from vector<1x1x1xf32>
    %216 = arith.subf %210, %215 : f32
    %217 = arith.addf %182, %216 : f32
    %cst_67 = arith.constant dense<0.000000e+00> : vector<8x8xf32>
    %218 = tpu.matmul %201, %187, %cst_67 {dimension_numbers = #tpu.dot_dimension_numbers<[1], [0], [0], [1], [0, 0, 1, 1], [], []>} : vector<8x8xf32>, vector<8x8xf32>, vector<8x8xf32> -> vector<8x8xf32>
    %c8_68 = arith.constant 8 : index
    %c8_69 = arith.constant 8 : index
    %219 = vector.load %arg8[%c8_68, %c8_69] : memref<16x32xf32, #tpu.memory_space<vmem>>, vector<8x8xf32>
    tpu.vector_store %arg8[%c8_68, %c8_69], %218 {strides = array<i32>} : memref<16x32xf32, #tpu.memory_space<vmem>>, vector<8x8xf32>,
    %220 = vector.extract_strided_slice %6 {offsets = [8, 16], sizes = [8, 8], strides = [1, 1]} : vector<16x96xf32> to vector<8x8xf32>
    %221 = vector.extract_strided_slice %6 {offsets = [8, 48], sizes = [8, 8], strides = [1, 1]} : vector<16x96xf32> to vector<8x8xf32>
    %222 = vector.extract_strided_slice %6 {offsets = [8, 80], sizes = [8, 8], strides = [1, 1]} : vector<16x96xf32> to vector<8x8xf32>
    %cst_70 = arith.constant dense<0.000000e+00> : vector<8x8xf32>
    %223 = tpu.matmul %220, %221, %cst_70 {dimension_numbers = #tpu.dot_dimension_numbers<[1], [1], [0], [0], [0, 0, 1, 0], [], []>} : vector<8x8xf32>, vector<8x8xf32>, vector<8x8xf32> -> vector<8x8xf32>
    %cst_71 = arith.constant 0.353553385 : f32
    %224 = vector.broadcast %cst_71 : f32 to vector<8x8xf32>
    %225 = arith.mulf %223, %224 : vector<8x8xf32>
    %cst_72 = arith.constant 0xFF800000 : f32
    %226 = vector.broadcast %cst_72 : f32 to vector<8x8xf32>
    %227 = arith.select %9, %225, %226 : vector<8x8xi1>, vector<8x8xf32>
    %cst_73 = arith.constant dense<0xFF800000> : vector<8xf32>
    %228 = vector.multi_reduction <maximumf>, %227, %cst_73 [1] : vector<8x8xf32> to vector<8xf32>
    %229 = vector.shape_cast %228 : vector<8xf32> to vector<8x1xf32>
    %230 = vector.broadcast %229 : vector<8x1xf32> to vector<8x8xf32>
    %231 = arith.subf %227, %230 : vector<8x8xf32>
    %232 = math.exp %231 : vector<8x8xf32>
    %cst_74 = arith.constant dense<0.000000e+00> : vector<8xf32>
    %233 = vector.multi_reduction <add>, %232, %cst_74 [1] : vector<8x8xf32> to vector<8xf32>
    %234 = vector.shape_cast %233 : vector<8xf32> to vector<8x1xf32>
    %235 = vector.broadcast %234 : vector<8x1xf32> to vector<8x8xf32>
    %236 = arith.divf %232, %235 : vector<8x8xf32>
    %237 = vector.broadcast %229 : vector<8x1xf32> to vector<8x8xf32>
    %238 = arith.subf %227, %237 : vector<8x8xf32>
    %cst_75 = arith.constant 0.000000e+00 : f32
    %239 = vector.broadcast %cst_75 : f32 to vector<8x8xf32>
    %240 = arith.select %9, %238, %239 : vector<8x8xi1>, vector<8x8xf32>
    %241 = math.log %234 : vector<8x1xf32>
    %242 = vector.shape_cast %241 : vector<8x1xf32> to vector<1x8x1xf32>
    %cst_76 = arith.constant dense<0.000000e+00> : vector<1xf32>
    %243 = vector.multi_reduction <add>, %242, %cst_76 [1, 2] : vector<1x8x1xf32> to vector<1xf32>
    %244 = vector.shape_cast %243 : vector<1xf32> to vector<1x1x1xf32>
    %245 = vector.extract %244[0, 0, 0] : f32 from vector<1x1x1xf32>
    %246 = arith.mulf %236, %240 : vector<8x8xf32>
    %247 = vector.shape_cast %246 : vector<8x8xf32> to vector<1x8x8xf32>
    %cst_77 = arith.constant dense<0.000000e+00> : vector<1xf32>
    %248 = vector.multi_reduction <add>, %247, %cst_77 [1, 2] : vector<1x8x8xf32> to vector<1xf32>
    %249 = vector.shape_cast %248 : vector<1xf32> to vector<1x1x1xf32>
    %250 = vector.extract %249[0, 0, 0] : f32 from vector<1x1x1xf32>
    %251 = arith.subf %245, %250 : f32
    %252 = arith.addf %217, %251 : f32
    %cst_78 = arith.constant dense<0.000000e+00> : vector<8x8xf32>
    %253 = tpu.matmul %236, %222, %cst_78 {dimension_numbers = #tpu.dot_dimension_numbers<[1], [0], [0], [1], [0, 0, 1, 1], [], []>} : vector<8x8xf32>, vector<8x8xf32>, vector<8x8xf32> -> vector<8x8xf32>
    %c8_79 = arith.constant 8 : index
    %c16_80 = arith.constant 16 : index
    %254 = vector.load %arg8[%c8_79, %c16_80] : memref<16x32xf32, #tpu.memory_space<vmem>>, vector<8x8xf32>
    tpu.vector_store %arg8[%c8_79, %c16_80], %253 {strides = array<i32>} : memref<16x32xf32, #tpu.memory_space<vmem>>, vector<8x8xf32>,
    %255 = vector.extract_strided_slice %6 {offsets = [8, 24], sizes = [8, 8], strides = [1, 1]} : vector<16x96xf32> to vector<8x8xf32>
    %256 = vector.extract_strided_slice %6 {offsets = [8, 56], sizes = [8, 8], strides = [1, 1]} : vector<16x96xf32> to vector<8x8xf32>
    %257 = vector.extract_strided_slice %6 {offsets = [8, 88], sizes = [8, 8], strides = [1, 1]} : vector<16x96xf32> to vector<8x8xf32>
    %cst_81 = arith.constant dense<0.000000e+00> : vector<8x8xf32>
    %258 = tpu.matmul %255, %256, %cst_81 {dimension_numbers = #tpu.dot_dimension_numbers<[1], [1], [0], [0], [0, 0, 1, 0], [], []>} : vector<8x8xf32>, vector<8x8xf32>, vector<8x8xf32> -> vector<8x8xf32>
    %cst_82 = arith.constant 0.353553385 : f32
    %259 = vector.broadcast %cst_82 : f32 to vector<8x8xf32>
    %260 = arith.mulf %258, %259 : vector<8x8xf32>
    %cst_83 = arith.constant 0xFF800000 : f32
    %261 = vector.broadcast %cst_83 : f32 to vector<8x8xf32>
    %262 = arith.select %9, %260, %261 : vector<8x8xi1>, vector<8x8xf32>
    %cst_84 = arith.constant dense<0xFF800000> : vector<8xf32>
    %263 = vector.multi_reduction <maximumf>, %262, %cst_84 [1] : vector<8x8xf32> to vector<8xf32>
    %264 = vector.shape_cast %263 : vector<8xf32> to vector<8x1xf32>
    %265 = vector.broadcast %264 : vector<8x1xf32> to vector<8x8xf32>
    %266 = arith.subf %262, %265 : vector<8x8xf32>
    %267 = math.exp %266 : vector<8x8xf32>
    %cst_85 = arith.constant dense<0.000000e+00> : vector<8xf32>
    %268 = vector.multi_reduction <add>, %267, %cst_85 [1] : vector<8x8xf32> to vector<8xf32>
    %269 = vector.shape_cast %268 : vector<8xf32> to vector<8x1xf32>
    %270 = vector.broadcast %269 : vector<8x1xf32> to vector<8x8xf32>
    %271 = arith.divf %267, %270 : vector<8x8xf32>
    %272 = vector.broadcast %264 : vector<8x1xf32> to vector<8x8xf32>
    %273 = arith.subf %262, %272 : vector<8x8xf32>
    %cst_86 = arith.constant 0.000000e+00 : f32
    %274 = vector.broadcast %cst_86 : f32 to vector<8x8xf32>
    %275 = arith.select %9, %273, %274 : vector<8x8xi1>, vector<8x8xf32>
    %276 = math.log %269 : vector<8x1xf32>
    %277 = vector.shape_cast %276 : vector<8x1xf32> to vector<1x8x1xf32>
    %cst_87 = arith.constant dense<0.000000e+00> : vector<1xf32>
    %278 = vector.multi_reduction <add>, %277, %cst_87 [1, 2] : vector<1x8x1xf32> to vector<1xf32>
    %279 = vector.shape_cast %278 : vector<1xf32> to vector<1x1x1xf32>
    %280 = vector.extract %279[0, 0, 0] : f32 from vector<1x1x1xf32>
    %281 = arith.mulf %271, %275 : vector<8x8xf32>
    %282 = vector.shape_cast %281 : vector<8x8xf32> to vector<1x8x8xf32>
    %cst_88 = arith.constant dense<0.000000e+00> : vector<1xf32>
    %283 = vector.multi_reduction <add>, %282, %cst_88 [1, 2] : vector<1x8x8xf32> to vector<1xf32>
    %284 = vector.shape_cast %283 : vector<1xf32> to vector<1x1x1xf32>
    %285 = vector.extract %284[0, 0, 0] : f32 from vector<1x1x1xf32>
    %286 = arith.subf %280, %285 : f32
    %287 = arith.addf %252, %286 : f32
    %cst_89 = arith.constant dense<0.000000e+00> : vector<8x8xf32>
    %288 = tpu.matmul %271, %257, %cst_89 {dimension_numbers = #tpu.dot_dimension_numbers<[1], [0], [0], [1], [0, 0, 1, 1], [], []>} : vector<8x8xf32>, vector<8x8xf32>, vector<8x8xf32> -> vector<8x8xf32>
    %c8_90 = arith.constant 8 : index
    %c24_91 = arith.constant 24 : index
    %289 = vector.load %arg8[%c8_90, %c24_91] : memref<16x32xf32, #tpu.memory_space<vmem>>, vector<8x8xf32>
    tpu.vector_store %arg8[%c8_90, %c24_91], %288 {strides = array<i32>} : memref<16x32xf32, #tpu.memory_space<vmem>>, vector<8x8xf32>,
    %c0_92 = arith.constant 0 : index
    %c0_93 = arith.constant 0 : index
    %290 = vector.load %arg8[%c0_92, %c0_93] : memref<16x32xf32, #tpu.memory_space<vmem>>, vector<16x32xf32>
    %c0_94 = arith.constant 0 : index
    %c0_95 = arith.constant 0 : index
    %291 = vector.load %arg4[%c0_94, %c0_95] : memref<32x32xf32, #tpu.memory_space<vmem>>, vector<32x32xf32>
    %cst_96 = arith.constant dense<0.000000e+00> : vector<16x32xf32>
    %292 = tpu.matmul %290, %291, %cst_96 {dimension_numbers = #tpu.dot_dimension_numbers<[1], [0], [0], [1], [0, 0, 1, 1], [], []>} : vector<16x32xf32>, vector<32x32xf32>, vector<16x32xf32> -> vector<16x32xf32>
    %c0_97 = arith.constant 0 : index
    %c0_98 = arith.constant 0 : index
    %293 = vector.load %arg5[%c0_97, %c0_98] : memref<1x32xf32, #tpu.memory_space<vmem>>, vector<1x32xf32>
    %294 = vector.broadcast %293 : vector<1x32xf32> to vector<16x32xf32>
    %295 = arith.addf %292, %294 : vector<16x32xf32>
    %296 = vector.shape_cast %295 : vector<16x32xf32> to vector<2x8x32xf32>
    %c0_99 = arith.constant 0 : index
    %c0_100 = arith.constant 0 : index
    %c0_101 = arith.constant 0 : index
    %297 = vector.load %arg6[%c0_99, %c0_100, %c0_101] : memref<2x8x32xf32, #tpu.memory_space<vmem>>, vector<2x8x32xf32>
    tpu.vector_store %arg6[%c0_99, %c0_100, %c0_101], %296 {strides = array<i32>} : memref<2x8x32xf32, #tpu.memory_space<vmem>>, vector<2x8x32xf32>,
    %cst_102 = arith.constant 6.400000e+01 : f32
    %298 = arith.divf %287, %cst_102 : f32
    %299 = vector.broadcast %298 : f32 to vector<1x1x128xf32>
    %c0_103 = arith.constant 0 : index
    %c0_104 = arith.constant 0 : index
    %c0_105 = arith.constant 0 : index
    %300 = vector.load %arg7[%c0_103, %c0_104, %c0_105] : memref<1x1x128xf32, #tpu.memory_space<vmem>>, vector<1x1x128xf32>
    tpu.vector_store %arg7[%c0_103, %c0_104, %c0_105], %299 {strides = array<i32>} : memref<1x1x128xf32, #tpu.memory_space<vmem>>, vector<1x1x128xf32>,
    return
  }
  func.func @transform_0(%arg0: i32) -> (i32, i32, i32) {
    %c0_i32 = arith.constant 0 : i32
    %c0_i32_0 = arith.constant 0 : i32
    %c0_i32_1 = arith.constant 0 : i32
    return %arg0, %c0_i32, %c0_i32_0 : i32, i32, i32
  }
  func.func @transform_1(%arg0: i32) -> (i32, i32) {
    %c0_i32 = arith.constant 0 : i32
    %c0_i32_0 = arith.constant 0 : i32
    %c0_i32_1 = arith.constant 0 : i32
    return %c0_i32, %c0_i32_0 : i32, i32
  }
  func.func @transform_2(%arg0: i32) -> (i32, i32) {
    %c0_i32 = arith.constant 0 : i32
    %c0_i32_0 = arith.constant 0 : i32
    %c0_i32_1 = arith.constant 0 : i32
    return %c0_i32, %c0_i32_0 : i32, i32
  }
  func.func @transform_3(%arg0: i32) -> (i32, i32) {
    %c0_i32 = arith.constant 0 : i32
    %c0_i32_0 = arith.constant 0 : i32
    %c0_i32_1 = arith.constant 0 : i32
    return %c0_i32, %c0_i32_0 : i32, i32
  }
  func.func @transform_4(%arg0: i32) -> (i32, i32) {
    %c0_i32 = arith.constant 0 : i32
    %c0_i32_0 = arith.constant 0 : i32
    %c0_i32_1 = arith.constant 0 : i32
    return %c0_i32, %c0_i32_0 : i32, i32
  }
  func.func @transform_5(%arg0: i32) -> (i32, i32, i32) {
    %c0_i32 = arith.constant 0 : i32
    %c0_i32_0 = arith.constant 0 : i32
    %c0_i32_1 = arith.constant 0 : i32
    return %arg0, %c0_i32, %c0_i32_0 : i32, i32, i32
  }
  func.func @transform_6(%arg0: i32) -> (i32, i32, i32) {
    %c0_i32 = arith.constant 0 : i32
    %c0_i32_0 = arith.constant 0 : i32
    %c0_i32_1 = arith.constant 0 : i32
    return %arg0, %c0_i32, %c0_i32_0 : i32, i32, i32
  }
}

</mosaic_0001>

<llo_original>
// kernel: tpu_custom_call.1
$region0: #{tpu_custom_call.1}
  #allocation0 [shape = 'u32[]', space=smem, size = 0x4, offset = 0x4, fixed_abs, tag = 'smem constant byte address 0x4 - core index']
  #allocation1 [shape = 'u32[144,128]{1,0:T(1,128)}', space=vmem, size = 0x12000, scoped, tag = 'internal scratch']
  #allocation2 [shape = 'f32[16,32]{1,0:T(8,128)}', space=vmem, size = 0x2000, scoped, tag = 'scratch operand']
  %s0 = inlined_call_operand.hbm [shape: f32[2,8,32], index: 0, kind: input, shape index: {}]
  %s1 = inlined_call_operand.hbm [shape: f32[32,96], index: 1, kind: input, shape index: {}]
  %s2 = inlined_call_operand.vmem [shape: f32[1,96], index: 2, kind: input, shape index: {}]
  %s3 = inlined_call_operand.hbm [shape: f32[32,32], index: 3, kind: input, shape index: {}]
  %s4 = inlined_call_operand.vmem [shape: f32[1,32], index: 4, kind: input, shape index: {}]
  %s5 = inlined_call_operand.hbm [shape: f32[2,8,32], index: 5, kind: output, shape index: {0}]
  %s6 = inlined_call_operand.hbm [shape: f32[1,1,128], index: 6, kind: output, shape index: {1}]
  %7 = xla_tuple %s5, %s6
  %s8 = sld [smem:[#allocation0]]
  $region50: #{tpu_custom_call.1} parent=0
    _
  %s10 = ssub.s32 1, %s8
  %s11 = scalar_select 0, %s10, %s8
  $region1: #{tpu_custom_call.1} parent=0
    #allocation3 [shape = 'u8[8192]{0}', space=vmem, size = 0x2000, scoped, tag = 'input window, operand 0, single buffered']
    #allocation4 [shape = 's32[1]{0}', space=sflag, size = 0x4, scoped, tag = 'scoped memory for tpu_custom_call.1']
    #allocation5 [shape = 's32[1]{0}', space=sflag, size = 0x4, scoped, tag = 'scoped memory for tpu_custom_call.1']
    #allocation6 [shape = 'u8[16384]{0}', space=vmem, size = 0x4000, scoped, tag = 'input window, operand 1, single buffered']
    #allocation7 [shape = 's32[1]{0}', space=sflag, size = 0x4, scoped, tag = 'scoped memory for tpu_custom_call.1']
    #allocation8 [shape = 'u8[16384]{0}', space=vmem, size = 0x4000, scoped, tag = 'input window, operand 3, single buffered']
    #allocation9 [shape = 'u8[8192]{0}', space=vmem, size = 0x2000, scoped, tag = 'output window, operand 0, single buffered']
    #allocation10 [shape = 'u8[512]{0}', space=vmem, size = 0x400, scoped, tag = 'output window, operand 1, single buffered']
    #allocation11 [shape = 's32[1]{0}', space=sflag, size = 0x4, scoped, tag = 'scoped memory for tpu_custom_call.1']
    %12 = vsyncpa [#allocation4], 0
    %13 = vsyncpa [#allocation7], 0
    %14 = vsyncpa [#allocation5], 0
    %15 = vsyncpa [#allocation11], 0
    // Predicated region
    $region2: #{tpu_custom_call.1} parent=1 // pred_check
      _
    $region3: #{tpu_custom_call.1} parent=1 // pred_check_branch
      %17 = sbr.rel (0) target = $region5
    $region4: #{tpu_custom_call.1} parent=1 // pred_region
      %s19 = ssub.s32 256, 256
      %20 = vsyncadd [#allocation4], %s19
      %s21 = sshll.u32 [#allocation3], 4
      %s22 = int_to_ptr.vmem [resolvable:$true] %s21
      %27 = dma.hbm_to_vmem [thread:$0]  %s0, 256, %s22, [#allocation4], 128, 128, 8
    $region5: #{tpu_custom_call.1} parent=1 // pred_fallthru
      _
    // Predicated region
    $region6: #{tpu_custom_call.1} parent=1 // pred_check
      _
    $region7: #{tpu_custom_call.1} parent=1 // pred_check_branch
      %29 = sbr.rel (0) target = $region9
    $region8: #{tpu_custom_call.1} parent=1 // pred_region
      %s31 = ssub.s32 512, 512
      %32 = vsyncadd [#allocation7], %s31
      %s33 = sshll.u32 [#allocation6], 4
      %s34 = int_to_ptr.vmem [resolvable:$true] %s33
      %39 = dma.hbm_to_vmem [thread:$0]  %s1, 512, %s34, [#allocation7], 128, 128, 8
    $region9: #{tpu_custom_call.1} parent=1 // pred_fallthru
      _
    // Predicated region
    $region10: #{tpu_custom_call.1} parent=1 // pred_check
      _
    $region11: #{tpu_custom_call.1} parent=1 // pred_check_branch
      %41 = sbr.rel (0) target = $region13
    $region12: #{tpu_custom_call.1} parent=1 // pred_region
      _
    $region13: #{tpu_custom_call.1} parent=1 // pred_fallthru
      _
    // Predicated region
    $region14: #{tpu_custom_call.1} parent=1 // pred_check
      _
    $region15: #{tpu_custom_call.1} parent=1 // pred_check_branch
      %43 = sbr.rel (0) target = $region17
    $region16: #{tpu_custom_call.1} parent=1 // pred_region
      %s45 = ssub.s32 512, 512
      %46 = vsyncadd [#allocation7], %s45
      %s47 = sshll.u32 [#allocation8], 4
      %s48 = int_to_ptr.vmem [resolvable:$true] %s47
      %53 = dma.hbm_to_vmem [thread:$0]  %s3, 512, %s48, [#allocation7], 128, 128, 8
    $region17: #{tpu_custom_call.1} parent=1 // pred_fallthru
      _
    // Predicated region
    $region18: #{tpu_custom_call.1} parent=1 // pred_check
      _
    $region19: #{tpu_custom_call.1} parent=1 // pred_check_branch
      %55 = sbr.rel (0) target = $region21
    $region20: #{tpu_custom_call.1} parent=1 // pred_region
      _
    $region21: #{tpu_custom_call.1} parent=1 // pred_fallthru
      _
    // Predicated region
    $region22: #{tpu_custom_call.1} parent=1 // pred_check
      _
    $region23: #{tpu_custom_call.1} parent=1 // pred_check_branch
      %57 = sbr.rel (0) target = $region25
    $region24: #{tpu_custom_call.1} parent=1 // pred_region
      %58 = dma.done [#allocation4], 256
    $region25: #{tpu_custom_call.1} parent=1 // pred_fallthru
      _
    // Predicated region
    $region26: #{tpu_custom_call.1} parent=1 // pred_check
      _
    $region27: #{tpu_custom_call.1} parent=1 // pred_check_branch
      %60 = sbr.rel (0) target = $region29
    $region28: #{tpu_custom_call.1} parent=1 // pred_region
      %61 = dma.done [#allocation7], 512
    $region29: #{tpu_custom_call.1} parent=1 // pred_fallthru
      _
    // Predicated region
    $region30: #{tpu_custom_call.1} parent=1 // pred_check
      _
    $region31: #{tpu_custom_call.1} parent=1 // pred_check_branch
      %63 = sbr.rel (0) target = $region33
    $region32: #{tpu_custom_call.1} parent=1 // pred_region
      %64 = dma.done [#allocation7], 512
    $region33: #{tpu_custom_call.1} parent=1 // pred_fallthru
      _
    %v65 = vld [vmem:[#allocation3] sm:$0xff]
    %v66 = vld [vmem:[#allocation3 + $0x8] sm:$0xff]
    %v67 = vld [vmem:[#allocation6] sm:$0xff]
    %v68 = vld [vmem:[#allocation6 + $0x8] sm:$0xff]
    %v69 = vld [vmem:[#allocation6 + $0x10] sm:$0xff]
    %v70 = vld [vmem:[#allocation6 + $0x18] sm:$0xff]
    %v71 = vld [vmem:[%s2] sm:$0x1]
    %v73 = vlaneseq
    %v74 = vshrl.u32 %v73, 7
    %v75 = vsub.s32 0, %v74
    %v76 = vrot.slane %v71, %v75
    %vm78 = vcmask 261120
    %v80 = vsel %vm78, %v65, 0
    %v83 = vsel %vm78, %v66, 0
    %85 = vmatprep.subr.mxu0 0.0
    %86 = vmatpush1.msra.mxu0 %v67
    %87 = vmatprep.subr.mxu0 0.0
    %88 = vmatpush1.msra.mxu0 %v68
    %89 = vmatprep.subr.mxu0 0.0
    %90 = vmatpush1.msra.mxu0 %v69
    %91 = vmatprep.subr.mxu0 0.0
    %92 = vmatpush1.msra.mxu0 %v70
    %93 = vmatprep.subr.mxu0 0.0
    %94 = vmatpush1.msra.mxu0 0.0
    %95 = vmatprep.subr.mxu0 0.0
    %96 = vmatpush1.msra.mxu0 0.0
    %97 = vmatprep.subr.mxu0 0.0
    %98 = vmatpush1.msra.mxu0 0.0
    %99 = vmatprep.subr.mxu0 0.0
    %100 = vmatpush1.msra.mxu0 0.0
    %101 = vmatprep.subr.mxu0 0.0
    %102 = vmatpush1.msra.mxu0 0.0
    %103 = vmatprep.subr.mxu0 0.0
    %104 = vmatpush1.msra.mxu0 0.0
    %105 = vmatprep.subr.mxu0 0.0
    %106 = vmatpush1.msra.mxu0 0.0
    %107 = vmatprep.subr.mxu0 0.0
    %108 = vmatpush1.msra.mxu0 0.0
    %109 = vmatprep.subr.mxu0 0.0
    %110 = vmatpush1.msra.mxu0 0.0
    %111 = vmatprep.subr.mxu0 0.0
    %112 = vmatpush1.msra.mxu0 0.0
    %113 = vmatprep.subr.mxu0 0.0
    %114 = vmatpush1.msra.mxu0 0.0
    %115 = vmatprep.subr.mxu0 0.0
    %116 = vmatpush1.msra.mxu0 0.0
    %117 = vmatprep.subr.mxu0 0.0
    %118 = vmatpush1.msra.mxu0 0.0
    %119 = vmatprep.subr.mxu0 0.0
    %120 = vmatpush1.msra.mxu0 0.0
    %121 = vmatprep.subr.mxu0 0.0
    %122 = vmatpush1.msra.mxu0 0.0
    %123 = vmatprep.subr.mxu0 0.0
    %124 = vmatpush1.msra.mxu0 0.0
    %125 = vmatprep.subr.mxu0 0.0
    %126 = vmatpush1.msra.mxu0 0.0
    %127 = vmatprep.subr.mxu0 0.0
    %128 = vmatpush1.msra.mxu0 0.0
    %129 = vmatprep.subr.mxu0 0.0
    %130 = vmatpush1.msra.mxu0 0.0
    %131 = vmatprep.subr.mxu0 0.0
    %132 = vmatpush1.msra.mxu0 0.0
    %133 = vmatprep.subr.mxu0 0.0
    %134 = vmatpush1.msra.mxu0 0.0
    %135 = vmatprep.subr.mxu0 0.0
    %136 = vmatpush1.msra.mxu0 0.0
    %137 = vmatprep.subr.mxu0 0.0
    %138 = vmatpush1.msra.mxu0 0.0
    %139 = vmatprep.subr.mxu0 0.0
    %140 = vmatpush1.msra.mxu0 0.0
    %141 = vmatprep.subr.mxu0 0.0
    %142 = vmatpush1.msra.mxu0 0.0
    %143 = vmatprep.subr.mxu0 0.0
    %144 = vmatpush1.msra.mxu0 0.0
    %145 = vmatprep.subr.mxu0 0.0
    %146 = vmatpush1.msra.mxu0 0.0
    %147 = vmatprep.subr.mxu0 0.0
    %148 = vmatpush1.msra.mxu0 0.0
    %149 = vmatprep.mubr.f32.mxu0 0.0
    %150 = vmatmul.mubr.f32.gmra.mrb[0].mxu0 %v80
    %v151 = vpop.f32.mrb[0].mxu0
    %v152 = vadd.f32 %v76, %v151
    %v153 = vpop.f32.mrb[0].mxu0
    %154 = vmatprep.mubr.f32.mxu0 0.0
    %155 = vmatmul.mubr.f32.gmra.mrb[0].mxu0 %v83
    %v156 = vpop.f32.mrb[0].mxu0
    %v157 = vadd.f32 %v76, %v156
    %v158 = vpop.f32.mrb[0].mxu0
    %159 = vdwg.mxu0
    %v160 = vlaneseq
    %v161 = vshrl.u32 %v160, 7
    %v162 = vlaneseq
    %v163 = vand.u32 %v162, 127
    %vm164 = vcmp.ge.s32.totalorder %v161, %v163
    %166 = vrot.lane.b32.xlu0 %v152, 96
    %v167 = vpop.permute.xlu0 %166
    %vm168 = vcmask 64512
    %v169 = vsel %vm168, %v152, 0
    %v171 = vsel %vm168, %v167, 0
    %173 = vmatprep.subr.mxu0 0.0
    %174 = vmatpush1.xpose.msra.mxu0 %v171
    %175 = vmatprep.subr.mxu0 0.0
    %176 = vmatpush1.xpose.msra.mxu0 0.0
    %177 = vmatprep.subr.mxu0 0.0
    %178 = vmatpush1.xpose.msra.mxu0 0.0
    %179 = vmatprep.subr.mxu0 0.0
    %180 = vmatpush1.xpose.msra.mxu0 0.0
    %181 = vmatprep.subr.mxu0 0.0
    %182 = vmatpush1.xpose.msra.mxu0 0.0
    %183 = vmatprep.subr.mxu0 0.0
    %184 = vmatpush1.xpose.msra.mxu0 0.0
    %185 = vmatprep.subr.mxu0 0.0
    %186 = vmatpush1.xpose.msra.mxu0 0.0
    %187 = vmatprep.subr.mxu0 0.0
    %188 = vmatpush1.xpose.msra.mxu0 0.0
    %189 = vmatprep.subr.mxu0 0.0
    %190 = vmatpush1.xpose.msra.mxu0 0.0
    %191 = vmatprep.subr.mxu0 0.0
    %192 = vmatpush1.xpose.msra.mxu0 0.0
    %193 = vmatprep.subr.mxu0 0.0
    %194 = vmatpush1.xpose.msra.mxu0 0.0
    %195 = vmatprep.subr.mxu0 0.0
    %196 = vmatpush1.xpose.msra.mxu0 0.0
    %197 = vmatprep.subr.mxu0 0.0
    %198 = vmatpush1.xpose.msra.mxu0 0.0
    %199 = vmatprep.subr.mxu0 0.0
    %200 = vmatpush1.xpose.msra.mxu0 0.0
    %201 = vmatprep.subr.mxu0 0.0
    %202 = vmatpush1.xpose.msra.mxu0 0.0
    %203 = vmatprep.subr.mxu0 0.0
    %204 = vmatpush1.xpose.msra.mxu0 0.0
    %205 = vmatprep.subr.mxu0 0.0
    %206 = vmatpush1.xpose.msra.mxu0 0.0
    %207 = vmatprep.subr.mxu0 0.0
    %208 = vmatpush1.xpose.msra.mxu0 0.0
    %209 = vmatprep.subr.mxu0 0.0
    %210 = vmatpush1.xpose.msra.mxu0 0.0
    %211 = vmatprep.subr.mxu0 0.0
    %212 = vmatpush1.xpose.msra.mxu0 0.0
    %213 = vmatprep.subr.mxu0 0.0
    %214 = vmatpush1.xpose.msra.mxu0 0.0
    %215 = vmatprep.subr.mxu0 0.0
    %216 = vmatpush1.xpose.msra.mxu0 0.0
    %217 = vmatprep.subr.mxu0 0.0
    %218 = vmatpush1.xpose.msra.mxu0 0.0
    %219 = vmatprep.subr.mxu0 0.0
    %220 = vmatpush1.xpose.msra.mxu0 0.0
    %221 = vmatprep.subr.mxu0 0.0
    %222 = vmatpush1.xpose.msra.mxu0 0.0
    %223 = vmatprep.subr.mxu0 0.0
    %224 = vmatpush1.xpose.msra.mxu0 0.0
    %225 = vmatprep.subr.mxu0 0.0
    %226 = vmatpush1.xpose.msra.mxu0 0.0
    %227 = vmatprep.subr.mxu0 0.0
    %228 = vmatpush1.xpose.msra.mxu0 0.0
    %229 = vmatprep.subr.mxu0 0.0
    %230 = vmatpush1.xpose.msra.mxu0 0.0
    %231 = vmatprep.subr.mxu0 0.0
    %232 = vmatpush1.xpose.msra.mxu0 0.0
    %233 = vmatprep.subr.mxu0 0.0
    %234 = vmatpush1.xpose.msra.mxu0 0.0
    %235 = vmatprep.subr.mxu0 0.0
    %236 = vmatpush1.xpose.msra.mxu0 0.0
    %237 = vmatprep.mubr.f32.mxu0 0.0
    %238 = vmatmul.mubr.f32.gmra.mrb[0].mxu0 %v169
    %v239 = vpop.f32.mrb[0].mxu0
    %v240 = vadd.f32 0.0, %v239
    %v241 = vpop.f32.mrb[0].mxu0
    %242 = vdwg.mxu0
    %v243 = vmul.f32 %v240, 0.35355338
    %v244 = vsel %vm164, %v243, -inf
    %v245 = vsel %vm168, %v244, -inf
    %246 = vmax.xlane.f32.xlu0 %v245
    %v247 = vpop.xlane.xlu0 %246
    %v248 = vsub.f32 %v244, %v247
    %v249 = vmul.f32 %v248, 1.442695
    %v250 = vpow.pop %v249
    %v251 = vsel %vm168, %v250, 0.0
    %252 = vadd.xlane.f32.xlu0 %v251
    %v253 = vpop.xlane.xlu0 %252
    %v254 = vrcp.pop %v253
    %v255 = vmul.f32 %v250, %v254
    %v256 = vsel %vm164, %v248, 0.0
    %v257 = vlog2.pop %v253
    %v258 = vmul.f32 %v257, 0.6931472
    %vm259 = vcmask 7168
    %v260 = vsel %vm259, %v258, 0.0
    %261 = vadd.xlane.f32.xlu0 %v260
    %v262 = vpop.xlane.xlu0 %261
    %v263 = vrot.slane %v262, 4
    %v264 = vadd.f32 %v262, %v263
    %v265 = vrot.slane %v264, 2
    %v266 = vadd.f32 %v264, %v265
    %v267 = vrot.slane %v266, 1
    %v268 = vadd.f32 %v266, %v267
    %s269 = vtos %v268
    %v270 = vmul.f32 %v255, %v256
    %v271 = vsel %vm168, %v270, 0.0
    %272 = vadd.xlane.f32.xlu0 %v271
    %v273 = vpop.xlane.xlu0 %272
    %v274 = vrot.slane %v273, 4
    %v275 = vadd.f32 %v273, %v274
    %v276 = vrot.slane %v275, 2
    %v277 = vadd.f32 %v275, %v276
    %v278 = vrot.slane %v277, 1
    %v279 = vadd.f32 %v277, %v278
    %s280 = vtos %v279
    %s281 = ssub.f32 %s269, %s280
    %s282 = sadd.f32 %s281, 0.0
    %283 = vrot.lane.b32.xlu0 %v152, 64
    %v284 = vpop.permute.xlu0 %283
    %v287 = vsel %vm168, %v255, 0
    %289 = vmatprep.subr.mxu0 0.0
    %290 = vmatpush1.msra.mxu0 %v284
    %291 = vmatprep.subr.mxu0 0.0
    %292 = vmatpush1.msra.mxu0 0.0
    %293 = vmatprep.subr.mxu0 0.0
    %294 = vmatpush1.msra.mxu0 0.0
    %295 = vmatprep.subr.mxu0 0.0
    %296 = vmatpush1.msra.mxu0 0.0
    %297 = vmatprep.subr.mxu0 0.0
    %298 = vmatpush1.msra.mxu0 0.0
    %299 = vmatprep.subr.mxu0 0.0
    %300 = vmatpush1.msra.mxu0 0.0
    %301 = vmatprep.subr.mxu0 0.0
    %302 = vmatpush1.msra.mxu0 0.0
    %303 = vmatprep.subr.mxu0 0.0
    %304 = vmatpush1.msra.mxu0 0.0
    %305 = vmatprep.subr.mxu0 0.0
    %306 = vmatpush1.msra.mxu0 0.0
    %307 = vmatprep.subr.mxu0 0.0
    %308 = vmatpush1.msra.mxu0 0.0
    %309 = vmatprep.subr.mxu0 0.0
    %310 = vmatpush1.msra.mxu0 0.0
    %311 = vmatprep.subr.mxu0 0.0
    %312 = vmatpush1.msra.mxu0 0.0
    %313 = vmatprep.subr.mxu0 0.0
    %314 = vmatpush1.msra.mxu0 0.0
    %315 = vmatprep.subr.mxu0 0.0
    %316 = vmatpush1.msra.mxu0 0.0
    %317 = vmatprep.subr.mxu0 0.0
    %318 = vmatpush1.msra.mxu0 0.0
    %319 = vmatprep.subr.mxu0 0.0
    %320 = vmatpush1.msra.mxu0 0.0
    %321 = vmatprep.subr.mxu0 0.0
    %322 = vmatpush1.msra.mxu0 0.0
    %323 = vmatprep.subr.mxu0 0.0
    %324 = vmatpush1.msra.mxu0 0.0
    %325 = vmatprep.subr.mxu0 0.0
    %326 = vmatpush1.msra.mxu0 0.0
    %327 = vmatprep.subr.mxu0 0.0
    %328 = vmatpush1.msra.mxu0 0.0
    %329 = vmatprep.subr.mxu0 0.0
    %330 = vmatpush1.msra.mxu0 0.0
    %331 = vmatprep.subr.mxu0 0.0
    %332 = vmatpush1.msra.mxu0 0.0
    %333 = vmatprep.subr.mxu0 0.0
    %334 = vmatpush1.msra.mxu0 0.0
    %335 = vmatprep.subr.mxu0 0.0
    %336 = vmatpush1.msra.mxu0 0.0
    %337 = vmatprep.subr.mxu0 0.0
    %338 = vmatpush1.msra.mxu0 0.0
    %339 = vmatprep.subr.mxu0 0.0
    %340 = vmatpush1.msra.mxu0 0.0
    %341 = vmatprep.subr.mxu0 0.0
    %342 = vmatpush1.msra.mxu0 0.0
    %343 = vmatprep.subr.mxu0 0.0
    %344 = vmatpush1.msra.mxu0 0.0
    %345 = vmatprep.subr.mxu0 0.0
    %346 = vmatpush1.msra.mxu0 0.0
    %347 = vmatprep.subr.mxu0 0.0
    %348 = vmatpush1.msra.mxu0 0.0
    %349 = vmatprep.subr.mxu0 0.0
    %350 = vmatpush1.msra.mxu0 0.0
    %351 = vmatprep.subr.mxu0 0.0
    %352 = vmatpush1.msra.mxu0 0.0
    %353 = vmatprep.mubr.f32.mxu0 0.0
    %354 = vmatmul.mubr.f32.gmra.mrb[0].mxu0 %v287
    %v355 = vpop.f32.mrb[0].mxu0
    %v356 = vadd.f32 0.0, %v355
    %v357 = vpop.f32.mrb[0].mxu0
    %358 = vdwg.mxu0
    %359 = vst.msk [vmem:[#allocation2] sm:$0xff] %vm168, %v356
    %360 = vrot.lane.b32.xlu0 %v152, 120
    %v361 = vpop.permute.xlu0 %360
    %362 = vrot.lane.b32.xlu0 %v152, 88
    %v363 = vpop.permute.xlu0 %362
    %v364 = vsel %vm168, %v361, 0
    %v366 = vsel %vm168, %v363, 0
    %368 = vmatprep.subr.mxu0 0.0
    %369 = vmatpush1.xpose.msra.mxu0 %v366
    %370 = vmatprep.subr.mxu0 0.0
    %371 = vmatpush1.xpose.msra.mxu0 0.0
    %372 = vmatprep.subr.mxu0 0.0
    %373 = vmatpush1.xpose.msra.mxu0 0.0
    %374 = vmatprep.subr.mxu0 0.0
    %375 = vmatpush1.xpose.msra.mxu0 0.0
    %376 = vmatprep.subr.mxu0 0.0
    %377 = vmatpush1.xpose.msra.mxu0 0.0
    %378 = vmatprep.subr.mxu0 0.0
    %379 = vmatpush1.xpose.msra.mxu0 0.0
    %380 = vmatprep.subr.mxu0 0.0
    %381 = vmatpush1.xpose.msra.mxu0 0.0
    %382 = vmatprep.subr.mxu0 0.0
    %383 = vmatpush1.xpose.msra.mxu0 0.0
    %384 = vmatprep.subr.mxu0 0.0
    %385 = vmatpush1.xpose.msra.mxu0 0.0
    %386 = vmatprep.subr.mxu0 0.0
    %387 = vmatpush1.xpose.msra.mxu0 0.0
    %388 = vmatprep.subr.mxu0 0.0
    %389 = vmatpush1.xpose.msra.mxu0 0.0
    %390 = vmatprep.subr.mxu0 0.0
    %391 = vmatpush1.xpose.msra.mxu0 0.0
    %392 = vmatprep.subr.mxu0 0.0
    %393 = vmatpush1.xpose.msra.mxu0 0.0
    %394 = vmatprep.subr.mxu0 0.0
    %395 = vmatpush1.xpose.msra.mxu0 0.0
    %396 = vmatprep.subr.mxu0 0.0
    %397 = vmatpush1.xpose.msra.mxu0 0.0
    %398 = vmatprep.subr.mxu0 0.0
    %399 = vmatpush1.xpose.msra.mxu0 0.0
    %400 = vmatprep.subr.mxu0 0.0
    %401 = vmatpush1.xpose.msra.mxu0 0.0
    %402 = vmatprep.subr.mxu0 0.0
    %403 = vmatpush1.xpose.msra.mxu0 0.0
    %404 = vmatprep.subr.mxu0 0.0
    %405 = vmatpush1.xpose.msra.mxu0 0.0
    %406 = vmatprep.subr.mxu0 0.0
    %407 = vmatpush1.xpose.msra.mxu0 0.0
    %408 = vmatprep.subr.mxu0 0.0
    %409 = vmatpush1.xpose.msra.mxu0 0.0
    %410 = vmatprep.subr.mxu0 0.0
    %411 = vmatpush1.xpose.msra.mxu0 0.0
    %412 = vmatprep.subr.mxu0 0.0
    %413 = vmatpush1.xpose.msra.mxu0 0.0
    %414 = vmatprep.subr.mxu0 0.0
    %415 = vmatpush1.xpose.msra.mxu0 0.0
    %416 = vmatprep.subr.mxu0 0.0
    %417 = vmatpush1.xpose.msra.mxu0 0.0
    %418 = vmatprep.subr.mxu0 0.0
    %419 = vmatpush1.xpose.msra.mxu0 0.0
    %420 = vmatprep.subr.mxu0 0.0
    %421 = vmatpush1.xpose.msra.mxu0 0.0
    %422 = vmatprep.subr.mxu0 0.0
    %423 = vmatpush1.xpose.msra.mxu0 0.0
    %424 = vmatprep.subr.mxu0 0.0
    %425 = vmatpush1.xpose.msra.mxu0 0.0
    %426 = vmatprep.subr.mxu0 0.0
    %427 = vmatpush1.xpose.msra.mxu0 0.0
    %428 = vmatprep.subr.mxu0 0.0
    %429 = vmatpush1.xpose.msra.mxu0 0.0
    %430 = vmatprep.subr.mxu0 0.0
    %431 = vmatpush1.xpose.msra.mxu0 0.0
    %432 = vmatprep.mubr.f32.mxu0 0.0
    %433 = vmatmul.mubr.f32.gmra.mrb[0].mxu0 %v364
    %v434 = vpop.f32.mrb[0].mxu0
    %v435 = vadd.f32 0.0, %v434
    %v436 = vpop.f32.mrb[0].mxu0
    %437 = vdwg.mxu0
    %v438 = vmul.f32 %v435, 0.35355338
    %v439 = vsel %vm164, %v438, -inf
    %v440 = vsel %vm168, %v439, -inf
    %441 = vmax.xlane.f32.xlu0 %v440
    %v442 = vpop.xlane.xlu0 %441
    %v443 = vsub.f32 %v439, %v442
    %v444 = vmul.f32 %v443, 1.442695
    %v445 = vpow.pop %v444
    %v446 = vsel %vm168, %v445, 0.0
    %447 = vadd.xlane.f32.xlu0 %v446
    %v448 = vpop.xlane.xlu0 %447
    %v449 = vrcp.pop %v448
    %v450 = vmul.f32 %v445, %v449
    %v451 = vsel %vm164, %v443, 0.0
    %v452 = vlog2.pop %v448
    %v453 = vmul.f32 %v452, 0.6931472
    %v454 = vsel %vm259, %v453, 0.0
    %455 = vadd.xlane.f32.xlu0 %v454
    %v456 = vpop.xlane.xlu0 %455
    %v457 = vrot.slane %v456, 4
    %v458 = vadd.f32 %v456, %v457
    %v459 = vrot.slane %v458, 2
    %v460 = vadd.f32 %v458, %v459
    %v461 = vrot.slane %v460, 1
    %v462 = vadd.f32 %v460, %v461
    %s463 = vtos %v462
    %v464 = vmul.f32 %v450, %v451
    %v465 = vsel %vm168, %v464, 0.0
    %466 = vadd.xlane.f32.xlu0 %v465
    %v467 = vpop.xlane.xlu0 %466
    %v468 = vrot.slane %v467, 4
    %v469 = vadd.f32 %v467, %v468
    %v470 = vrot.slane %v469, 2
    %v471 = vadd.f32 %v469, %v470
    %v472 = vrot.slane %v471, 1
    %v473 = vadd.f32 %v471, %v472
    %s474 = vtos %v473
    %s475 = ssub.f32 %s463, %s474
    %s476 = sadd.f32 %s282, %s475
    %477 = vrot.lane.b32.xlu0 %v152, 56
    %v478 = vpop.permute.xlu0 %477
    %v481 = vsel %vm168, %v450, 0
    %483 = vmatprep.subr.mxu0 0.0
    %484 = vmatpush1.msra.mxu0 %v478
    %485 = vmatprep.subr.mxu0 0.0
    %486 = vmatpush1.msra.mxu0 0.0
    %487 = vmatprep.subr.mxu0 0.0
    %488 = vmatpush1.msra.mxu0 0.0
    %489 = vmatprep.subr.mxu0 0.0
    %490 = vmatpush1.msra.mxu0 0.0
    %491 = vmatprep.subr.mxu0 0.0
    %492 = vmatpush1.msra.mxu0 0.0
    %493 = vmatprep.subr.mxu0 0.0
    %494 = vmatpush1.msra.mxu0 0.0
    %495 = vmatprep.subr.mxu0 0.0
    %496 = vmatpush1.msra.mxu0 0.0
    %497 = vmatprep.subr.mxu0 0.0
    %498 = vmatpush1.msra.mxu0 0.0
    %499 = vmatprep.subr.mxu0 0.0
    %500 = vmatpush1.msra.mxu0 0.0
    %501 = vmatprep.subr.mxu0 0.0
    %502 = vmatpush1.msra.mxu0 0.0
    %503 = vmatprep.subr.mxu0 0.0
    %504 = vmatpush1.msra.mxu0 0.0
    %505 = vmatprep.subr.mxu0 0.0
    %506 = vmatpush1.msra.mxu0 0.0
    %507 = vmatprep.subr.mxu0 0.0
    %508 = vmatpush1.msra.mxu0 0.0
    %509 = vmatprep.subr.mxu0 0.0
    %510 = vmatpush1.msra.mxu0 0.0
    %511 = vmatprep.subr.mxu0 0.0
    %512 = vmatpush1.msra.mxu0 0.0
    %513 = vmatprep.subr.mxu0 0.0
    %514 = vmatpush1.msra.mxu0 0.0
    %515 = vmatprep.subr.mxu0 0.0
    %516 = vmatpush1.msra.mxu0 0.0
    %517 = vmatprep.subr.mxu0 0.0
    %518 = vmatpush1.msra.mxu0 0.0
    %519 = vmatprep.subr.mxu0 0.0
    %520 = vmatpush1.msra.mxu0 0.0
    %521 = vmatprep.subr.mxu0 0.0
    %522 = vmatpush1.msra.mxu0 0.0
    %523 = vmatprep.subr.mxu0 0.0
    %524 = vmatpush1.msra.mxu0 0.0
    %525 = vmatprep.subr.mxu0 0.0
    %526 = vmatpush1.msra.mxu0 0.0
    %527 = vmatprep.subr.mxu0 0.0
    %528 = vmatpush1.msra.mxu0 0.0
    %529 = vmatprep.subr.mxu0 0.0
    %530 = vmatpush1.msra.mxu0 0.0
    %531 = vmatprep.subr.mxu0 0.0
    %532 = vmatpush1.msra.mxu0 0.0
    %533 = vmatprep.subr.mxu0 0.0
    %534 = vmatpush1.msra.mxu0 0.0
    %535 = vmatprep.subr.mxu0 0.0
    %536 = vmatpush1.msra.mxu0 0.0
    %537 = vmatprep.subr.mxu0 0.0
    %538 = vmatpush1.msra.mxu0 0.0
    %539 = vmatprep.subr.mxu0 0.0
    %540 = vmatpush1.msra.mxu0 0.0
    %541 = vmatprep.subr.mxu0 0.0
    %542 = vmatpush1.msra.mxu0 0.0
    %543 = vmatprep.subr.mxu0 0.0
    %544 = vmatpush1.msra.mxu0 0.0
    %545 = vmatprep.subr.mxu0 0.0
    %546 = vmatpush1.msra.mxu0 0.0
    %547 = vmatprep.mubr.f32.mxu0 0.0
    %548 = vmatmul.mubr.f32.gmra.mrb[0].mxu0 %v481
    %v549 = vpop.f32.mrb[0].mxu0
    %v550 = vadd.f32 0.0, %v549
    %v551 = vpop.f32.mrb[0].mxu0
    %552 = vdwg.mxu0
    %554 = vrot.lane.b32.xlu0 %v550, 8
    %v555 = vpop.permute.xlu0 %554
    %vm557 = vcmask 130112
    %558 = vst.msk [vmem:[#allocation2] sm:$0xff] %vm557, %v555
    %559 = vrot.lane.b32.xlu0 %v152, 112
    %v560 = vpop.permute.xlu0 %559
    %561 = vrot.lane.b32.xlu0 %v152, 80
    %v562 = vpop.permute.xlu0 %561
    %v563 = vsel %vm168, %v560, 0
    %v565 = vsel %vm168, %v562, 0
    %567 = vmatprep.subr.mxu0 0.0
    %568 = vmatpush1.xpose.msra.mxu0 %v565
    %569 = vmatprep.subr.mxu0 0.0
    %570 = vmatpush1.xpose.msra.mxu0 0.0
    %571 = vmatprep.subr.mxu0 0.0
    %572 = vmatpush1.xpose.msra.mxu0 0.0
    %573 = vmatprep.subr.mxu0 0.0
    %574 = vmatpush1.xpose.msra.mxu0 0.0
    %575 = vmatprep.subr.mxu0 0.0
    %576 = vmatpush1.xpose.msra.mxu0 0.0
    %577 = vmatprep.subr.mxu0 0.0
    %578 = vmatpush1.xpose.msra.mxu0 0.0
    %579 = vmatprep.subr.mxu0 0.0
    %580 = vmatpush1.xpose.msra.mxu0 0.0
    %581 = vmatprep.subr.mxu0 0.0
    %582 = vmatpush1.xpose.msra.mxu0 0.0
    %583 = vmatprep.subr.mxu0 0.0
    %584 = vmatpush1.xpose.msra.mxu0 0.0
    %585 = vmatprep.subr.mxu0 0.0
    %586 = vmatpush1.xpose.msra.mxu0 0.0
    %587 = vmatprep.subr.mxu0 0.0
    %588 = vmatpush1.xpose.msra.mxu0 0.0
    %589 = vmatprep.subr.mxu0 0.0
    %590 = vmatpush1.xpose.msra.mxu0 0.0
    %591 = vmatprep.subr.mxu0 0.0
    %592 = vmatpush1.xpose.msra.mxu0 0.0
    %593 = vmatprep.subr.mxu0 0.0
    %594 = vmatpush1.xpose.msra.mxu0 0.0
    %595 = vmatprep.subr.mxu0 0.0
    %596 = vmatpush1.xpose.msra.mxu0 0.0
    %597 = vmatprep.subr.mxu0 0.0
    %598 = vmatpush1.xpose.msra.mxu0 0.0
    %599 = vmatprep.subr.mxu0 0.0
    %600 = vmatpush1.xpose.msra.mxu0 0.0
    %601 = vmatprep.subr.mxu0 0.0
    %602 = vmatpush1.xpose.msra.mxu0 0.0
    %603 = vmatprep.subr.mxu0 0.0
    %604 = vmatpush1.xpose.msra.mxu0 0.0
    %605 = vmatprep.subr.mxu0 0.0
    %606 = vmatpush1.xpose.msra.mxu0 0.0
    %607 = vmatprep.subr.mxu0 0.0
    %608 = vmatpush1.xpose.msra.mxu0 0.0
    %609 = vmatprep.subr.mxu0 0.0
    %610 = vmatpush1.xpose.msra.mxu0 0.0
    %611 = vmatprep.subr.mxu0 0.0
    %612 = vmatpush1.xpose.msra.mxu0 0.0
    %613 = vmatprep.subr.mxu0 0.0
    %614 = vmatpush1.xpose.msra.mxu0 0.0
    %615 = vmatprep.subr.mxu0 0.0
    %616 = vmatpush1.xpose.msra.mxu0 0.0
    %617 = vmatprep.subr.mxu0 0.0
    %618 = vmatpush1.xpose.msra.mxu0 0.0
    %619 = vmatprep.subr.mxu0 0.0
    %620 = vmatpush1.xpose.msra.mxu0 0.0
    %621 = vmatprep.subr.mxu0 0.0
    %622 = vmatpush1.xpose.msra.mxu0 0.0
    %623 = vmatprep.subr.mxu0 0.0
    %624 = vmatpush1.xpose.msra.mxu0 0.0
    %625 = vmatprep.subr.mxu0 0.0
    %626 = vmatpush1.xpose.msra.mxu0 0.0
    %627 = vmatprep.subr.mxu0 0.0
    %628 = vmatpush1.xpose.msra.mxu0 0.0
    %629 = vmatprep.subr.mxu0 0.0
    %630 = vmatpush1.xpose.msra.mxu0 0.0
    %631 = vmatprep.mubr.f32.mxu0 0.0
    %632 = vmatmul.mubr.f32.gmra.mrb[0].mxu0 %v563
    %v633 = vpop.f32.mrb[0].mxu0
    %v634 = vadd.f32 0.0, %v633
    %v635 = vpop.f32.mrb[0].mxu0
    %636 = vdwg.mxu0
    %v637 = vmul.f32 %v634, 0.35355338
    %v638 = vsel %vm164, %v637, -inf
    %v639 = vsel %vm168, %v638, -inf
    %640 = vmax.xlane.f32.xlu0 %v639
    %v641 = vpop.xlane.xlu0 %640
    %v642 = vsub.f32 %v638, %v641
    %v643 = vmul.f32 %v642, 1.442695
    %v644 = vpow.pop %v643
    %v645 = vsel %vm168, %v644, 0.0
    %646 = vadd.xlane.f32.xlu0 %v645
    %v647 = vpop.xlane.xlu0 %646
    %v648 = vrcp.pop %v647
    %v649 = vmul.f32 %v644, %v648
    %v650 = vsel %vm164, %v642, 0.0
    %v651 = vlog2.pop %v647
    %v652 = vmul.f32 %v651, 0.6931472
    %v653 = vsel %vm259, %v652, 0.0
    %654 = vadd.xlane.f32.xlu0 %v653
    %v655 = vpop.xlane.xlu0 %654
    %v656 = vrot.slane %v655, 4
    %v657 = vadd.f32 %v655, %v656
    %v658 = vrot.slane %v657, 2
    %v659 = vadd.f32 %v657, %v658
    %v660 = vrot.slane %v659, 1
    %v661 = vadd.f32 %v659, %v660
    %s662 = vtos %v661
    %v663 = vmul.f32 %v649, %v650
    %v664 = vsel %vm168, %v663, 0.0
    %665 = vadd.xlane.f32.xlu0 %v664
    %v666 = vpop.xlane.xlu0 %665
    %v667 = vrot.slane %v666, 4
    %v668 = vadd.f32 %v666, %v667
    %v669 = vrot.slane %v668, 2
    %v670 = vadd.f32 %v668, %v669
    %v671 = vrot.slane %v670, 1
    %v672 = vadd.f32 %v670, %v671
    %s673 = vtos %v672
    %s674 = ssub.f32 %s662, %s673
    %s675 = sadd.f32 %s476, %s674
    %676 = vrot.lane.b32.xlu0 %v152, 48
    %v677 = vpop.permute.xlu0 %676
    %v680 = vsel %vm168, %v649, 0
    %682 = vmatprep.subr.mxu0 0.0
    %683 = vmatpush1.msra.mxu0 %v677
    %684 = vmatprep.subr.mxu0 0.0
    %685 = vmatpush1.msra.mxu0 0.0
    %686 = vmatprep.subr.mxu0 0.0
    %687 = vmatpush1.msra.mxu0 0.0
    %688 = vmatprep.subr.mxu0 0.0
    %689 = vmatpush1.msra.mxu0 0.0
    %690 = vmatprep.subr.mxu0 0.0
    %691 = vmatpush1.msra.mxu0 0.0
    %692 = vmatprep.subr.mxu0 0.0
    %693 = vmatpush1.msra.mxu0 0.0
    %694 = vmatprep.subr.mxu0 0.0
    %695 = vmatpush1.msra.mxu0 0.0
    %696 = vmatprep.subr.mxu0 0.0
    %697 = vmatpush1.msra.mxu0 0.0
    %698 = vmatprep.subr.mxu0 0.0
    %699 = vmatpush1.msra.mxu0 0.0
    %700 = vmatprep.subr.mxu0 0.0
    %701 = vmatpush1.msra.mxu0 0.0
    %702 = vmatprep.subr.mxu0 0.0
    %703 = vmatpush1.msra.mxu0 0.0
    %704 = vmatprep.subr.mxu0 0.0
    %705 = vmatpush1.msra.mxu0 0.0
    %706 = vmatprep.subr.mxu0 0.0
    %707 = vmatpush1.msra.mxu0 0.0
    %708 = vmatprep.subr.mxu0 0.0
    %709 = vmatpush1.msra.mxu0 0.0
    %710 = vmatprep.subr.mxu0 0.0
    %711 = vmatpush1.msra.mxu0 0.0
    %712 = vmatprep.subr.mxu0 0.0
    %713 = vmatpush1.msra.mxu0 0.0
    %714 = vmatprep.subr.mxu0 0.0
    %715 = vmatpush1.msra.mxu0 0.0
    %716 = vmatprep.subr.mxu0 0.0
    %717 = vmatpush1.msra.mxu0 0.0
    %718 = vmatprep.subr.mxu0 0.0
    %719 = vmatpush1.msra.mxu0 0.0
    %720 = vmatprep.subr.mxu0 0.0
    %721 = vmatpush1.msra.mxu0 0.0
    %722 = vmatprep.subr.mxu0 0.0
    %723 = vmatpush1.msra.mxu0 0.0
    %724 = vmatprep.subr.mxu0 0.0
    %725 = vmatpush1.msra.mxu0 0.0
    %726 = vmatprep.subr.mxu0 0.0
    %727 = vmatpush1.msra.mxu0 0.0
    %728 = vmatprep.subr.mxu0 0.0
    %729 = vmatpush1.msra.mxu0 0.0
    %730 = vmatprep.subr.mxu0 0.0
    %731 = vmatpush1.msra.mxu0 0.0
    %732 = vmatprep.subr.mxu0 0.0
    %733 = vmatpush1.msra.mxu0 0.0
    %734 = vmatprep.subr.mxu0 0.0
    %735 = vmatpush1.msra.mxu0 0.0
    %736 = vmatprep.subr.mxu0 0.0
    %737 = vmatpush1.msra.mxu0 0.0
    %738 = vmatprep.subr.mxu0 0.0
    %739 = vmatpush1.msra.mxu0 0.0
    %740 = vmatprep.subr.mxu0 0.0
    %741 = vmatpush1.msra.mxu0 0.0
    %742 = vmatprep.subr.mxu0 0.0
    %743 = vmatpush1.msra.mxu0 0.0
    %744 = vmatprep.subr.mxu0 0.0
    %745 = vmatpush1.msra.mxu0 0.0
    %746 = vmatprep.mubr.f32.mxu0 0.0
    %747 = vmatmul.mubr.f32.gmra.mrb[0].mxu0 %v680
    %v748 = vpop.f32.mrb[0].mxu0
    %v749 = vadd.f32 0.0, %v748
    %v750 = vpop.f32.mrb[0].mxu0
    %751 = vdwg.mxu0
    %753 = vrot.lane.b32.xlu0 %v749, 16
    %v754 = vpop.permute.xlu0 %753
    %vm756 = vcmask 195712
    %757 = vst.msk [vmem:[#allocation2] sm:$0xff] %vm756, %v754
    %758 = vrot.lane.b32.xlu0 %v152, 104
    %v759 = vpop.permute.xlu0 %758
    %760 = vrot.lane.b32.xlu0 %v152, 72
    %v761 = vpop.permute.xlu0 %760
    %v762 = vsel %vm168, %v759, 0
    %v764 = vsel %vm168, %v761, 0
    %766 = vmatprep.subr.mxu0 0.0
    %767 = vmatpush1.xpose.msra.mxu0 %v764
    %768 = vmatprep.subr.mxu0 0.0
    %769 = vmatpush1.xpose.msra.mxu0 0.0
    %770 = vmatprep.subr.mxu0 0.0
    %771 = vmatpush1.xpose.msra.mxu0 0.0
    %772 = vmatprep.subr.mxu0 0.0
    %773 = vmatpush1.xpose.msra.mxu0 0.0
    %774 = vmatprep.subr.mxu0 0.0
    %775 = vmatpush1.xpose.msra.mxu0 0.0
    %776 = vmatprep.subr.mxu0 0.0
    %777 = vmatpush1.xpose.msra.mxu0 0.0
    %778 = vmatprep.subr.mxu0 0.0
    %779 = vmatpush1.xpose.msra.mxu0 0.0
    %780 = vmatprep.subr.mxu0 0.0
    %781 = vmatpush1.xpose.msra.mxu0 0.0
    %782 = vmatprep.subr.mxu0 0.0
    %783 = vmatpush1.xpose.msra.mxu0 0.0
    %784 = vmatprep.subr.mxu0 0.0
    %785 = vmatpush1.xpose.msra.mxu0 0.0
    %786 = vmatprep.subr.mxu0 0.0
    %787 = vmatpush1.xpose.msra.mxu0 0.0
    %788 = vmatprep.subr.mxu0 0.0
    %789 = vmatpush1.xpose.msra.mxu0 0.0
    %790 = vmatprep.subr.mxu0 0.0
    %791 = vmatpush1.xpose.msra.mxu0 0.0
    %792 = vmatprep.subr.mxu0 0.0
    %793 = vmatpush1.xpose.msra.mxu0 0.0
    %794 = vmatprep.subr.mxu0 0.0
    %795 = vmatpush1.xpose.msra.mxu0 0.0
    %796 = vmatprep.subr.mxu0 0.0
    %797 = vmatpush1.xpose.msra.mxu0 0.0
    %798 = vmatprep.subr.mxu0 0.0
    %799 = vmatpush1.xpose.msra.mxu0 0.0
    %800 = vmatprep.subr.mxu0 0.0
    %801 = vmatpush1.xpose.msra.mxu0 0.0
    %802 = vmatprep.subr.mxu0 0.0
    %803 = vmatpush1.xpose.msra.mxu0 0.0
    %804 = vmatprep.subr.mxu0 0.0
    %805 = vmatpush1.xpose.msra.mxu0 0.0
    %806 = vmatprep.subr.mxu0 0.0
    %807 = vmatpush1.xpose.msra.mxu0 0.0
    %808 = vmatprep.subr.mxu0 0.0
    %809 = vmatpush1.xpose.msra.mxu0 0.0
    %810 = vmatprep.subr.mxu0 0.0
    %811 = vmatpush1.xpose.msra.mxu0 0.0
    %812 = vmatprep.subr.mxu0 0.0
    %813 = vmatpush1.xpose.msra.mxu0 0.0
    %814 = vmatprep.subr.mxu0 0.0
    %815 = vmatpush1.xpose.msra.mxu0 0.0
    %816 = vmatprep.subr.mxu0 0.0
    %817 = vmatpush1.xpose.msra.mxu0 0.0
    %818 = vmatprep.subr.mxu0 0.0
    %819 = vmatpush1.xpose.msra.mxu0 0.0
    %820 = vmatprep.subr.mxu0 0.0
    %821 = vmatpush1.xpose.msra.mxu0 0.0
    %822 = vmatprep.subr.mxu0 0.0
    %823 = vmatpush1.xpose.msra.mxu0 0.0
    %824 = vmatprep.subr.mxu0 0.0
    %825 = vmatpush1.xpose.msra.mxu0 0.0
    %826 = vmatprep.subr.mxu0 0.0
    %827 = vmatpush1.xpose.msra.mxu0 0.0
    %828 = vmatprep.subr.mxu0 0.0
    %829 = vmatpush1.xpose.msra.mxu0 0.0
    %830 = vmatprep.mubr.f32.mxu0 0.0
    %831 = vmatmul.mubr.f32.gmra.mrb[0].mxu0 %v762
    %v832 = vpop.f32.mrb[0].mxu0
    %v833 = vadd.f32 0.0, %v832
    %v834 = vpop.f32.mrb[0].mxu0
    %835 = vdwg.mxu0
    %v836 = vmul.f32 %v833, 0.35355338
    %v837 = vsel %vm164, %v836, -inf
    %v838 = vsel %vm168, %v837, -inf
    %839 = vmax.xlane.f32.xlu0 %v838
    %v840 = vpop.xlane.xlu0 %839
    %v841 = vsub.f32 %v837, %v840
    %v842 = vmul.f32 %v841, 1.442695
    %v843 = vpow.pop %v842
    %v844 = vsel %vm168, %v843, 0.0
    %845 = vadd.xlane.f32.xlu0 %v844
    %v846 = vpop.xlane.xlu0 %845
    %v847 = vrcp.pop %v846
    %v848 = vmul.f32 %v843, %v847
    %v849 = vsel %vm164, %v841, 0.0
    %v850 = vlog2.pop %v846
    %v851 = vmul.f32 %v850, 0.6931472
    %v852 = vsel %vm259, %v851, 0.0
    %853 = vadd.xlane.f32.xlu0 %v852
    %v854 = vpop.xlane.xlu0 %853
    %v855 = vrot.slane %v854, 4
    %v856 = vadd.f32 %v854, %v855
    %v857 = vrot.slane %v856, 2
    %v858 = vadd.f32 %v856, %v857
    %v859 = vrot.slane %v858, 1
    %v860 = vadd.f32 %v858, %v859
    %s861 = vtos %v860
    %v862 = vmul.f32 %v848, %v849
    %v863 = vsel %vm168, %v862, 0.0
    %864 = vadd.xlane.f32.xlu0 %v863
    %v865 = vpop.xlane.xlu0 %864
    %v866 = vrot.slane %v865, 4
    %v867 = vadd.f32 %v865, %v866
    %v868 = vrot.slane %v867, 2
    %v869 = vadd.f32 %v867, %v868
    %v870 = vrot.slane %v869, 1
    %v871 = vadd.f32 %v869, %v870
    %s872 = vtos %v871
    %s873 = ssub.f32 %s861, %s872
    %s874 = sadd.f32 %s675, %s873
    %875 = vrot.lane.b32.xlu0 %v152, 40
    %v876 = vpop.permute.xlu0 %875
    %v879 = vsel %vm168, %v848, 0
    %881 = vmatprep.subr.mxu0 0.0
    %882 = vmatpush1.msra.mxu0 %v876
    %883 = vmatprep.subr.mxu0 0.0
    %884 = vmatpush1.msra.mxu0 0.0
    %885 = vmatprep.subr.mxu0 0.0
    %886 = vmatpush1.msra.mxu0 0.0
    %887 = vmatprep.subr.mxu0 0.0
    %888 = vmatpush1.msra.mxu0 0.0
    %889 = vmatprep.subr.mxu0 0.0
    %890 = vmatpush1.msra.mxu0 0.0
    %891 = vmatprep.subr.mxu0 0.0
    %892 = vmatpush1.msra.mxu0 0.0
    %893 = vmatprep.subr.mxu0 0.0
    %894 = vmatpush1.msra.mxu0 0.0
    %895 = vmatprep.subr.mxu0 0.0
    %896 = vmatpush1.msra.mxu0 0.0
    %897 = vmatprep.subr.mxu0 0.0
    %898 = vmatpush1.msra.mxu0 0.0
    %899 = vmatprep.subr.mxu0 0.0
    %900 = vmatpush1.msra.mxu0 0.0
    %901 = vmatprep.subr.mxu0 0.0
    %902 = vmatpush1.msra.mxu0 0.0
    %903 = vmatprep.subr.mxu0 0.0
    %904 = vmatpush1.msra.mxu0 0.0
    %905 = vmatprep.subr.mxu0 0.0
    %906 = vmatpush1.msra.mxu0 0.0
    %907 = vmatprep.subr.mxu0 0.0
    %908 = vmatpush1.msra.mxu0 0.0
    %909 = vmatprep.subr.mxu0 0.0
    %910 = vmatpush1.msra.mxu0 0.0
    %911 = vmatprep.subr.mxu0 0.0
    %912 = vmatpush1.msra.mxu0 0.0
    %913 = vmatprep.subr.mxu0 0.0
    %914 = vmatpush1.msra.mxu0 0.0
    %915 = vmatprep.subr.mxu0 0.0
    %916 = vmatpush1.msra.mxu0 0.0
    %917 = vmatprep.subr.mxu0 0.0
    %918 = vmatpush1.msra.mxu0 0.0
    %919 = vmatprep.subr.mxu0 0.0
    %920 = vmatpush1.msra.mxu0 0.0
    %921 = vmatprep.subr.mxu0 0.0
    %922 = vmatpush1.msra.mxu0 0.0
    %923 = vmatprep.subr.mxu0 0.0
    %924 = vmatpush1.msra.mxu0 0.0
    %925 = vmatprep.subr.mxu0 0.0
    %926 = vmatpush1.msra.mxu0 0.0
    %927 = vmatprep.subr.mxu0 0.0
    %928 = vmatpush1.msra.mxu0 0.0
    %929 = vmatprep.subr.mxu0 0.0
    %930 = vmatpush1.msra.mxu0 0.0
    %931 = vmatprep.subr.mxu0 0.0
    %932 = vmatpush1.msra.mxu0 0.0
    %933 = vmatprep.subr.mxu0 0.0
    %934 = vmatpush1.msra.mxu0 0.0
    %935 = vmatprep.subr.mxu0 0.0
    %936 = vmatpush1.msra.mxu0 0.0
    %937 = vmatprep.subr.mxu0 0.0
    %938 = vmatpush1.msra.mxu0 0.0
    %939 = vmatprep.subr.mxu0 0.0
    %940 = vmatpush1.msra.mxu0 0.0
    %941 = vmatprep.subr.mxu0 0.0
    %942 = vmatpush1.msra.mxu0 0.0
    %943 = vmatprep.subr.mxu0 0.0
    %944 = vmatpush1.msra.mxu0 0.0
    %945 = vmatprep.mubr.f32.mxu0 0.0
    %946 = vmatmul.mubr.f32.gmra.mrb[0].mxu0 %v879
    %v947 = vpop.f32.mrb[0].mxu0
    %v948 = vadd.f32 0.0, %v947
    %v949 = vpop.f32.mrb[0].mxu0
    %950 = vdwg.mxu0
    %952 = vrot.lane.b32.xlu0 %v948, 24
    %v953 = vpop.permute.xlu0 %952
    %vm955 = vcmask 261312
    %956 = vst.msk [vmem:[#allocation2] sm:$0xff] %vm955, %v953
    %958 = vrot.lane.b32.xlu0 %v157, 96
    %v959 = vpop.permute.xlu0 %958
    %v960 = vsel %vm168, %v157, 0
    %v962 = vsel %vm168, %v959, 0
    %964 = vmatprep.subr.mxu0 0.0
    %965 = vmatpush1.xpose.msra.mxu0 %v962
    %966 = vmatprep.subr.mxu0 0.0
    %967 = vmatpush1.xpose.msra.mxu0 0.0
    %968 = vmatprep.subr.mxu0 0.0
    %969 = vmatpush1.xpose.msra.mxu0 0.0
    %970 = vmatprep.subr.mxu0 0.0
    %971 = vmatpush1.xpose.msra.mxu0 0.0
    %972 = vmatprep.subr.mxu0 0.0
    %973 = vmatpush1.xpose.msra.mxu0 0.0
    %974 = vmatprep.subr.mxu0 0.0
    %975 = vmatpush1.xpose.msra.mxu0 0.0
    %976 = vmatprep.subr.mxu0 0.0
    %977 = vmatpush1.xpose.msra.mxu0 0.0
    %978 = vmatprep.subr.mxu0 0.0
    %979 = vmatpush1.xpose.msra.mxu0 0.0
    %980 = vmatprep.subr.mxu0 0.0
    %981 = vmatpush1.xpose.msra.mxu0 0.0
    %982 = vmatprep.subr.mxu0 0.0
    %983 = vmatpush1.xpose.msra.mxu0 0.0
    %984 = vmatprep.subr.mxu0 0.0
    %985 = vmatpush1.xpose.msra.mxu0 0.0
    %986 = vmatprep.subr.mxu0 0.0
    %987 = vmatpush1.xpose.msra.mxu0 0.0
    %988 = vmatprep.subr.mxu0 0.0
    %989 = vmatpush1.xpose.msra.mxu0 0.0
    %990 = vmatprep.subr.mxu0 0.0
    %991 = vmatpush1.xpose.msra.mxu0 0.0
    %992 = vmatprep.subr.mxu0 0.0
    %993 = vmatpush1.xpose.msra.mxu0 0.0
    %994 = vmatprep.subr.mxu0 0.0
    %995 = vmatpush1.xpose.msra.mxu0 0.0
    %996 = vmatprep.subr.mxu0 0.0
    %997 = vmatpush1.xpose.msra.mxu0 0.0
    %998 = vmatprep.subr.mxu0 0.0
    %999 = vmatpush1.xpose.msra.mxu0 0.0
    %1000 = vmatprep.subr.mxu0 0.0
    %1001 = vmatpush1.xpose.msra.mxu0 0.0
    %1002 = vmatprep.subr.mxu0 0.0
    %1003 = vmatpush1.xpose.msra.mxu0 0.0
    %1004 = vmatprep.subr.mxu0 0.0
    %1005 = vmatpush1.xpose.msra.mxu0 0.0
    %1006 = vmatprep.subr.mxu0 0.0
    %1007 = vmatpush1.xpose.msra.mxu0 0.0
    %1008 = vmatprep.subr.mxu0 0.0
    %1009 = vmatpush1.xpose.msra.mxu0 0.0
    %1010 = vmatprep.subr.mxu0 0.0
    %1011 = vmatpush1.xpose.msra.mxu0 0.0
    %1012 = vmatprep.subr.mxu0 0.0
    %1013 = vmatpush1.xpose.msra.mxu0 0.0
    %1014 = vmatprep.subr.mxu0 0.0
    %1015 = vmatpush1.xpose.msra.mxu0 0.0
    %1016 = vmatprep.subr.mxu0 0.0
    %1017 = vmatpush1.xpose.msra.mxu0 0.0
    %1018 = vmatprep.subr.mxu0 0.0
    %1019 = vmatpush1.xpose.msra.mxu0 0.0
    %1020 = vmatprep.subr.mxu0 0.0
    %1021 = vmatpush1.xpose.msra.mxu0 0.0
    %1022 = vmatprep.subr.mxu0 0.0
    %1023 = vmatpush1.xpose.msra.mxu0 0.0
    %1024 = vmatprep.subr.mxu0 0.0
    %1025 = vmatpush1.xpose.msra.mxu0 0.0
    %1026 = vmatprep.subr.mxu0 0.0
    %1027 = vmatpush1.xpose.msra.mxu0 0.0
    %1028 = vmatprep.mubr.f32.mxu0 0.0
    %1029 = vmatmul.mubr.f32.gmra.mrb[0].mxu0 %v960
    %v1030 = vpop.f32.mrb[0].mxu0
    %v1031 = vadd.f32 0.0, %v1030
    %v1032 = vpop.f32.mrb[0].mxu0
    %1033 = vdwg.mxu0
    %v1034 = vmul.f32 %v1031, 0.35355338
    %v1035 = vsel %vm164, %v1034, -inf
    %v1036 = vsel %vm168, %v1035, -inf
    %1037 = vmax.xlane.f32.xlu0 %v1036
    %v1038 = vpop.xlane.xlu0 %1037
    %v1039 = vsub.f32 %v1035, %v1038
    %v1040 = vmul.f32 %v1039, 1.442695
    %v1041 = vpow.pop %v1040
    %v1042 = vsel %vm168, %v1041, 0.0
    %1043 = vadd.xlane.f32.xlu0 %v1042
    %v1044 = vpop.xlane.xlu0 %1043
    %v1045 = vrcp.pop %v1044
    %v1046 = vmul.f32 %v1041, %v1045
    %v1047 = vsel %vm164, %v1039, 0.0
    %v1048 = vlog2.pop %v1044
    %v1049 = vmul.f32 %v1048, 0.6931472
    %v1050 = vsel %vm259, %v1049, 0.0
    %1051 = vadd.xlane.f32.xlu0 %v1050
    %v1052 = vpop.xlane.xlu0 %1051
    %v1053 = vrot.slane %v1052, 4
    %v1054 = vadd.f32 %v1052, %v1053
    %v1055 = vrot.slane %v1054, 2
    %v1056 = vadd.f32 %v1054, %v1055
    %v1057 = vrot.slane %v1056, 1
    %v1058 = vadd.f32 %v1056, %v1057
    %s1059 = vtos %v1058
    %v1060 = vmul.f32 %v1046, %v1047
    %v1061 = vsel %vm168, %v1060, 0.0
    %1062 = vadd.xlane.f32.xlu0 %v1061
    %v1063 = vpop.xlane.xlu0 %1062
    %v1064 = vrot.slane %v1063, 4
    %v1065 = vadd.f32 %v1063, %v1064
    %v1066 = vrot.slane %v1065, 2
    %v1067 = vadd.f32 %v1065, %v1066
    %v1068 = vrot.slane %v1067, 1
    %v1069 = vadd.f32 %v1067, %v1068
    %s1070 = vtos %v1069
    %s1071 = ssub.f32 %s1059, %s1070
    %s1072 = sadd.f32 %s874, %s1071
    %1073 = vrot.lane.b32.xlu0 %v157, 64
    %v1074 = vpop.permute.xlu0 %1073
    %v1077 = vsel %vm168, %v1046, 0
    %1079 = vmatprep.subr.mxu0 0.0
    %1080 = vmatpush1.msra.mxu0 %v1074
    %1081 = vmatprep.subr.mxu0 0.0
    %1082 = vmatpush1.msra.mxu0 0.0
    %1083 = vmatprep.subr.mxu0 0.0
    %1084 = vmatpush1.msra.mxu0 0.0
    %1085 = vmatprep.subr.mxu0 0.0
    %1086 = vmatpush1.msra.mxu0 0.0
    %1087 = vmatprep.subr.mxu0 0.0
    %1088 = vmatpush1.msra.mxu0 0.0
    %1089 = vmatprep.subr.mxu0 0.0
    %1090 = vmatpush1.msra.mxu0 0.0
    %1091 = vmatprep.subr.mxu0 0.0
    %1092 = vmatpush1.msra.mxu0 0.0
    %1093 = vmatprep.subr.mxu0 0.0
    %1094 = vmatpush1.msra.mxu0 0.0
    %1095 = vmatprep.subr.mxu0 0.0
    %1096 = vmatpush1.msra.mxu0 0.0
    %1097 = vmatprep.subr.mxu0 0.0
    %1098 = vmatpush1.msra.mxu0 0.0
    %1099 = vmatprep.subr.mxu0 0.0
    %1100 = vmatpush1.msra.mxu0 0.0
    %1101 = vmatprep.subr.mxu0 0.0
    %1102 = vmatpush1.msra.mxu0 0.0
    %1103 = vmatprep.subr.mxu0 0.0
    %1104 = vmatpush1.msra.mxu0 0.0
    %1105 = vmatprep.subr.mxu0 0.0
    %1106 = vmatpush1.msra.mxu0 0.0
    %1107 = vmatprep.subr.mxu0 0.0
    %1108 = vmatpush1.msra.mxu0 0.0
    %1109 = vmatprep.subr.mxu0 0.0
    %1110 = vmatpush1.msra.mxu0 0.0
    %1111 = vmatprep.subr.mxu0 0.0
    %1112 = vmatpush1.msra.mxu0 0.0
    %1113 = vmatprep.subr.mxu0 0.0
    %1114 = vmatpush1.msra.mxu0 0.0
    %1115 = vmatprep.subr.mxu0 0.0
    %1116 = vmatpush1.msra.mxu0 0.0
    %1117 = vmatprep.subr.mxu0 0.0
    %1118 = vmatpush1.msra.mxu0 0.0
    %1119 = vmatprep.subr.mxu0 0.0
    %1120 = vmatpush1.msra.mxu0 0.0
    %1121 = vmatprep.subr.mxu0 0.0
    %1122 = vmatpush1.msra.mxu0 0.0
    %1123 = vmatprep.subr.mxu0 0.0
    %1124 = vmatpush1.msra.mxu0 0.0
    %1125 = vmatprep.subr.mxu0 0.0
    %1126 = vmatpush1.msra.mxu0 0.0
    %1127 = vmatprep.subr.mxu0 0.0
    %1128 = vmatpush1.msra.mxu0 0.0
    %1129 = vmatprep.subr.mxu0 0.0
    %1130 = vmatpush1.msra.mxu0 0.0
    %1131 = vmatprep.subr.mxu0 0.0
    %1132 = vmatpush1.msra.mxu0 0.0
    %1133 = vmatprep.subr.mxu0 0.0
    %1134 = vmatpush1.msra.mxu0 0.0
    %1135 = vmatprep.subr.mxu0 0.0
    %1136 = vmatpush1.msra.mxu0 0.0
    %1137 = vmatprep.subr.mxu0 0.0
    %1138 = vmatpush1.msra.mxu0 0.0
    %1139 = vmatprep.subr.mxu0 0.0
    %1140 = vmatpush1.msra.mxu0 0.0
    %1141 = vmatprep.subr.mxu0 0.0
    %1142 = vmatpush1.msra.mxu0 0.0
    %1143 = vmatprep.mubr.f32.mxu0 0.0
    %1144 = vmatmul.mubr.f32.gmra.mrb[0].mxu0 %v1077
    %v1145 = vpop.f32.mrb[0].mxu0
    %v1146 = vadd.f32 0.0, %v1145
    %v1147 = vpop.f32.mrb[0].mxu0
    %1148 = vdwg.mxu0
    %1149 = vst.msk [vmem:[#allocation2 + $0x8] sm:$0xff] %vm168, %v1146
    %1150 = vrot.lane.b32.xlu0 %v157, 120
    %v1151 = vpop.permute.xlu0 %1150
    %1152 = vrot.lane.b32.xlu0 %v157, 88
    %v1153 = vpop.permute.xlu0 %1152
    %v1154 = vsel %vm168, %v1151, 0
    %v1156 = vsel %vm168, %v1153, 0
    %1158 = vmatprep.subr.mxu0 0.0
    %1159 = vmatpush1.xpose.msra.mxu0 %v1156
    %1160 = vmatprep.subr.mxu0 0.0
    %1161 = vmatpush1.xpose.msra.mxu0 0.0
    %1162 = vmatprep.subr.mxu0 0.0
    %1163 = vmatpush1.xpose.msra.mxu0 0.0
    %1164 = vmatprep.subr.mxu0 0.0
    %1165 = vmatpush1.xpose.msra.mxu0 0.0
    %1166 = vmatprep.subr.mxu0 0.0
    %1167 = vmatpush1.xpose.msra.mxu0 0.0
    %1168 = vmatprep.subr.mxu0 0.0
    %1169 = vmatpush1.xpose.msra.mxu0 0.0
    %1170 = vmatprep.subr.mxu0 0.0
    %1171 = vmatpush1.xpose.msra.mxu0 0.0
    %1172 = vmatprep.subr.mxu0 0.0
    %1173 = vmatpush1.xpose.msra.mxu0 0.0
    %1174 = vmatprep.subr.mxu0 0.0
    %1175 = vmatpush1.xpose.msra.mxu0 0.0
    %1176 = vmatprep.subr.mxu0 0.0
    %1177 = vmatpush1.xpose.msra.mxu0 0.0
    %1178 = vmatprep.subr.mxu0 0.0
    %1179 = vmatpush1.xpose.msra.mxu0 0.0
    %1180 = vmatprep.subr.mxu0 0.0
    %1181 = vmatpush1.xpose.msra.mxu0 0.0
    %1182 = vmatprep.subr.mxu0 0.0
    %1183 = vmatpush1.xpose.msra.mxu0 0.0
    %1184 = vmatprep.subr.mxu0 0.0
    %1185 = vmatpush1.xpose.msra.mxu0 0.0
    %1186 = vmatprep.subr.mxu0 0.0
    %1187 = vmatpush1.xpose.msra.mxu0 0.0
    %1188 = vmatprep.subr.mxu0 0.0
    %1189 = vmatpush1.xpose.msra.mxu0 0.0
    %1190 = vmatprep.subr.mxu0 0.0
    %1191 = vmatpush1.xpose.msra.mxu0 0.0
    %1192 = vmatprep.subr.mxu0 0.0
    %1193 = vmatpush1.xpose.msra.mxu0 0.0
    %1194 = vmatprep.subr.mxu0 0.0
    %1195 = vmatpush1.xpose.msra.mxu0 0.0
    %1196 = vmatprep.subr.mxu0 0.0
    %1197 = vmatpush1.xpose.msra.mxu0 0.0
    %1198 = vmatprep.subr.mxu0 0.0
    %1199 = vmatpush1.xpose.msra.mxu0 0.0
    %1200 = vmatprep.subr.mxu0 0.0
    %1201 = vmatpush1.xpose.msra.mxu0 0.0
    %1202 = vmatprep.subr.mxu0 0.0
    %1203 = vmatpush1.xpose.msra.mxu0 0.0
    %1204 = vmatprep.subr.mxu0 0.0
    %1205 = vmatpush1.xpose.msra.mxu0 0.0
    %1206 = vmatprep.subr.mxu0 0.0
    %1207 = vmatpush1.xpose.msra.mxu0 0.0
    %1208 = vmatprep.subr.mxu0 0.0
    %1209 = vmatpush1.xpose.msra.mxu0 0.0
    %1210 = vmatprep.subr.mxu0 0.0
    %1211 = vmatpush1.xpose.msra.mxu0 0.0
    %1212 = vmatprep.subr.mxu0 0.0
    %1213 = vmatpush1.xpose.msra.mxu0 0.0
    %1214 = vmatprep.subr.mxu0 0.0
    %1215 = vmatpush1.xpose.msra.mxu0 0.0
    %1216 = vmatprep.subr.mxu0 0.0
    %1217 = vmatpush1.xpose.msra.mxu0 0.0
    %1218 = vmatprep.subr.mxu0 0.0
    %1219 = vmatpush1.xpose.msra.mxu0 0.0
    %1220 = vmatprep.subr.mxu0 0.0
    %1221 = vmatpush1.xpose.msra.mxu0 0.0
    %1222 = vmatprep.mubr.f32.mxu0 0.0
    %1223 = vmatmul.mubr.f32.gmra.mrb[0].mxu0 %v1154
    %v1224 = vpop.f32.mrb[0].mxu0
    %v1225 = vadd.f32 0.0, %v1224
    %v1226 = vpop.f32.mrb[0].mxu0
    %1227 = vdwg.mxu0
    %v1228 = vmul.f32 %v1225, 0.35355338
    %v1229 = vsel %vm164, %v1228, -inf
    %v1230 = vsel %vm168, %v1229, -inf
    %1231 = vmax.xlane.f32.xlu0 %v1230
    %v1232 = vpop.xlane.xlu0 %1231
    %v1233 = vsub.f32 %v1229, %v1232
    %v1234 = vmul.f32 %v1233, 1.442695
    %v1235 = vpow.pop %v1234
    %v1236 = vsel %vm168, %v1235, 0.0
    %1237 = vadd.xlane.f32.xlu0 %v1236
    %v1238 = vpop.xlane.xlu0 %1237
    %v1239 = vrcp.pop %v1238
    %v1240 = vmul.f32 %v1235, %v1239
    %v1241 = vsel %vm164, %v1233, 0.0
    %v1242 = vlog2.pop %v1238
    %v1243 = vmul.f32 %v1242, 0.6931472
    %v1244 = vsel %vm259, %v1243, 0.0
    %1245 = vadd.xlane.f32.xlu0 %v1244
    %v1246 = vpop.xlane.xlu0 %1245
    %v1247 = vrot.slane %v1246, 4
    %v1248 = vadd.f32 %v1246, %v1247
    %v1249 = vrot.slane %v1248, 2
    %v1250 = vadd.f32 %v1248, %v1249
    %v1251 = vrot.slane %v1250, 1
    %v1252 = vadd.f32 %v1250, %v1251
    %s1253 = vtos %v1252
    %v1254 = vmul.f32 %v1240, %v1241
    %v1255 = vsel %vm168, %v1254, 0.0
    %1256 = vadd.xlane.f32.xlu0 %v1255
    %v1257 = vpop.xlane.xlu0 %1256
    %v1258 = vrot.slane %v1257, 4
    %v1259 = vadd.f32 %v1257, %v1258
    %v1260 = vrot.slane %v1259, 2
    %v1261 = vadd.f32 %v1259, %v1260
    %v1262 = vrot.slane %v1261, 1
    %v1263 = vadd.f32 %v1261, %v1262
    %s1264 = vtos %v1263
    %s1265 = ssub.f32 %s1253, %s1264
    %s1266 = sadd.f32 %s1072, %s1265
    %1267 = vrot.lane.b32.xlu0 %v157, 56
    %v1268 = vpop.permute.xlu0 %1267
    %v1271 = vsel %vm168, %v1240, 0
    %1273 = vmatprep.subr.mxu0 0.0
    %1274 = vmatpush1.msra.mxu0 %v1268
    %1275 = vmatprep.subr.mxu0 0.0
    %1276 = vmatpush1.msra.mxu0 0.0
    %1277 = vmatprep.subr.mxu0 0.0
    %1278 = vmatpush1.msra.mxu0 0.0
    %1279 = vmatprep.subr.mxu0 0.0
    %1280 = vmatpush1.msra.mxu0 0.0
    %1281 = vmatprep.subr.mxu0 0.0
    %1282 = vmatpush1.msra.mxu0 0.0
    %1283 = vmatprep.subr.mxu0 0.0
    %1284 = vmatpush1.msra.mxu0 0.0
    %1285 = vmatprep.subr.mxu0 0.0
    %1286 = vmatpush1.msra.mxu0 0.0
    %1287 = vmatprep.subr.mxu0 0.0
    %1288 = vmatpush1.msra.mxu0 0.0
    %1289 = vmatprep.subr.mxu0 0.0
    %1290 = vmatpush1.msra.mxu0 0.0
    %1291 = vmatprep.subr.mxu0 0.0
    %1292 = vmatpush1.msra.mxu0 0.0
    %1293 = vmatprep.subr.mxu0 0.0
    %1294 = vmatpush1.msra.mxu0 0.0
    %1295 = vmatprep.subr.mxu0 0.0
    %1296 = vmatpush1.msra.mxu0 0.0
    %1297 = vmatprep.subr.mxu0 0.0
    %1298 = vmatpush1.msra.mxu0 0.0
    %1299 = vmatprep.subr.mxu0 0.0
    %1300 = vmatpush1.msra.mxu0 0.0
    %1301 = vmatprep.subr.mxu0 0.0
    %1302 = vmatpush1.msra.mxu0 0.0
    %1303 = vmatprep.subr.mxu0 0.0
    %1304 = vmatpush1.msra.mxu0 0.0
    %1305 = vmatprep.subr.mxu0 0.0
    %1306 = vmatpush1.msra.mxu0 0.0
    %1307 = vmatprep.subr.mxu0 0.0
    %1308 = vmatpush1.msra.mxu0 0.0
    %1309 = vmatprep.subr.mxu0 0.0
    %1310 = vmatpush1.msra.mxu0 0.0
    %1311 = vmatprep.subr.mxu0 0.0
    %1312 = vmatpush1.msra.mxu0 0.0
    %1313 = vmatprep.subr.mxu0 0.0
    %1314 = vmatpush1.msra.mxu0 0.0
    %1315 = vmatprep.subr.mxu0 0.0
    %1316 = vmatpush1.msra.mxu0 0.0
    %1317 = vmatprep.subr.mxu0 0.0
    %1318 = vmatpush1.msra.mxu0 0.0
    %1319 = vmatprep.subr.mxu0 0.0
    %1320 = vmatpush1.msra.mxu0 0.0
    %1321 = vmatprep.subr.mxu0 0.0
    %1322 = vmatpush1.msra.mxu0 0.0
    %1323 = vmatprep.subr.mxu0 0.0
    %1324 = vmatpush1.msra.mxu0 0.0
    %1325 = vmatprep.subr.mxu0 0.0
    %1326 = vmatpush1.msra.mxu0 0.0
    %1327 = vmatprep.subr.mxu0 0.0
    %1328 = vmatpush1.msra.mxu0 0.0
    %1329 = vmatprep.subr.mxu0 0.0
    %1330 = vmatpush1.msra.mxu0 0.0
    %1331 = vmatprep.subr.mxu0 0.0
    %1332 = vmatpush1.msra.mxu0 0.0
    %1333 = vmatprep.subr.mxu0 0.0
    %1334 = vmatpush1.msra.mxu0 0.0
    %1335 = vmatprep.subr.mxu0 0.0
    %1336 = vmatpush1.msra.mxu0 0.0
    %1337 = vmatprep.mubr.f32.mxu0 0.0
    %1338 = vmatmul.mubr.f32.gmra.mrb[0].mxu0 %v1271
    %v1339 = vpop.f32.mrb[0].mxu0
    %v1340 = vadd.f32 0.0, %v1339
    %v1341 = vpop.f32.mrb[0].mxu0
    %1342 = vdwg.mxu0
    %1344 = vrot.lane.b32.xlu0 %v1340, 8
    %v1345 = vpop.permute.xlu0 %1344
    %1347 = vst.msk [vmem:[#allocation2 + $0x8] sm:$0xff] %vm557, %v1345
    %1348 = vrot.lane.b32.xlu0 %v157, 112
    %v1349 = vpop.permute.xlu0 %1348
    %1350 = vrot.lane.b32.xlu0 %v157, 80
    %v1351 = vpop.permute.xlu0 %1350
    %v1352 = vsel %vm168, %v1349, 0
    %v1354 = vsel %vm168, %v1351, 0
    %1356 = vmatprep.subr.mxu0 0.0
    %1357 = vmatpush1.xpose.msra.mxu0 %v1354
    %1358 = vmatprep.subr.mxu0 0.0
    %1359 = vmatpush1.xpose.msra.mxu0 0.0
    %1360 = vmatprep.subr.mxu0 0.0
    %1361 = vmatpush1.xpose.msra.mxu0 0.0
    %1362 = vmatprep.subr.mxu0 0.0
    %1363 = vmatpush1.xpose.msra.mxu0 0.0
    %1364 = vmatprep.subr.mxu0 0.0
    %1365 = vmatpush1.xpose.msra.mxu0 0.0
    %1366 = vmatprep.subr.mxu0 0.0
    %1367 = vmatpush1.xpose.msra.mxu0 0.0
    %1368 = vmatprep.subr.mxu0 0.0
    %1369 = vmatpush1.xpose.msra.mxu0 0.0
    %1370 = vmatprep.subr.mxu0 0.0
    %1371 = vmatpush1.xpose.msra.mxu0 0.0
    %1372 = vmatprep.subr.mxu0 0.0
    %1373 = vmatpush1.xpose.msra.mxu0 0.0
    %1374 = vmatprep.subr.mxu0 0.0
    %1375 = vmatpush1.xpose.msra.mxu0 0.0
    %1376 = vmatprep.subr.mxu0 0.0
    %1377 = vmatpush1.xpose.msra.mxu0 0.0
    %1378 = vmatprep.subr.mxu0 0.0
    %1379 = vmatpush1.xpose.msra.mxu0 0.0
    %1380 = vmatprep.subr.mxu0 0.0
    %1381 = vmatpush1.xpose.msra.mxu0 0.0
    %1382 = vmatprep.subr.mxu0 0.0
    %1383 = vmatpush1.xpose.msra.mxu0 0.0
    %1384 = vmatprep.subr.mxu0 0.0
    %1385 = vmatpush1.xpose.msra.mxu0 0.0
    %1386 = vmatprep.subr.mxu0 0.0
    %1387 = vmatpush1.xpose.msra.mxu0 0.0
    %1388 = vmatprep.subr.mxu0 0.0
    %1389 = vmatpush1.xpose.msra.mxu0 0.0
    %1390 = vmatprep.subr.mxu0 0.0
    %1391 = vmatpush1.xpose.msra.mxu0 0.0
    %1392 = vmatprep.subr.mxu0 0.0
    %1393 = vmatpush1.xpose.msra.mxu0 0.0
    %1394 = vmatprep.subr.mxu0 0.0
    %1395 = vmatpush1.xpose.msra.mxu0 0.0
    %1396 = vmatprep.subr.mxu0 0.0
    %1397 = vmatpush1.xpose.msra.mxu0 0.0
    %1398 = vmatprep.subr.mxu0 0.0
    %1399 = vmatpush1.xpose.msra.mxu0 0.0
    %1400 = vmatprep.subr.mxu0 0.0
    %1401 = vmatpush1.xpose.msra.mxu0 0.0
    %1402 = vmatprep.subr.mxu0 0.0
    %1403 = vmatpush1.xpose.msra.mxu0 0.0
    %1404 = vmatprep.subr.mxu0 0.0
    %1405 = vmatpush1.xpose.msra.mxu0 0.0
    %1406 = vmatprep.subr.mxu0 0.0
    %1407 = vmatpush1.xpose.msra.mxu0 0.0
    %1408 = vmatprep.subr.mxu0 0.0
    %1409 = vmatpush1.xpose.msra.mxu0 0.0
    %1410 = vmatprep.subr.mxu0 0.0
    %1411 = vmatpush1.xpose.msra.mxu0 0.0
    %1412 = vmatprep.subr.mxu0 0.0
    %1413 = vmatpush1.xpose.msra.mxu0 0.0
    %1414 = vmatprep.subr.mxu0 0.0
    %1415 = vmatpush1.xpose.msra.mxu0 0.0
    %1416 = vmatprep.subr.mxu0 0.0
    %1417 = vmatpush1.xpose.msra.mxu0 0.0
    %1418 = vmatprep.subr.mxu0 0.0
    %1419 = vmatpush1.xpose.msra.mxu0 0.0
    %1420 = vmatprep.mubr.f32.mxu0 0.0
    %1421 = vmatmul.mubr.f32.gmra.mrb[0].mxu0 %v1352
    %v1422 = vpop.f32.mrb[0].mxu0
    %v1423 = vadd.f32 0.0, %v1422
    %v1424 = vpop.f32.mrb[0].mxu0
    %1425 = vdwg.mxu0
    %v1426 = vmul.f32 %v1423, 0.35355338
    %v1427 = vsel %vm164, %v1426, -inf
    %v1428 = vsel %vm168, %v1427, -inf
    %1429 = vmax.xlane.f32.xlu0 %v1428
    %v1430 = vpop.xlane.xlu0 %1429
    %v1431 = vsub.f32 %v1427, %v1430
    %v1432 = vmul.f32 %v1431, 1.442695
    %v1433 = vpow.pop %v1432
    %v1434 = vsel %vm168, %v1433, 0.0
    %1435 = vadd.xlane.f32.xlu0 %v1434
    %v1436 = vpop.xlane.xlu0 %1435
    %v1437 = vrcp.pop %v1436
    %v1438 = vmul.f32 %v1433, %v1437
    %v1439 = vsel %vm164, %v1431, 0.0
    %v1440 = vlog2.pop %v1436
    %v1441 = vmul.f32 %v1440, 0.6931472
    %v1442 = vsel %vm259, %v1441, 0.0
    %1443 = vadd.xlane.f32.xlu0 %v1442
    %v1444 = vpop.xlane.xlu0 %1443
    %v1445 = vrot.slane %v1444, 4
    %v1446 = vadd.f32 %v1444, %v1445
    %v1447 = vrot.slane %v1446, 2
    %v1448 = vadd.f32 %v1446, %v1447
    %v1449 = vrot.slane %v1448, 1
    %v1450 = vadd.f32 %v1448, %v1449
    %s1451 = vtos %v1450
    %v1452 = vmul.f32 %v1438, %v1439
    %v1453 = vsel %vm168, %v1452, 0.0
    %1454 = vadd.xlane.f32.xlu0 %v1453
    %v1455 = vpop.xlane.xlu0 %1454
    %v1456 = vrot.slane %v1455, 4
    %v1457 = vadd.f32 %v1455, %v1456
    %v1458 = vrot.slane %v1457, 2
    %v1459 = vadd.f32 %v1457, %v1458
    %v1460 = vrot.slane %v1459, 1
    %v1461 = vadd.f32 %v1459, %v1460
    %s1462 = vtos %v1461
    %s1463 = ssub.f32 %s1451, %s1462
    %s1464 = sadd.f32 %s1266, %s1463
    %1465 = vrot.lane.b32.xlu0 %v157, 48
    %v1466 = vpop.permute.xlu0 %1465
    %v1469 = vsel %vm168, %v1438, 0
    %1471 = vmatprep.subr.mxu0 0.0
    %1472 = vmatpush1.msra.mxu0 %v1466
    %1473 = vmatprep.subr.mxu0 0.0
    %1474 = vmatpush1.msra.mxu0 0.0
    %1475 = vmatprep.subr.mxu0 0.0
    %1476 = vmatpush1.msra.mxu0 0.0
    %1477 = vmatprep.subr.mxu0 0.0
    %1478 = vmatpush1.msra.mxu0 0.0
    %1479 = vmatprep.subr.mxu0 0.0
    %1480 = vmatpush1.msra.mxu0 0.0
    %1481 = vmatprep.subr.mxu0 0.0
    %1482 = vmatpush1.msra.mxu0 0.0
    %1483 = vmatprep.subr.mxu0 0.0
    %1484 = vmatpush1.msra.mxu0 0.0
    %1485 = vmatprep.subr.mxu0 0.0
    %1486 = vmatpush1.msra.mxu0 0.0
    %1487 = vmatprep.subr.mxu0 0.0
    %1488 = vmatpush1.msra.mxu0 0.0
    %1489 = vmatprep.subr.mxu0 0.0
    %1490 = vmatpush1.msra.mxu0 0.0
    %1491 = vmatprep.subr.mxu0 0.0
    %1492 = vmatpush1.msra.mxu0 0.0
    %1493 = vmatprep.subr.mxu0 0.0
    %1494 = vmatpush1.msra.mxu0 0.0
    %1495 = vmatprep.subr.mxu0 0.0
    %1496 = vmatpush1.msra.mxu0 0.0
    %1497 = vmatprep.subr.mxu0 0.0
    %1498 = vmatpush1.msra.mxu0 0.0
    %1499 = vmatprep.subr.mxu0 0.0
    %1500 = vmatpush1.msra.mxu0 0.0
    %1501 = vmatprep.subr.mxu0 0.0
    %1502 = vmatpush1.msra.mxu0 0.0
    %1503 = vmatprep.subr.mxu0 0.0
    %1504 = vmatpush1.msra.mxu0 0.0
    %1505 = vmatprep.subr.mxu0 0.0
    %1506 = vmatpush1.msra.mxu0 0.0
    %1507 = vmatprep.subr.mxu0 0.0
    %1508 = vmatpush1.msra.mxu0 0.0
    %1509 = vmatprep.subr.mxu0 0.0
    %1510 = vmatpush1.msra.mxu0 0.0
    %1511 = vmatprep.subr.mxu0 0.0
    %1512 = vmatpush1.msra.mxu0 0.0
    %1513 = vmatprep.subr.mxu0 0.0
    %1514 = vmatpush1.msra.mxu0 0.0
    %1515 = vmatprep.subr.mxu0 0.0
    %1516 = vmatpush1.msra.mxu0 0.0
    %1517 = vmatprep.subr.mxu0 0.0
    %1518 = vmatpush1.msra.mxu0 0.0
    %1519 = vmatprep.subr.mxu0 0.0
    %1520 = vmatpush1.msra.mxu0 0.0
    %1521 = vmatprep.subr.mxu0 0.0
    %1522 = vmatpush1.msra.mxu0 0.0
    %1523 = vmatprep.subr.mxu0 0.0
    %1524 = vmatpush1.msra.mxu0 0.0
    %1525 = vmatprep.subr.mxu0 0.0
    %1526 = vmatpush1.msra.mxu0 0.0
    %1527 = vmatprep.subr.mxu0 0.0
    %1528 = vmatpush1.msra.mxu0 0.0
    %1529 = vmatprep.subr.mxu0 0.0
    %1530 = vmatpush1.msra.mxu0 0.0
    %1531 = vmatprep.subr.mxu0 0.0
    %1532 = vmatpush1.msra.mxu0 0.0
    %1533 = vmatprep.subr.mxu0 0.0
    %1534 = vmatpush1.msra.mxu0 0.0
    %1535 = vmatprep.mubr.f32.mxu0 0.0
    %1536 = vmatmul.mubr.f32.gmra.mrb[0].mxu0 %v1469
    %v1537 = vpop.f32.mrb[0].mxu0
    %v1538 = vadd.f32 0.0, %v1537
    %v1539 = vpop.f32.mrb[0].mxu0
    %1540 = vdwg.mxu0
    %1542 = vrot.lane.b32.xlu0 %v1538, 16
    %v1543 = vpop.permute.xlu0 %1542
    %1545 = vst.msk [vmem:[#allocation2 + $0x8] sm:$0xff] %vm756, %v1543
    %1546 = vrot.lane.b32.xlu0 %v157, 104
    %v1547 = vpop.permute.xlu0 %1546
    %1548 = vrot.lane.b32.xlu0 %v157, 72
    %v1549 = vpop.permute.xlu0 %1548
    %v1550 = vsel %vm168, %v1547, 0
    %v1552 = vsel %vm168, %v1549, 0
    %1554 = vmatprep.subr.mxu0 0.0
    %1555 = vmatpush1.xpose.msra.mxu0 %v1552
    %1556 = vmatprep.subr.mxu0 0.0
    %1557 = vmatpush1.xpose.msra.mxu0 0.0
    %1558 = vmatprep.subr.mxu0 0.0
    %1559 = vmatpush1.xpose.msra.mxu0 0.0
    %1560 = vmatprep.subr.mxu0 0.0
    %1561 = vmatpush1.xpose.msra.mxu0 0.0
    %1562 = vmatprep.subr.mxu0 0.0
    %1563 = vmatpush1.xpose.msra.mxu0 0.0
    %1564 = vmatprep.subr.mxu0 0.0
    %1565 = vmatpush1.xpose.msra.mxu0 0.0
    %1566 = vmatprep.subr.mxu0 0.0
    %1567 = vmatpush1.xpose.msra.mxu0 0.0
    %1568 = vmatprep.subr.mxu0 0.0
    %1569 = vmatpush1.xpose.msra.mxu0 0.0
    %1570 = vmatprep.subr.mxu0 0.0
    %1571 = vmatpush1.xpose.msra.mxu0 0.0
    %1572 = vmatprep.subr.mxu0 0.0
    %1573 = vmatpush1.xpose.msra.mxu0 0.0
    %1574 = vmatprep.subr.mxu0 0.0
    %1575 = vmatpush1.xpose.msra.mxu0 0.0
    %1576 = vmatprep.subr.mxu0 0.0
    %1577 = vmatpush1.xpose.msra.mxu0 0.0
    %1578 = vmatprep.subr.mxu0 0.0
    %1579 = vmatpush1.xpose.msra.mxu0 0.0
    %1580 = vmatprep.subr.mxu0 0.0
    %1581 = vmatpush1.xpose.msra.mxu0 0.0
    %1582 = vmatprep.subr.mxu0 0.0
    %1583 = vmatpush1.xpose.msra.mxu0 0.0
    %1584 = vmatprep.subr.mxu0 0.0
    %1585 = vmatpush1.xpose.msra.mxu0 0.0
    %1586 = vmatprep.subr.mxu0 0.0
    %1587 = vmatpush1.xpose.msra.mxu0 0.0
    %1588 = vmatprep.subr.mxu0 0.0
    %1589 = vmatpush1.xpose.msra.mxu0 0.0
    %1590 = vmatprep.subr.mxu0 0.0
    %1591 = vmatpush1.xpose.msra.mxu0 0.0
    %1592 = vmatprep.subr.mxu0 0.0
    %1593 = vmatpush1.xpose.msra.mxu0 0.0
    %1594 = vmatprep.subr.mxu0 0.0
    %1595 = vmatpush1.xpose.msra.mxu0 0.0
    %1596 = vmatprep.subr.mxu0 0.0
    %1597 = vmatpush1.xpose.msra.mxu0 0.0
    %1598 = vmatprep.subr.mxu0 0.0
    %1599 = vmatpush1.xpose.msra.mxu0 0.0
    %1600 = vmatprep.subr.mxu0 0.0
    %1601 = vmatpush1.xpose.msra.mxu0 0.0
    %1602 = vmatprep.subr.mxu0 0.0
    %1603 = vmatpush1.xpose.msra.mxu0 0.0
    %1604 = vmatprep.subr.mxu0 0.0
    %1605 = vmatpush1.xpose.msra.mxu0 0.0
    %1606 = vmatprep.subr.mxu0 0.0
    %1607 = vmatpush1.xpose.msra.mxu0 0.0
    %1608 = vmatprep.subr.mxu0 0.0
    %1609 = vmatpush1.xpose.msra.mxu0 0.0
    %1610 = vmatprep.subr.mxu0 0.0
    %1611 = vmatpush1.xpose.msra.mxu0 0.0
    %1612 = vmatprep.subr.mxu0 0.0
    %1613 = vmatpush1.xpose.msra.mxu0 0.0
    %1614 = vmatprep.subr.mxu0 0.0
    %1615 = vmatpush1.xpose.msra.mxu0 0.0
    %1616 = vmatprep.subr.mxu0 0.0
    %1617 = vmatpush1.xpose.msra.mxu0 0.0
    %1618 = vmatprep.mubr.f32.mxu0 0.0
    %1619 = vmatmul.mubr.f32.gmra.mrb[0].mxu0 %v1550
    %v1620 = vpop.f32.mrb[0].mxu0
    %v1621 = vadd.f32 0.0, %v1620
    %v1622 = vpop.f32.mrb[0].mxu0
    %1623 = vdwg.mxu0
    %v1624 = vmul.f32 %v1621, 0.35355338
    %v1625 = vsel %vm164, %v1624, -inf
    %v1626 = vsel %vm168, %v1625, -inf
    %1627 = vmax.xlane.f32.xlu0 %v1626
    %v1628 = vpop.xlane.xlu0 %1627
    %v1629 = vsub.f32 %v1625, %v1628
    %v1630 = vmul.f32 %v1629, 1.442695
    %v1631 = vpow.pop %v1630
    %v1632 = vsel %vm168, %v1631, 0.0
    %1633 = vadd.xlane.f32.xlu0 %v1632
    %v1634 = vpop.xlane.xlu0 %1633
    %v1635 = vrcp.pop %v1634
    %v1636 = vmul.f32 %v1631, %v1635
    %v1637 = vsel %vm164, %v1629, 0.0
    %v1638 = vlog2.pop %v1634
    %v1639 = vmul.f32 %v1638, 0.6931472
    %v1640 = vsel %vm259, %v1639, 0.0
    %1641 = vadd.xlane.f32.xlu0 %v1640
    %v1642 = vpop.xlane.xlu0 %1641
    %v1643 = vrot.slane %v1642, 4
    %v1644 = vadd.f32 %v1642, %v1643
    %v1645 = vrot.slane %v1644, 2
    %v1646 = vadd.f32 %v1644, %v1645
    %v1647 = vrot.slane %v1646, 1
    %v1648 = vadd.f32 %v1646, %v1647
    %s1649 = vtos %v1648
    %v1650 = vmul.f32 %v1636, %v1637
    %v1651 = vsel %vm168, %v1650, 0.0
    %1652 = vadd.xlane.f32.xlu0 %v1651
    %v1653 = vpop.xlane.xlu0 %1652
    %v1654 = vrot.slane %v1653, 4
    %v1655 = vadd.f32 %v1653, %v1654
    %v1656 = vrot.slane %v1655, 2
    %v1657 = vadd.f32 %v1655, %v1656
    %v1658 = vrot.slane %v1657, 1
    %v1659 = vadd.f32 %v1657, %v1658
    %s1660 = vtos %v1659
    %s1661 = ssub.f32 %s1649, %s1660
    %s1662 = sadd.f32 %s1464, %s1661
    %1663 = vrot.lane.b32.xlu0 %v157, 40
    %v1664 = vpop.permute.xlu0 %1663
    %v1667 = vsel %vm168, %v1636, 0
    %1669 = vmatprep.subr.mxu0 0.0
    %1670 = vmatpush1.msra.mxu0 %v1664
    %1671 = vmatprep.subr.mxu0 0.0
    %1672 = vmatpush1.msra.mxu0 0.0
    %1673 = vmatprep.subr.mxu0 0.0
    %1674 = vmatpush1.msra.mxu0 0.0
    %1675 = vmatprep.subr.mxu0 0.0
    %1676 = vmatpush1.msra.mxu0 0.0
    %1677 = vmatprep.subr.mxu0 0.0
    %1678 = vmatpush1.msra.mxu0 0.0
    %1679 = vmatprep.subr.mxu0 0.0
    %1680 = vmatpush1.msra.mxu0 0.0
    %1681 = vmatprep.subr.mxu0 0.0
    %1682 = vmatpush1.msra.mxu0 0.0
    %1683 = vmatprep.subr.mxu0 0.0
    %1684 = vmatpush1.msra.mxu0 0.0
    %1685 = vmatprep.subr.mxu0 0.0
    %1686 = vmatpush1.msra.mxu0 0.0
    %1687 = vmatprep.subr.mxu0 0.0
    %1688 = vmatpush1.msra.mxu0 0.0
    %1689 = vmatprep.subr.mxu0 0.0
    %1690 = vmatpush1.msra.mxu0 0.0
    %1691 = vmatprep.subr.mxu0 0.0
    %1692 = vmatpush1.msra.mxu0 0.0
    %1693 = vmatprep.subr.mxu0 0.0
    %1694 = vmatpush1.msra.mxu0 0.0
    %1695 = vmatprep.subr.mxu0 0.0
    %1696 = vmatpush1.msra.mxu0 0.0
    %1697 = vmatprep.subr.mxu0 0.0
    %1698 = vmatpush1.msra.mxu0 0.0
    %1699 = vmatprep.subr.mxu0 0.0
    %1700 = vmatpush1.msra.mxu0 0.0
    %1701 = vmatprep.subr.mxu0 0.0
    %1702 = vmatpush1.msra.mxu0 0.0
    %1703 = vmatprep.subr.mxu0 0.0
    %1704 = vmatpush1.msra.mxu0 0.0
    %1705 = vmatprep.subr.mxu0 0.0
    %1706 = vmatpush1.msra.mxu0 0.0
    %1707 = vmatprep.subr.mxu0 0.0
    %1708 = vmatpush1.msra.mxu0 0.0
    %1709 = vmatprep.subr.mxu0 0.0
    %1710 = vmatpush1.msra.mxu0 0.0
    %1711 = vmatprep.subr.mxu0 0.0
    %1712 = vmatpush1.msra.mxu0 0.0
    %1713 = vmatprep.subr.mxu0 0.0
    %1714 = vmatpush1.msra.mxu0 0.0
    %1715 = vmatprep.subr.mxu0 0.0
    %1716 = vmatpush1.msra.mxu0 0.0
    %1717 = vmatprep.subr.mxu0 0.0
    %1718 = vmatpush1.msra.mxu0 0.0
    %1719 = vmatprep.subr.mxu0 0.0
    %1720 = vmatpush1.msra.mxu0 0.0
    %1721 = vmatprep.subr.mxu0 0.0
    %1722 = vmatpush1.msra.mxu0 0.0
    %1723 = vmatprep.subr.mxu0 0.0
    %1724 = vmatpush1.msra.mxu0 0.0
    %1725 = vmatprep.subr.mxu0 0.0
    %1726 = vmatpush1.msra.mxu0 0.0
    %1727 = vmatprep.subr.mxu0 0.0
    %1728 = vmatpush1.msra.mxu0 0.0
    %1729 = vmatprep.subr.mxu0 0.0
    %1730 = vmatpush1.msra.mxu0 0.0
    %1731 = vmatprep.subr.mxu0 0.0
    %1732 = vmatpush1.msra.mxu0 0.0
    %1733 = vmatprep.mubr.f32.mxu0 0.0
    %1734 = vmatmul.mubr.f32.gmra.mrb[0].mxu0 %v1667
    %v1735 = vpop.f32.mrb[0].mxu0
    %v1736 = vadd.f32 0.0, %v1735
    %v1737 = vpop.f32.mrb[0].mxu0
    %1738 = vdwg.mxu0
    %1740 = vrot.lane.b32.xlu0 %v1736, 24
    %v1741 = vpop.permute.xlu0 %1740
    %1743 = vst.msk [vmem:[#allocation2 + $0x8] sm:$0xff] %vm955, %v1741
    %v1744 = vld [vmem:[#allocation2] sm:$0xff]
    %v1745 = vld [vmem:[#allocation2 + $0x8] sm:$0xff]
    %v1746 = vld [vmem:[#allocation8] sm:$0xff]
    %v1747 = vld [vmem:[#allocation8 + $0x8] sm:$0xff]
    %v1748 = vld [vmem:[#allocation8 + $0x10] sm:$0xff]
    %v1749 = vld [vmem:[#allocation8 + $0x18] sm:$0xff]
    %v1750 = vld [vmem:[%s4] sm:$0x1]
    %v1752 = vlaneseq
    %v1753 = vshrl.u32 %v1752, 7
    %v1754 = vsub.s32 0, %v1753
    %v1755 = vrot.slane %v1750, %v1754
    %v1758 = vsel %vm78, %v1744, 0
    %v1761 = vsel %vm78, %v1745, 0
    %1763 = vmatprep.subr.mxu0 0.0
    %1764 = vmatpush1.msra.mxu0 %v1746
    %1765 = vmatprep.subr.mxu0 0.0
    %1766 = vmatpush1.msra.mxu0 %v1747
    %1767 = vmatprep.subr.mxu0 0.0
    %1768 = vmatpush1.msra.mxu0 %v1748
    %1769 = vmatprep.subr.mxu0 0.0
    %1770 = vmatpush1.msra.mxu0 %v1749
    %1771 = vmatprep.subr.mxu0 0.0
    %1772 = vmatpush1.msra.mxu0 0.0
    %1773 = vmatprep.subr.mxu0 0.0
    %1774 = vmatpush1.msra.mxu0 0.0
    %1775 = vmatprep.subr.mxu0 0.0
    %1776 = vmatpush1.msra.mxu0 0.0
    %1777 = vmatprep.subr.mxu0 0.0
    %1778 = vmatpush1.msra.mxu0 0.0
    %1779 = vmatprep.subr.mxu0 0.0
    %1780 = vmatpush1.msra.mxu0 0.0
    %1781 = vmatprep.subr.mxu0 0.0
    %1782 = vmatpush1.msra.mxu0 0.0
    %1783 = vmatprep.subr.mxu0 0.0
    %1784 = vmatpush1.msra.mxu0 0.0
    %1785 = vmatprep.subr.mxu0 0.0
    %1786 = vmatpush1.msra.mxu0 0.0
    %1787 = vmatprep.subr.mxu0 0.0
    %1788 = vmatpush1.msra.mxu0 0.0
    %1789 = vmatprep.subr.mxu0 0.0
    %1790 = vmatpush1.msra.mxu0 0.0
    %1791 = vmatprep.subr.mxu0 0.0
    %1792 = vmatpush1.msra.mxu0 0.0
    %1793 = vmatprep.subr.mxu0 0.0
    %1794 = vmatpush1.msra.mxu0 0.0
    %1795 = vmatprep.subr.mxu0 0.0
    %1796 = vmatpush1.msra.mxu0 0.0
    %1797 = vmatprep.subr.mxu0 0.0
    %1798 = vmatpush1.msra.mxu0 0.0
    %1799 = vmatprep.subr.mxu0 0.0
    %1800 = vmatpush1.msra.mxu0 0.0
    %1801 = vmatprep.subr.mxu0 0.0
    %1802 = vmatpush1.msra.mxu0 0.0
    %1803 = vmatprep.subr.mxu0 0.0
    %1804 = vmatpush1.msra.mxu0 0.0
    %1805 = vmatprep.subr.mxu0 0.0
    %1806 = vmatpush1.msra.mxu0 0.0
    %1807 = vmatprep.subr.mxu0 0.0
    %1808 = vmatpush1.msra.mxu0 0.0
    %1809 = vmatprep.subr.mxu0 0.0
    %1810 = vmatpush1.msra.mxu0 0.0
    %1811 = vmatprep.subr.mxu0 0.0
    %1812 = vmatpush1.msra.mxu0 0.0
    %1813 = vmatprep.subr.mxu0 0.0
    %1814 = vmatpush1.msra.mxu0 0.0
    %1815 = vmatprep.subr.mxu0 0.0
    %1816 = vmatpush1.msra.mxu0 0.0
    %1817 = vmatprep.subr.mxu0 0.0
    %1818 = vmatpush1.msra.mxu0 0.0
    %1819 = vmatprep.subr.mxu0 0.0
    %1820 = vmatpush1.msra.mxu0 0.0
    %1821 = vmatprep.subr.mxu0 0.0
    %1822 = vmatpush1.msra.mxu0 0.0
    %1823 = vmatprep.subr.mxu0 0.0
    %1824 = vmatpush1.msra.mxu0 0.0
    %1825 = vmatprep.subr.mxu0 0.0
    %1826 = vmatpush1.msra.mxu0 0.0
    %1827 = vmatprep.mubr.f32.mxu0 0.0
    %1828 = vmatmul.mubr.f32.gmra.mrb[0].mxu0 %v1758
    %v1829 = vpop.f32.mrb[0].mxu0
    %v1830 = vadd.f32 %v1755, %v1829
    %v1831 = vpop.f32.mrb[0].mxu0
    %1832 = vmatprep.mubr.f32.mxu0 0.0
    %1833 = vmatmul.mubr.f32.gmra.mrb[0].mxu0 %v1761
    %v1834 = vpop.f32.mrb[0].mxu0
    %v1835 = vadd.f32 %v1755, %v1834
    %v1836 = vpop.f32.mrb[0].mxu0
    %1837 = vdwg.mxu0
    %1838 = vst.msk [vmem:[#allocation9] sm:$0xff] %vm78, %v1830
    %1839 = vst.msk [vmem:[#allocation9 + $0x8] sm:$0xff] %vm78, %v1835
    %v1840 = vrcp.pop 64.0
    %s1841 = vtos %v1840
    %s1842 = smul.f32 %s1662, %s1841
    %v1843 = vstv %s1842
    %1844 = vst [vmem:[#allocation10] sm:$0x1] %v1843
    // Predicated region
    $region34: #{tpu_custom_call.1} parent=1 // pred_check
      _
    $region35: #{tpu_custom_call.1} parent=1 // pred_check_branch
      %1846 = sbr.rel (0) target = $region37
    $region36: #{tpu_custom_call.1} parent=1 // pred_region
      %s1848 = ssub.s32 256, 256
      %1849 = vsyncadd [#allocation5], %s1848
      %s1850 = sshll.u32 [#allocation9], 4
      %s1851 = int_to_ptr.vmem [resolvable:$true] %s1850
      %1856 = dma.vmem_to_hbm [thread:$0]  %s1851, 256, %s5, [#allocation5], 128, 128, 8
    $region37: #{tpu_custom_call.1} parent=1 // pred_fallthru
      _
    // Predicated region
    $region38: #{tpu_custom_call.1} parent=1 // pred_check
      _
    $region39: #{tpu_custom_call.1} parent=1 // pred_check_branch
      %1858 = sbr.rel (0) target = $region41
    $region40: #{tpu_custom_call.1} parent=1 // pred_region
      %s1860 = ssub.s32 16, 16
      %1861 = vsyncadd [#allocation11], %s1860
      %s1863 = sshll.u32 [#allocation10], 4
      %s1864 = int_to_ptr.vmem [resolvable:$true] %s1863
      %1866 = dma.vmem_to_hbm [thread:$0]  %s1864, 16, %s6, [#allocation11]
    $region41: #{tpu_custom_call.1} parent=1 // pred_fallthru
      _
    // Predicated region
    $region42: #{tpu_custom_call.1} parent=1 // pred_check
      _
    $region43: #{tpu_custom_call.1} parent=1 // pred_check_branch
      %1868 = sbr.rel (0) target = $region45
    $region44: #{tpu_custom_call.1} parent=1 // pred_region
      %1869 = dma.done [#allocation5], 256
    $region45: #{tpu_custom_call.1} parent=1 // pred_fallthru
      _
    // Predicated region
    $region46: #{tpu_custom_call.1} parent=1 // pred_check
      _
    $region47: #{tpu_custom_call.1} parent=1 // pred_check_branch
      %1871 = sbr.rel (0) target = $region49
    $region48: #{tpu_custom_call.1} parent=1 // pred_region
      %1872 = dma.done [#allocation11], 16
    $region49: #{tpu_custom_call.1} parent=1 // pred_fallthru
      _
    %1873 = vsyncpa [#allocation4], 1
    %1874 = vsyncpa [#allocation7], 1
    %1875 = vsyncpa [#allocation5], 1
    %1876 = vsyncpa [#allocation11], 1

// kernel: tpu_custom_call.1
$region0: #{tpu_custom_call.1}
  #allocation0 [shape = 'u32[]', space=smem, size = 0x4, offset = 0x4, fixed_abs, tag = 'smem constant byte address 0x4 - core index']
  #allocation1 [shape = 'u32[144,128]{1,0:T(1,128)}', space=vmem, size = 0x12000, scoped, tag = 'internal scratch']
  #allocation2 [shape = 'f32[16,32]{1,0:T(8,128)}', space=vmem, size = 0x2000, scoped, tag = 'scratch operand']
  %s0 = inlined_call_operand.hbm [shape: f32[2,8,32], index: 0, kind: input, shape index: {}]
  %s1 = inlined_call_operand.hbm [shape: f32[32,96], index: 1, kind: input, shape index: {}]
  %s2 = inlined_call_operand.vmem [shape: f32[1,96], index: 2, kind: input, shape index: {}]
  %s3 = inlined_call_operand.hbm [shape: f32[32,32], index: 3, kind: input, shape index: {}]
  %s4 = inlined_call_operand.vmem [shape: f32[1,32], index: 4, kind: input, shape index: {}]
  %s5 = inlined_call_operand.hbm [shape: f32[2,8,32], index: 5, kind: output, shape index: {0}]
  %s6 = inlined_call_operand.hbm [shape: f32[1,1,128], index: 6, kind: output, shape index: {1}]
  %7 = xla_tuple %s5, %s6
  %s8 = sld [smem:[#allocation0]]
  $region50: #{tpu_custom_call.1} parent=0
    _
  %s10 = ssub.s32 1, %s8
  %s11 = scalar_select 0, %s10, %s8
  $region1: #{tpu_custom_call.1} parent=0
    #allocation3 [shape = 'u8[8192]{0}', space=vmem, size = 0x2000, scoped, tag = 'input window, operand 0, single buffered']
    #allocation4 [shape = 's32[1]{0}', space=sflag, size = 0x4, scoped, tag = 'scoped memory for tpu_custom_call.1']
    #allocation5 [shape = 's32[1]{0}', space=sflag, size = 0x4, scoped, tag = 'scoped memory for tpu_custom_call.1']
    #allocation6 [shape = 'u8[16384]{0}', space=vmem, size = 0x4000, scoped, tag = 'input window, operand 1, single buffered']
    #allocation7 [shape = 's32[1]{0}', space=sflag, size = 0x4, scoped, tag = 'scoped memory for tpu_custom_call.1']
    #allocation8 [shape = 'u8[16384]{0}', space=vmem, size = 0x4000, scoped, tag = 'input window, operand 3, single buffered']
    #allocation9 [shape = 'u8[8192]{0}', space=vmem, size = 0x2000, scoped, tag = 'output window, operand 0, single buffered']
    #allocation10 [shape = 'u8[512]{0}', space=vmem, size = 0x400, scoped, tag = 'output window, operand 1, single buffered']
    #allocation11 [shape = 's32[1]{0}', space=sflag, size = 0x4, scoped, tag = 'scoped memory for tpu_custom_call.1']
    %12 = vsyncpa [#allocation4], 0
    %13 = vsyncpa [#allocation7], 0
    %14 = vsyncpa [#allocation5], 0
    %15 = vsyncpa [#allocation11], 0
    // Predicated region
    $region2: #{tpu_custom_call.1} parent=1 // pred_check
      _
    $region3: #{tpu_custom_call.1} parent=1 // pred_check_branch
      %17 = sbr.rel (0) target = $region5
    $region4: #{tpu_custom_call.1} parent=1 // pred_region
      %s19 = ssub.s32 256, 256
      %20 = vsyncadd [#allocation4], %s19
      %s21 = sshll.u32 [#allocation3], 4
      %s22 = int_to_ptr.vmem [resolvable:$true] %s21
      %27 = dma.hbm_to_vmem [thread:$0]  %s0, 256, %s22, [#allocation4], 128, 128, 8
    $region5: #{tpu_custom_call.1} parent=1 // pred_fallthru
      _
    // Predicated region
    $region6: #{tpu_custom_call.1} parent=1 // pred_check
      _
    $region7: #{tpu_custom_call.1} parent=1 // pred_check_branch
      %29 = sbr.rel (0) target = $region9
    $region8: #{tpu_custom_call.1} parent=1 // pred_region
      %s31 = ssub.s32 512, 512
      %32 = vsyncadd [#allocation7], %s31
      %s33 = sshll.u32 [#allocation6], 4
      %s34 = int_to_ptr.vmem [resolvable:$true] %s33
      %39 = dma.hbm_to_vmem [thread:$0]  %s1, 512, %s34, [#allocation7], 128, 128, 8
    $region9: #{tpu_custom_call.1} parent=1 // pred_fallthru
      _
    // Predicated region
    $region10: #{tpu_custom_call.1} parent=1 // pred_check
      _
    $region11: #{tpu_custom_call.1} parent=1 // pred_check_branch
      %41 = sbr.rel (0) target = $region13
    $region12: #{tpu_custom_call.1} parent=1 // pred_region
      _
    $region13: #{tpu_custom_call.1} parent=1 // pred_fallthru
      _
    // Predicated region
    $region14: #{tpu_custom_call.1} parent=1 // pred_check
      _
    $region15: #{tpu_custom_call.1} parent=1 // pred_check_branch
      %43 = sbr.rel (0) target = $region17
    $region16: #{tpu_custom_call.1} parent=1 // pred_region
      %s45 = ssub.s32 512, 512
      %46 = vsyncadd [#allocation7], %s45
      %s47 = sshll.u32 [#allocation8], 4
      %s48 = int_to_ptr.vmem [resolvable:$true] %s47
      %53 = dma.hbm_to_vmem [thread:$0]  %s3, 512, %s48, [#allocation7], 128, 128, 8
    $region17: #{tpu_custom_call.1} parent=1 // pred_fallthru
      _
    // Predicated region
    $region18: #{tpu_custom_call.1} parent=1 // pred_check
      _
    $region19: #{tpu_custom_call.1} parent=1 // pred_check_branch
      %55 = sbr.rel (0) target = $region21
    $region20: #{tpu_custom_call.1} parent=1 // pred_region
      _
    $region21: #{tpu_custom_call.1} parent=1 // pred_fallthru
      _
    // Predicated region
    $region22: #{tpu_custom_call.1} parent=1 // pred_check
      _
    $region23: #{tpu_custom_call.1} parent=1 // pred_check_branch
      %57 = sbr.rel (0) target = $region25
    $region24: #{tpu_custom_call.1} parent=1 // pred_region
      %58 = dma.done [#allocation4], 256
    $region25: #{tpu_custom_call.1} parent=1 // pred_fallthru
      _
    // Predicated region
    $region26: #{tpu_custom_call.1} parent=1 // pred_check
      _
    $region27: #{tpu_custom_call.1} parent=1 // pred_check_branch
      %60 = sbr.rel (0) target = $region29
    $region28: #{tpu_custom_call.1} parent=1 // pred_region
      %61 = dma.done [#allocation7], 512
    $region29: #{tpu_custom_call.1} parent=1 // pred_fallthru
      _
    // Predicated region
    $region30: #{tpu_custom_call.1} parent=1 // pred_check
      _
    $region31: #{tpu_custom_call.1} parent=1 // pred_check_branch
      %63 = sbr.rel (0) target = $region33
    $region32: #{tpu_custom_call.1} parent=1 // pred_region
      %64 = dma.done [#allocation7], 512
    $region33: #{tpu_custom_call.1} parent=1 // pred_fallthru
      _
    %v65 = vld [vmem:[#allocation3] sm:$0xff]
    %v66 = vld [vmem:[#allocation3 + $0x8] sm:$0xff]
    %v67 = vld [vmem:[#allocation6] sm:$0xff]
    %v68 = vld [vmem:[#allocation6 + $0x8] sm:$0xff]
    %v69 = vld [vmem:[#allocation6 + $0x10] sm:$0xff]
    %v70 = vld [vmem:[#allocation6 + $0x18] sm:$0xff]
    %v71 = vld [vmem:[%s2] sm:$0x1]
    %v73 = vlaneseq
    %v74 = vshrl.u32 %v73, 7
    %v75 = vsub.s32 0, %v74
    %v76 = vrot.slane %v71, %v75
    %vm78 = vcmask 261120
    %v80 = vsel %vm78, %v65, 0
    %v83 = vsel %vm78, %v66, 0
    %85 = vmatprep.subr.mxu0 0.0
    %86 = vmatpush1.msra.mxu0 %v67
    %87 = vmatprep.subr.mxu0 0.0
    %88 = vmatpush1.msra.mxu0 %v68
    %89 = vmatprep.subr.mxu0 0.0
    %90 = vmatpush1.msra.mxu0 %v69
    %91 = vmatprep.subr.mxu0 0.0
    %92 = vmatpush1.msra.mxu0 %v70
    %93 = vmatprep.subr.mxu0 0.0
    %94 = vmatpush1.msra.mxu0 0.0
    %95 = vmatprep.subr.mxu0 0.0
    %96 = vmatpush1.msra.mxu0 0.0
    %97 = vmatprep.subr.mxu0 0.0
    %98 = vmatpush1.msra.mxu0 0.0
    %99 = vmatprep.subr.mxu0 0.0
    %100 = vmatpush1.msra.mxu0 0.0
    %101 = vmatprep.subr.mxu0 0.0
    %102 = vmatpush1.msra.mxu0 0.0
    %103 = vmatprep.subr.mxu0 0.0
    %104 = vmatpush1.msra.mxu0 0.0
    %105 = vmatprep.subr.mxu0 0.0
    %106 = vmatpush1.msra.mxu0 0.0
    %107 = vmatprep.subr.mxu0 0.0
    %108 = vmatpush1.msra.mxu0 0.0
    %109 = vmatprep.subr.mxu0 0.0
    %110 = vmatpush1.msra.mxu0 0.0
    %111 = vmatprep.subr.mxu0 0.0
    %112 = vmatpush1.msra.mxu0 0.0
    %113 = vmatprep.subr.mxu0 0.0
    %114 = vmatpush1.msra.mxu0 0.0
    %115 = vmatprep.subr.mxu0 0.0
    %116 = vmatpush1.msra.mxu0 0.0
    %117 = vmatprep.subr.mxu0 0.0
    %118 = vmatpush1.msra.mxu0 0.0
    %119 = vmatprep.subr.mxu0 0.0
    %120 = vmatpush1.msra.mxu0 0.0
    %121 = vmatprep.subr.mxu0 0.0
    %122 = vmatpush1.msra.mxu0 0.0
    %123 = vmatprep.subr.mxu0 0.0
    %124 = vmatpush1.msra.mxu0 0.0
    %125 = vmatprep.subr.mxu0 0.0
    %126 = vmatpush1.msra.mxu0 0.0
    %127 = vmatprep.subr.mxu0 0.0
    %128 = vmatpush1.msra.mxu0 0.0
    %129 = vmatprep.subr.mxu0 0.0
    %130 = vmatpush1.msra.mxu0 0.0
    %131 = vmatprep.subr.mxu0 0.0
    %132 = vmatpush1.msra.mxu0 0.0
    %133 = vmatprep.subr.mxu0 0.0
    %134 = vmatpush1.msra.mxu0 0.0
    %135 = vmatprep.subr.mxu0 0.0
    %136 = vmatpush1.msra.mxu0 0.0
    %137 = vmatprep.subr.mxu0 0.0
    %138 = vmatpush1.msra.mxu0 0.0
    %139 = vmatprep.subr.mxu0 0.0
    %140 = vmatpush1.msra.mxu0 0.0
    %141 = vmatprep.subr.mxu0 0.0
    %142 = vmatpush1.msra.mxu0 0.0
    %143 = vmatprep.subr.mxu0 0.0
    %144 = vmatpush1.msra.mxu0 0.0
    %145 = vmatprep.subr.mxu0 0.0
    %146 = vmatpush1.msra.mxu0 0.0
    %147 = vmatprep.subr.mxu0 0.0
    %148 = vmatpush1.msra.mxu0 0.0
    %149 = vmatprep.mubr.f32.mxu0 0.0
    %150 = vmatmul.mubr.f32.gmra.mrb[0].mxu0 %v80
    %v151 = vpop.f32.mrb[0].mxu0
    %v152 = vadd.f32 %v76, %v151
    %v153 = vpop.f32.mrb[0].mxu0
    %154 = vmatprep.mubr.f32.mxu0 0.0
    %155 = vmatmul.mubr.f32.gmra.mrb[0].mxu0 %v83
    %v156 = vpop.f32.mrb[0].mxu0
    %v157 = vadd.f32 %v76, %v156
    %v158 = vpop.f32.mrb[0].mxu0
    %159 = vdwg.mxu0
    %v160 = vlaneseq
    %v161 = vshrl.u32 %v160, 7
    %v162 = vlaneseq
    %v163 = vand.u32 %v162, 127
    %vm164 = vcmp.ge.s32.totalorder %v161, %v163
    %166 = vrot.lane.b32.xlu0 %v152, 96
    %v167 = vpop.permute.xlu0 %166
    %vm168 = vcmask 64512
    %v169 = vsel %vm168, %v152, 0
    %v171 = vsel %vm168, %v167, 0
    %173 = vmatprep.subr.mxu0 0.0
    %174 = vmatpush1.xpose.msra.mxu0 %v171
    %175 = vmatprep.subr.mxu0 0.0
    %176 = vmatpush1.xpose.msra.mxu0 0.0
    %177 = vmatprep.subr.mxu0 0.0
    %178 = vmatpush1.xpose.msra.mxu0 0.0
    %179 = vmatprep.subr.mxu0 0.0
    %180 = vmatpush1.xpose.msra.mxu0 0.0
    %181 = vmatprep.subr.mxu0 0.0
    %182 = vmatpush1.xpose.msra.mxu0 0.0
    %183 = vmatprep.subr.mxu0 0.0
    %184 = vmatpush1.xpose.msra.mxu0 0.0
    %185 = vmatprep.subr.mxu0 0.0
    %186 = vmatpush1.xpose.msra.mxu0 0.0
    %187 = vmatprep.subr.mxu0 0.0
    %188 = vmatpush1.xpose.msra.mxu0 0.0
    %189 = vmatprep.subr.mxu0 0.0
    %190 = vmatpush1.xpose.msra.mxu0 0.0
    %191 = vmatprep.subr.mxu0 0.0
    %192 = vmatpush1.xpose.msra.mxu0 0.0
    %193 = vmatprep.subr.mxu0 0.0
    %194 = vmatpush1.xpose.msra.mxu0 0.0
    %195 = vmatprep.subr.mxu0 0.0
    %196 = vmatpush1.xpose.msra.mxu0 0.0
    %197 = vmatprep.subr.mxu0 0.0
    %198 = vmatpush1.xpose.msra.mxu0 0.0
    %199 = vmatprep.subr.mxu0 0.0
    %200 = vmatpush1.xpose.msra.mxu0 0.0
    %201 = vmatprep.subr.mxu0 0.0
    %202 = vmatpush1.xpose.msra.mxu0 0.0
    %203 = vmatprep.subr.mxu0 0.0
    %204 = vmatpush1.xpose.msra.mxu0 0.0
    %205 = vmatprep.subr.mxu0 0.0
    %206 = vmatpush1.xpose.msra.mxu0 0.0
    %207 = vmatprep.subr.mxu0 0.0
    %208 = vmatpush1.xpose.msra.mxu0 0.0
    %209 = vmatprep.subr.mxu0 0.0
    %210 = vmatpush1.xpose.msra.mxu0 0.0
    %211 = vmatprep.subr.mxu0 0.0
    %212 = vmatpush1.xpose.msra.mxu0 0.0
    %213 = vmatprep.subr.mxu0 0.0
    %214 = vmatpush1.xpose.msra.mxu0 0.0
    %215 = vmatprep.subr.mxu0 0.0
    %216 = vmatpush1.xpose.msra.mxu0 0.0
    %217 = vmatprep.subr.mxu0 0.0
    %218 = vmatpush1.xpose.msra.mxu0 0.0
    %219 = vmatprep.subr.mxu0 0.0
    %220 = vmatpush1.xpose.msra.mxu0 0.0
    %221 = vmatprep.subr.mxu0 0.0
    %222 = vmatpush1.xpose.msra.mxu0 0.0
    %223 = vmatprep.subr.mxu0 0.0
    %224 = vmatpush1.xpose.msra.mxu0 0.0
    %225 = vmatprep.subr.mxu0 0.0
    %226 = vmatpush1.xpose.msra.mxu0 0.0
    %227 = vmatprep.subr.mxu0 0.0
    %228 = vmatpush1.xpose.msra.mxu0 0.0
    %229 = vmatprep.subr.mxu0 0.0
    %230 = vmatpush1.xpose.msra.mxu0 0.0
    %231 = vmatprep.subr.mxu0 0.0
    %232 = vmatpush1.xpose.msra.mxu0 0.0
    %233 = vmatprep.subr.mxu0 0.0
    %234 = vmatpush1.xpose.msra.mxu0 0.0
    %235 = vmatprep.subr.mxu0 0.0
    %236 = vmatpush1.xpose.msra.mxu0 0.0
    %237 = vmatprep.mubr.f32.mxu0 0.0
    %238 = vmatmul.mubr.f32.gmra.mrb[0].mxu0 %v169
    %v239 = vpop.f32.mrb[0].mxu0
    %v240 = vadd.f32 0.0, %v239
    %v241 = vpop.f32.mrb[0].mxu0
    %242 = vdwg.mxu0
    %v243 = vmul.f32 %v240, 0.35355338
    %v244 = vsel %vm164, %v243, -inf
    %v245 = vsel %vm168, %v244, -inf
    %246 = vmax.xlane.f32.xlu0 %v245
    %v247 = vpop.xlane.xlu0 %246
    %v248 = vsub.f32 %v244, %v247
    %v249 = vmul.f32 %v248, 1.442695
    %v250 = vpow.pop %v249
    %v251 = vsel %vm168, %v250, 0.0
    %252 = vadd.xlane.f32.xlu0 %v251
    %v253 = vpop.xlane.xlu0 %252
    %v254 = vrcp.pop %v253
    %v255 = vmul.f32 %v250, %v254
    %v256 = vsel %vm164, %v248, 0.0
    %v257 = vlog2.pop %v253
    %v258 = vmul.f32 %v257, 0.6931472
    %vm259 = vcmask 7168
    %v260 = vsel %vm259, %v258, 0.0
    %261 = vadd.xlane.f32.xlu0 %v260
    %v262 = vpop.xlane.xlu0 %261
    %v263 = vrot.slane %v262, 4
    %v264 = vadd.f32 %v262, %v263
    %v265 = vrot.slane %v264, 2
    %v266 = vadd.f32 %v264, %v265
    %v267 = vrot.slane %v266, 1
    %v268 = vadd.f32 %v266, %v267
    %s269 = vtos %v268
    %v270 = vmul.f32 %v255, %v256
    %v271 = vsel %vm168, %v270, 0.0
    %272 = vadd.xlane.f32.xlu0 %v271
    %v273 = vpop.xlane.xlu0 %272
    %v274 = vrot.slane %v273, 4
    %v275 = vadd.f32 %v273, %v274
    %v276 = vrot.slane %v275, 2
    %v277 = vadd.f32 %v275, %v276
    %v278 = vrot.slane %v277, 1
    %v279 = vadd.f32 %v277, %v278
    %s280 = vtos %v279
    %s281 = ssub.f32 %s269, %s280
    %s282 = sadd.f32 %s281, 0.0
    %283 = vrot.lane.b32.xlu0 %v152, 64
    %v284 = vpop.permute.xlu0 %283
    %v287 = vsel %vm168, %v255, 0
    %289 = vmatprep.subr.mxu0 0.0
    %290 = vmatpush1.msra.mxu0 %v284
    %291 = vmatprep.subr.mxu0 0.0
    %292 = vmatpush1.msra.mxu0 0.0
    %293 = vmatprep.subr.mxu0 0.0
    %294 = vmatpush1.msra.mxu0 0.0
    %295 = vmatprep.subr.mxu0 0.0
    %296 = vmatpush1.msra.mxu0 0.0
    %297 = vmatprep.subr.mxu0 0.0
    %298 = vmatpush1.msra.mxu0 0.0
    %299 = vmatprep.subr.mxu0 0.0
    %300 = vmatpush1.msra.mxu0 0.0
    %301 = vmatprep.subr.mxu0 0.0
    %302 = vmatpush1.msra.mxu0 0.0
    %303 = vmatprep.subr.mxu0 0.0
    %304 = vmatpush1.msra.mxu0 0.0
    %305 = vmatprep.subr.mxu0 0.0
    %306 = vmatpush1.msra.mxu0 0.0
    %307 = vmatprep.subr.mxu0 0.0
    %308 = vmatpush1.msra.mxu0 0.0
    %309 = vmatprep.subr.mxu0 0.0
    %310 = vmatpush1.msra.mxu0 0.0
    %311 = vmatprep.subr.mxu0 0.0
    %312 = vmatpush1.msra.mxu0 0.0
    %313 = vmatprep.subr.mxu0 0.0
    %314 = vmatpush1.msra.mxu0 0.0
    %315 = vmatprep.subr.mxu0 0.0
    %316 = vmatpush1.msra.mxu0 0.0
    %317 = vmatprep.subr.mxu0 0.0
    %318 = vmatpush1.msra.mxu0 0.0
    %319 = vmatprep.subr.mxu0 0.0
    %320 = vmatpush1.msra.mxu0 0.0
    %321 = vmatprep.subr.mxu0 0.0
    %322 = vmatpush1.msra.mxu0 0.0
    %323 = vmatprep.subr.mxu0 0.0
    %324 = vmatpush1.msra.mxu0 0.0
    %325 = vmatprep.subr.mxu0 0.0
    %326 = vmatpush1.msra.mxu0 0.0
    %327 = vmatprep.subr.mxu0 0.0
    %328 = vmatpush1.msra.mxu0 0.0
    %329 = vmatprep.subr.mxu0 0.0
    %330 = vmatpush1.msra.mxu0 0.0
    %331 = vmatprep.subr.mxu0 0.0
    %332 = vmatpush1.msra.mxu0 0.0
    %333 = vmatprep.subr.mxu0 0.0
    %334 = vmatpush1.msra.mxu0 0.0
    %335 = vmatprep.subr.mxu0 0.0
    %336 = vmatpush1.msra.mxu0 0.0
    %337 = vmatprep.subr.mxu0 0.0
    %338 = vmatpush1.msra.mxu0 0.0
    %339 = vmatprep.subr.mxu0 0.0
    %340 = vmatpush1.msra.mxu0 0.0
    %341 = vmatprep.subr.mxu0 0.0
    %342 = vmatpush1.msra.mxu0 0.0
    %343 = vmatprep.subr.mxu0 0.0
    %344 = vmatpush1.msra.mxu0 0.0
    %345 = vmatprep.subr.mxu0 0.0
    %346 = vmatpush1.msra.mxu0 0.0
    %347 = vmatprep.subr.mxu0 0.0
    %348 = vmatpush1.msra.mxu0 0.0
    %349 = vmatprep.subr.mxu0 0.0
    %350 = vmatpush1.msra.mxu0 0.0
    %351 = vmatprep.subr.mxu0 0.0
    %352 = vmatpush1.msra.mxu0 0.0
    %353 = vmatprep.mubr.f32.mxu0 0.0
    %354 = vmatmul.mubr.f32.gmra.mrb[0].mxu0 %v287
    %v355 = vpop.f32.mrb[0].mxu0
    %v356 = vadd.f32 0.0, %v355
    %v357 = vpop.f32.mrb[0].mxu0
    %358 = vdwg.mxu0
    %359 = vst.msk [vmem:[#allocation2] sm:$0xff] %vm168, %v356
    %360 = vrot.lane.b32.xlu0 %v152, 120
    %v361 = vpop.permute.xlu0 %360
    %362 = vrot.lane.b32.xlu0 %v152, 88
    %v363 = vpop.permute.xlu0 %362
    %v364 = vsel %vm168, %v361, 0
    %v366 = vsel %vm168, %v363, 0
    %368 = vmatprep.subr.mxu0 0.0
    %369 = vmatpush1.xpose.msra.mxu0 %v366
    %370 = vmatprep.subr.mxu0 0.0
    %371 = vmatpush1.xpose.msra.mxu0 0.0
    %372 = vmatprep.subr.mxu0 0.0
    %373 = vmatpush1.xpose.msra.mxu0 0.0
    %374 = vmatprep.subr.mxu0 0.0
    %375 = vmatpush1.xpose.msra.mxu0 0.0
    %376 = vmatprep.subr.mxu0 0.0
    %377 = vmatpush1.xpose.msra.mxu0 0.0
    %378 = vmatprep.subr.mxu0 0.0
    %379 = vmatpush1.xpose.msra.mxu0 0.0
    %380 = vmatprep.subr.mxu0 0.0
    %381 = vmatpush1.xpose.msra.mxu0 0.0
    %382 = vmatprep.subr.mxu0 0.0
    %383 = vmatpush1.xpose.msra.mxu0 0.0
    %384 = vmatprep.subr.mxu0 0.0
    %385 = vmatpush1.xpose.msra.mxu0 0.0
    %386 = vmatprep.subr.mxu0 0.0
    %387 = vmatpush1.xpose.msra.mxu0 0.0
    %388 = vmatprep.subr.mxu0 0.0
    %389 = vmatpush1.xpose.msra.mxu0 0.0
    %390 = vmatprep.subr.mxu0 0.0
    %391 = vmatpush1.xpose.msra.mxu0 0.0
    %392 = vmatprep.subr.mxu0 0.0
    %393 = vmatpush1.xpose.msra.mxu0 0.0
    %394 = vmatprep.subr.mxu0 0.0
    %395 = vmatpush1.xpose.msra.mxu0 0.0
    %396 = vmatprep.subr.mxu0 0.0
    %397 = vmatpush1.xpose.msra.mxu0 0.0
    %398 = vmatprep.subr.mxu0 0.0
    %399 = vmatpush1.xpose.msra.mxu0 0.0
    %400 = vmatprep.subr.mxu0 0.0
    %401 = vmatpush1.xpose.msra.mxu0 0.0
    %402 = vmatprep.subr.mxu0 0.0
    %403 = vmatpush1.xpose.msra.mxu0 0.0
    %404 = vmatprep.subr.mxu0 0.0
    %405 = vmatpush1.xpose.msra.mxu0 0.0
    %406 = vmatprep.subr.mxu0 0.0
    %407 = vmatpush1.xpose.msra.mxu0 0.0
    %408 = vmatprep.subr.mxu0 0.0
    %409 = vmatpush1.xpose.msra.mxu0 0.0
    %410 = vmatprep.subr.mxu0 0.0
    %411 = vmatpush1.xpose.msra.mxu0 0.0
    %412 = vmatprep.subr.mxu0 0.0
    %413 = vmatpush1.xpose.msra.mxu0 0.0
    %414 = vmatprep.subr.mxu0 0.0
    %415 = vmatpush1.xpose.msra.mxu0 0.0
    %416 = vmatprep.subr.mxu0 0.0
    %417 = vmatpush1.xpose.msra.mxu0 0.0
    %418 = vmatprep.subr.mxu0 0.0
    %419 = vmatpush1.xpose.msra.mxu0 0.0
    %420 = vmatprep.subr.mxu0 0.0
    %421 = vmatpush1.xpose.msra.mxu0 0.0
    %422 = vmatprep.subr.mxu0 0.0
    %423 = vmatpush1.xpose.msra.mxu0 0.0
    %424 = vmatprep.subr.mxu0 0.0
    %425 = vmatpush1.xpose.msra.mxu0 0.0
    %426 = vmatprep.subr.mxu0 0.0
    %427 = vmatpush1.xpose.msra.mxu0 0.0
    %428 = vmatprep.subr.mxu0 0.0
    %429 = vmatpush1.xpose.msra.mxu0 0.0
    %430 = vmatprep.subr.mxu0 0.0
    %431 = vmatpush1.xpose.msra.mxu0 0.0
    %432 = vmatprep.mubr.f32.mxu0 0.0
    %433 = vmatmul.mubr.f32.gmra.mrb[0].mxu0 %v364
    %v434 = vpop.f32.mrb[0].mxu0
    %v435 = vadd.f32 0.0, %v434
    %v436 = vpop.f32.mrb[0].mxu0
    %437 = vdwg.mxu0
    %v438 = vmul.f32 %v435, 0.35355338
    %v439 = vsel %vm164, %v438, -inf
    %v440 = vsel %vm168, %v439, -inf
    %441 = vmax.xlane.f32.xlu0 %v440
    %v442 = vpop.xlane.xlu0 %441
    %v443 = vsub.f32 %v439, %v442
    %v444 = vmul.f32 %v443, 1.442695
    %v445 = vpow.pop %v444
    %v446 = vsel %vm168, %v445, 0.0
    %447 = vadd.xlane.f32.xlu0 %v446
    %v448 = vpop.xlane.xlu0 %447
    %v449 = vrcp.pop %v448
    %v450 = vmul.f32 %v445, %v449
    %v451 = vsel %vm164, %v443, 0.0
    %v452 = vlog2.pop %v448
    %v453 = vmul.f32 %v452, 0.6931472
    %v454 = vsel %vm259, %v453, 0.0
    %455 = vadd.xlane.f32.xlu0 %v454
    %v456 = vpop.xlane.xlu0 %455
    %v457 = vrot.slane %v456, 4
    %v458 = vadd.f32 %v456, %v457
    %v459 = vrot.slane %v458, 2
    %v460 = vadd.f32 %v458, %v459
    %v461 = vrot.slane %v460, 1
    %v462 = vadd.f32 %v460, %v461
    %s463 = vtos %v462
    %v464 = vmul.f32 %v450, %v451
    %v465 = vsel %vm168, %v464, 0.0
    %466 = vadd.xlane.f32.xlu0 %v465
    %v467 = vpop.xlane.xlu0 %466
    %v468 = vrot.slane %v467, 4
    %v469 = vadd.f32 %v467, %v468
    %v470 = vrot.slane %v469, 2
    %v471 = vadd.f32 %v469, %v470
    %v472 = vrot.slane %v471, 1
    %v473 = vadd.f32 %v471, %v472
    %s474 = vtos %v473
    %s475 = ssub.f32 %s463, %s474
    %s476 = sadd.f32 %s282, %s475
    %477 = vrot.lane.b32.xlu0 %v152, 56
    %v478 = vpop.permute.xlu0 %477
    %v481 = vsel %vm168, %v450, 0
    %483 = vmatprep.subr.mxu0 0.0
    %484 = vmatpush1.msra.mxu0 %v478
    %485 = vmatprep.subr.mxu0 0.0
    %486 = vmatpush1.msra.mxu0 0.0
    %487 = vmatprep.subr.mxu0 0.0
    %488 = vmatpush1.msra.mxu0 0.0
    %489 = vmatprep.subr.mxu0 0.0
    %490 = vmatpush1.msra.mxu0 0.0
    %491 = vmatprep.subr.mxu0 0.0
    %492 = vmatpush1.msra.mxu0 0.0
    %493 = vmatprep.subr.mxu0 0.0
    %494 = vmatpush1.msra.mxu0 0.0
    %495 = vmatprep.subr.mxu0 0.0
    %496 = vmatpush1.msra.mxu0 0.0
    %497 = vmatprep.subr.mxu0 0.0
    %498 = vmatpush1.msra.mxu0 0.0
    %499 = vmatprep.subr.mxu0 0.0
    %500 = vmatpush1.msra.mxu0 0.0
    %501 = vmatprep.subr.mxu0 0.0
    %502 = vmatpush1.msra.mxu0 0.0
    %503 = vmatprep.subr.mxu0 0.0
    %504 = vmatpush1.msra.mxu0 0.0
    %505 = vmatprep.subr.mxu0 0.0
    %506 = vmatpush1.msra.mxu0 0.0
    %507 = vmatprep.subr.mxu0 0.0
    %508 = vmatpush1.msra.mxu0 0.0
    %509 = vmatprep.subr.mxu0 0.0
    %510 = vmatpush1.msra.mxu0 0.0
    %511 = vmatprep.subr.mxu0 0.0
    %512 = vmatpush1.msra.mxu0 0.0
    %513 = vmatprep.subr.mxu0 0.0
    %514 = vmatpush1.msra.mxu0 0.0
    %515 = vmatprep.subr.mxu0 0.0
    %516 = vmatpush1.msra.mxu0 0.0
    %517 = vmatprep.subr.mxu0 0.0
    %518 = vmatpush1.msra.mxu0 0.0
    %519 = vmatprep.subr.mxu0 0.0
    %520 = vmatpush1.msra.mxu0 0.0
    %521 = vmatprep.subr.mxu0 0.0
    %522 = vmatpush1.msra.mxu0 0.0
    %523 = vmatprep.subr.mxu0 0.0
    %524 = vmatpush1.msra.mxu0 0.0
    %525 = vmatprep.subr.mxu0 0.0
    %526 = vmatpush1.msra.mxu0 0.0
    %527 = vmatprep.subr.mxu0 0.0
    %528 = vmatpush1.msra.mxu0 0.0
    %529 = vmatprep.subr.mxu0 0.0
    %530 = vmatpush1.msra.mxu0 0.0
    %531 = vmatprep.subr.mxu0 0.0
    %532 = vmatpush1.msra.mxu0 0.0
    %533 = vmatprep.subr.mxu0 0.0
    %534 = vmatpush1.msra.mxu0 0.0
    %535 = vmatprep.subr.mxu0 0.0
    %536 = vmatpush1.msra.mxu0 0.0
    %537 = vmatprep.subr.mxu0 0.0
    %538 = vmatpush1.msra.mxu0 0.0
    %539 = vmatprep.subr.mxu0 0.0
    %540 = vmatpush1.msra.mxu0 0.0
    %541 = vmatprep.subr.mxu0 0.0
    %542 = vmatpush1.msra.mxu0 0.0
    %543 = vmatprep.subr.mxu0 0.0
    %544 = vmatpush1.msra.mxu0 0.0
    %545 = vmatprep.subr.mxu0 0.0
    %546 = vmatpush1.msra.mxu0 0.0
    %547 = vmatprep.mubr.f32.mxu0 0.0
    %548 = vmatmul.mubr.f32.gmra.mrb[0].mxu0 %v481
    %v549 = vpop.f32.mrb[0].mxu0
    %v550 = vadd.f32 0.0, %v549
    %v551 = vpop.f32.mrb[0].mxu0
    %552 = vdwg.mxu0
    %554 = vrot.lane.b32.xlu0 %v550, 8
    %v555 = vpop.permute.xlu0 %554
    %vm557 = vcmask 130112
    %558 = vst.msk [vmem:[#allocation2] sm:$0xff] %vm557, %v555
    %559 = vrot.lane.b32.xlu0 %v152, 112
    %v560 = vpop.permute.xlu0 %559
    %561 = vrot.lane.b32.xlu0 %v152, 80
    %v562 = vpop.permute.xlu0 %561
    %v563 = vsel %vm168, %v560, 0
    %v565 = vsel %vm168, %v562, 0
    %567 = vmatprep.subr.mxu0 0.0
    %568 = vmatpush1.xpose.msra.mxu0 %v565
    %569 = vmatprep.subr.mxu0 0.0
    %570 = vmatpush1.xpose.msra.mxu0 0.0
    %571 = vmatprep.subr.mxu0 0.0
    %572 = vmatpush1.xpose.msra.mxu0 0.0
    %573 = vmatprep.subr.mxu0 0.0
    %574 = vmatpush1.xpose.msra.mxu0 0.0
    %575 = vmatprep.subr.mxu0 0.0
    %576 = vmatpush1.xpose.msra.mxu0 0.0
    %577 = vmatprep.subr.mxu0 0.0
    %578 = vmatpush1.xpose.msra.mxu0 0.0
    %579 = vmatprep.subr.mxu0 0.0
    %580 = vmatpush1.xpose.msra.mxu0 0.0
    %581 = vmatprep.subr.mxu0 0.0
    %582 = vmatpush1.xpose.msra.mxu0 0.0
    %583 = vmatprep.subr.mxu0 0.0
    %584 = vmatpush1.xpose.msra.mxu0 0.0
    %585 = vmatprep.subr.mxu0 0.0
    %586 = vmatpush1.xpose.msra.mxu0 0.0
    %587 = vmatprep.subr.mxu0 0.0
    %588 = vmatpush1.xpose.msra.mxu0 0.0
    %589 = vmatprep.subr.mxu0 0.0
    %590 = vmatpush1.xpose.msra.mxu0 0.0
    %591 = vmatprep.subr.mxu0 0.0
    %592 = vmatpush1.xpose.msra.mxu0 0.0
    %593 = vmatprep.subr.mxu0 0.0
    %594 = vmatpush1.xpose.msra.mxu0 0.0
    %595 = vmatprep.subr.mxu0 0.0
    %596 = vmatpush1.xpose.msra.mxu0 0.0
    %597 = vmatprep.subr.mxu0 0.0
    %598 = vmatpush1.xpose.msra.mxu0 0.0
    %599 = vmatprep.subr.mxu0 0.0
    %600 = vmatpush1.xpose.msra.mxu0 0.0
    %601 = vmatprep.subr.mxu0 0.0
    %602 = vmatpush1.xpose.msra.mxu0 0.0
    %603 = vmatprep.subr.mxu0 0.0
    %604 = vmatpush1.xpose.msra.mxu0 0.0
    %605 = vmatprep.subr.mxu0 0.0
    %606 = vmatpush1.xpose.msra.mxu0 0.0
    %607 = vmatprep.subr.mxu0 0.0
    %608 = vmatpush1.xpose.msra.mxu0 0.0
    %609 = vmatprep.subr.mxu0 0.0
    %610 = vmatpush1.xpose.msra.mxu0 0.0
    %611 = vmatprep.subr.mxu0 0.0
    %612 = vmatpush1.xpose.msra.mxu0 0.0
    %613 = vmatprep.subr.mxu0 0.0
    %614 = vmatpush1.xpose.msra.mxu0 0.0
    %615 = vmatprep.subr.mxu0 0.0
    %616 = vmatpush1.xpose.msra.mxu0 0.0
    %617 = vmatprep.subr.mxu0 0.0
    %618 = vmatpush1.xpose.msra.mxu0 0.0
    %619 = vmatprep.subr.mxu0 0.0
    %620 = vmatpush1.xpose.msra.mxu0 0.0
    %621 = vmatprep.subr.mxu0 0.0
    %622 = vmatpush1.xpose.msra.mxu0 0.0
    %623 = vmatprep.subr.mxu0 0.0
    %624 = vmatpush1.xpose.msra.mxu0 0.0
    %625 = vmatprep.subr.mxu0 0.0
    %626 = vmatpush1.xpose.msra.mxu0 0.0
    %627 = vmatprep.subr.mxu0 0.0
    %628 = vmatpush1.xpose.msra.mxu0 0.0
    %629 = vmatprep.subr.mxu0 0.0
    %630 = vmatpush1.xpose.msra.mxu0 0.0
    %631 = vmatprep.mubr.f32.mxu0 0.0
    %632 = vmatmul.mubr.f32.gmra.mrb[0].mxu0 %v563
    %v633 = vpop.f32.mrb[0].mxu0
    %v634 = vadd.f32 0.0, %v633
    %v635 = vpop.f32.mrb[0].mxu0
    %636 = vdwg.mxu0
    %v637 = vmul.f32 %v634, 0.35355338
    %v638 = vsel %vm164, %v637, -inf
    %v639 = vsel %vm168, %v638, -inf
    %640 = vmax.xlane.f32.xlu0 %v639
    %v641 = vpop.xlane.xlu0 %640
    %v642 = vsub.f32 %v638, %v641
    %v643 = vmul.f32 %v642, 1.442695
    %v644 = vpow.pop %v643
    %v645 = vsel %vm168, %v644, 0.0
    %646 = vadd.xlane.f32.xlu0 %v645
    %v647 = vpop.xlane.xlu0 %646
    %v648 = vrcp.pop %v647
    %v649 = vmul.f32 %v644, %v648
    %v650 = vsel %vm164, %v642, 0.0
    %v651 = vlog2.pop %v647
    %v652 = vmul.f32 %v651, 0.6931472
    %v653 = vsel %vm259, %v652, 0.0
    %654 = vadd.xlane.f32.xlu0 %v653
    %v655 = vpop.xlane.xlu0 %654
    %v656 = vrot.slane %v655, 4
    %v657 = vadd.f32 %v655, %v656
    %v658 = vrot.slane %v657, 2
    %v659 = vadd.f32 %v657, %v658
    %v660 = vrot.slane %v659, 1
    %v661 = vadd.f32 %v659, %v660
    %s662 = vtos %v661
    %v663 = vmul.f32 %v649, %v650
    %v664 = vsel %vm168, %v663, 0.0
    %665 = vadd.xlane.f32.xlu0 %v664
    %v666 = vpop.xlane.xlu0 %665
    %v667 = vrot.slane %v666, 4
    %v668 = vadd.f32 %v666, %v667
    %v669 = vrot.slane %v668, 2
    %v670 = vadd.f32 %v668, %v669
    %v671 = vrot.slane %v670, 1
    %v672 = vadd.f32 %v670, %v671
    %s673 = vtos %v672
    %s674 = ssub.f32 %s662, %s673
    %s675 = sadd.f32 %s476, %s674
    %676 = vrot.lane.b32.xlu0 %v152, 48
    %v677 = vpop.permute.xlu0 %676
    %v680 = vsel %vm168, %v649, 0
    %682 = vmatprep.subr.mxu0 0.0
    %683 = vmatpush1.msra.mxu0 %v677
    %684 = vmatprep.subr.mxu0 0.0
    %685 = vmatpush1.msra.mxu0 0.0
    %686 = vmatprep.subr.mxu0 0.0
    %687 = vmatpush1.msra.mxu0 0.0
    %688 = vmatprep.subr.mxu0 0.0
    %689 = vmatpush1.msra.mxu0 0.0
    %690 = vmatprep.subr.mxu0 0.0
    %691 = vmatpush1.msra.mxu0 0.0
    %692 = vmatprep.subr.mxu0 0.0
    %693 = vmatpush1.msra.mxu0 0.0
    %694 = vmatprep.subr.mxu0 0.0
    %695 = vmatpush1.msra.mxu0 0.0
    %696 = vmatprep.subr.mxu0 0.0
    %697 = vmatpush1.msra.mxu0 0.0
    %698 = vmatprep.subr.mxu0 0.0
    %699 = vmatpush1.msra.mxu0 0.0
    %700 = vmatprep.subr.mxu0 0.0
    %701 = vmatpush1.msra.mxu0 0.0
    %702 = vmatprep.subr.mxu0 0.0
    %703 = vmatpush1.msra.mxu0 0.0
    %704 = vmatprep.subr.mxu0 0.0
    %705 = vmatpush1.msra.mxu0 0.0
    %706 = vmatprep.subr.mxu0 0.0
    %707 = vmatpush1.msra.mxu0 0.0
    %708 = vmatprep.subr.mxu0 0.0
    %709 = vmatpush1.msra.mxu0 0.0
    %710 = vmatprep.subr.mxu0 0.0
    %711 = vmatpush1.msra.mxu0 0.0
    %712 = vmatprep.subr.mxu0 0.0
    %713 = vmatpush1.msra.mxu0 0.0
    %714 = vmatprep.subr.mxu0 0.0
    %715 = vmatpush1.msra.mxu0 0.0
    %716 = vmatprep.subr.mxu0 0.0
    %717 = vmatpush1.msra.mxu0 0.0
    %718 = vmatprep.subr.mxu0 0.0
    %719 = vmatpush1.msra.mxu0 0.0
    %720 = vmatprep.subr.mxu0 0.0
    %721 = vmatpush1.msra.mxu0 0.0
    %722 = vmatprep.subr.mxu0 0.0
    %723 = vmatpush1.msra.mxu0 0.0
    %724 = vmatprep.subr.mxu0 0.0
    %725 = vmatpush1.msra.mxu0 0.0
    %726 = vmatprep.subr.mxu0 0.0
    %727 = vmatpush1.msra.mxu0 0.0
    %728 = vmatprep.subr.mxu0 0.0
    %729 = vmatpush1.msra.mxu0 0.0
    %730 = vmatprep.subr.mxu0 0.0
    %731 = vmatpush1.msra.mxu0 0.0
    %732 = vmatprep.subr.mxu0 0.0
    %733 = vmatpush1.msra.mxu0 0.0
    %734 = vmatprep.subr.mxu0 0.0
    %735 = vmatpush1.msra.mxu0 0.0
    %736 = vmatprep.subr.mxu0 0.0
    %737 = vmatpush1.msra.mxu0 0.0
    %738 = vmatprep.subr.mxu0 0.0
    %739 = vmatpush1.msra.mxu0 0.0
    %740 = vmatprep.subr.mxu0 0.0
    %741 = vmatpush1.msra.mxu0 0.0
    %742 = vmatprep.subr.mxu0 0.0
    %743 = vmatpush1.msra.mxu0 0.0
    %744 = vmatprep.subr.mxu0 0.0
    %745 = vmatpush1.msra.mxu0 0.0
    %746 = vmatprep.mubr.f32.mxu0 0.0
    %747 = vmatmul.mubr.f32.gmra.mrb[0].mxu0 %v680
    %v748 = vpop.f32.mrb[0].mxu0
    %v749 = vadd.f32 0.0, %v748
    %v750 = vpop.f32.mrb[0].mxu0
    %751 = vdwg.mxu0
    %753 = vrot.lane.b32.xlu0 %v749, 16
    %v754 = vpop.permute.xlu0 %753
    %vm756 = vcmask 195712
    %757 = vst.msk [vmem:[#allocation2] sm:$0xff] %vm756, %v754
    %758 = vrot.lane.b32.xlu0 %v152, 104
    %v759 = vpop.permute.xlu0 %758
    %760 = vrot.lane.b32.xlu0 %v152, 72
    %v761 = vpop.permute.xlu0 %760
    %v762 = vsel %vm168, %v759, 0
    %v764 = vsel %vm168, %v761, 0
    %766 = vmatprep.subr.mxu0 0.0
    %767 = vmatpush1.xpose.msra.mxu0 %v764
    %768 = vmatprep.subr.mxu0 0.0
    %769 = vmatpush1.xpose.msra.mxu0 0.0
    %770 = vmatprep.subr.mxu0 0.0
    %771 = vmatpush1.xpose.msra.mxu0 0.0
    %772 = vmatprep.subr.mxu0 0.0
    %773 = vmatpush1.xpose.msra.mxu0 0.0
    %774 = vmatprep.subr.mxu0 0.0
    %775 = vmatpush1.xpose.msra.mxu0 0.0
    %776 = vmatprep.subr.mxu0 0.0
    %777 = vmatpush1.xpose.msra.mxu0 0.0
    %778 = vmatprep.subr.mxu0 0.0
    %779 = vmatpush1.xpose.msra.mxu0 0.0
    %780 = vmatprep.subr.mxu0 0.0
    %781 = vmatpush1.xpose.msra.mxu0 0.0
    %782 = vmatprep.subr.mxu0 0.0
    %783 = vmatpush1.xpose.msra.mxu0 0.0
    %784 = vmatprep.subr.mxu0 0.0
    %785 = vmatpush1.xpose.msra.mxu0 0.0
    %786 = vmatprep.subr.mxu0 0.0
    %787 = vmatpush1.xpose.msra.mxu0 0.0
    %788 = vmatprep.subr.mxu0 0.0
    %789 = vmatpush1.xpose.msra.mxu0 0.0
    %790 = vmatprep.subr.mxu0 0.0
    %791 = vmatpush1.xpose.msra.mxu0 0.0
    %792 = vmatprep.subr.mxu0 0.0
    %793 = vmatpush1.xpose.msra.mxu0 0.0
    %794 = vmatprep.subr.mxu0 0.0
    %795 = vmatpush1.xpose.msra.mxu0 0.0
    %796 = vmatprep.subr.mxu0 0.0
    %797 = vmatpush1.xpose.msra.mxu0 0.0
    %798 = vmatprep.subr.mxu0 0.0
    %799 = vmatpush1.xpose.msra.mxu0 0.0
    %800 = vmatprep.subr.mxu0 0.0
    %801 = vmatpush1.xpose.msra.mxu0 0.0
    %802 = vmatprep.subr.mxu0 0.0
    %803 = vmatpush1.xpose.msra.mxu0 0.0
    %804 = vmatprep.subr.mxu0 0.0
    %805 = vmatpush1.xpose.msra.mxu0 0.0
    %806 = vmatprep.subr.mxu0 0.0
    %807 = vmatpush1.xpose.msra.mxu0 0.0
    %808 = vmatprep.subr.mxu0 0.0
    %809 = vmatpush1.xpose.msra.mxu0 0.0
    %810 = vmatprep.subr.mxu0 0.0
    %811 = vmatpush1.xpose.msra.mxu0 0.0
    %812 = vmatprep.subr.mxu0 0.0
    %813 = vmatpush1.xpose.msra.mxu0 0.0
    %814 = vmatprep.subr.mxu0 0.0
    %815 = vmatpush1.xpose.msra.mxu0 0.0
    %816 = vmatprep.subr.mxu0 0.0
    %817 = vmatpush1.xpose.msra.mxu0 0.0
    %818 = vmatprep.subr.mxu0 0.0
    %819 = vmatpush1.xpose.msra.mxu0 0.0
    %820 = vmatprep.subr.mxu0 0.0
    %821 = vmatpush1.xpose.msra.mxu0 0.0
    %822 = vmatprep.subr.mxu0 0.0
    %823 = vmatpush1.xpose.msra.mxu0 0.0
    %824 = vmatprep.subr.mxu0 0.0
    %825 = vmatpush1.xpose.msra.mxu0 0.0
    %826 = vmatprep.subr.mxu0 0.0
    %827 = vmatpush1.xpose.msra.mxu0 0.0
    %828 = vmatprep.subr.mxu0 0.0
    %829 = vmatpush1.xpose.msra.mxu0 0.0
    %830 = vmatprep.mubr.f32.mxu0 0.0
    %831 = vmatmul.mubr.f32.gmra.mrb[0].mxu0 %v762
    %v832 = vpop.f32.mrb[0].mxu0
    %v833 = vadd.f32 0.0, %v832
    %v834 = vpop.f32.mrb[0].mxu0
    %835 = vdwg.mxu0
    %v836 = vmul.f32 %v833, 0.35355338
    %v837 = vsel %vm164, %v836, -inf
    %v838 = vsel %vm168, %v837, -inf
    %839 = vmax.xlane.f32.xlu0 %v838
    %v840 = vpop.xlane.xlu0 %839
    %v841 = vsub.f32 %v837, %v840
    %v842 = vmul.f32 %v841, 1.442695
    %v843 = vpow.pop %v842
    %v844 = vsel %vm168, %v843, 0.0
    %845 = vadd.xlane.f32.xlu0 %v844
    %v846 = vpop.xlane.xlu0 %845
    %v847 = vrcp.pop %v846
    %v848 = vmul.f32 %v843, %v847
    %v849 = vsel %vm164, %v841, 0.0
    %v850 = vlog2.pop %v846
    %v851 = vmul.f32 %v850, 0.6931472
    %v852 = vsel %vm259, %v851, 0.0
    %853 = vadd.xlane.f32.xlu0 %v852
    %v854 = vpop.xlane.xlu0 %853
    %v855 = vrot.slane %v854, 4
    %v856 = vadd.f32 %v854, %v855
    %v857 = vrot.slane %v856, 2
    %v858 = vadd.f32 %v856, %v857
    %v859 = vrot.slane %v858, 1
    %v860 = vadd.f32 %v858, %v859
    %s861 = vtos %v860
    %v862 = vmul.f32 %v848, %v849
    %v863 = vsel %vm168, %v862, 0.0
    %864 = vadd.xlane.f32.xlu0 %v863
    %v865 = vpop.xlane.xlu0 %864
    %v866 = vrot.slane %v865, 4
    %v867 = vadd.f32 %v865, %v866
    %v868 = vrot.slane %v867, 2
    %v869 = vadd.f32 %v867, %v868
    %v870 = vrot.slane %v869, 1
    %v871 = vadd.f32 %v869, %v870
    %s872 = vtos %v871
    %s873 = ssub.f32 %s861, %s872
    %s874 = sadd.f32 %s675, %s873
    %875 = vrot.lane.b32.xlu0 %v152, 40
    %v876 = vpop.permute.xlu0 %875
    %v879 = vsel %vm168, %v848, 0
    %881 = vmatprep.subr.mxu0 0.0
    %882 = vmatpush1.msra.mxu0 %v876
    %883 = vmatprep.subr.mxu0 0.0
    %884 = vmatpush1.msra.mxu0 0.0
    %885 = vmatprep.subr.mxu0 0.0
    %886 = vmatpush1.msra.mxu0 0.0
    %887 = vmatprep.subr.mxu0 0.0
    %888 = vmatpush1.msra.mxu0 0.0
    %889 = vmatprep.subr.mxu0 0.0
    %890 = vmatpush1.msra.mxu0 0.0
    %891 = vmatprep.subr.mxu0 0.0
    %892 = vmatpush1.msra.mxu0 0.0
    %893 = vmatprep.subr.mxu0 0.0
    %894 = vmatpush1.msra.mxu0 0.0
    %895 = vmatprep.subr.mxu0 0.0
    %896 = vmatpush1.msra.mxu0 0.0
    %897 = vmatprep.subr.mxu0 0.0
    %898 = vmatpush1.msra.mxu0 0.0
    %899 = vmatprep.subr.mxu0 0.0
    %900 = vmatpush1.msra.mxu0 0.0
    %901 = vmatprep.subr.mxu0 0.0
    %902 = vmatpush1.msra.mxu0 0.0
    %903 = vmatprep.subr.mxu0 0.0
    %904 = vmatpush1.msra.mxu0 0.0
    %905 = vmatprep.subr.mxu0 0.0
    %906 = vmatpush1.msra.mxu0 0.0
    %907 = vmatprep.subr.mxu0 0.0
    %908 = vmatpush1.msra.mxu0 0.0
    %909 = vmatprep.subr.mxu0 0.0
    %910 = vmatpush1.msra.mxu0 0.0
    %911 = vmatprep.subr.mxu0 0.0
    %912 = vmatpush1.msra.mxu0 0.0
    %913 = vmatprep.subr.mxu0 0.0
    %914 = vmatpush1.msra.mxu0 0.0
    %915 = vmatprep.subr.mxu0 0.0
    %916 = vmatpush1.msra.mxu0 0.0
    %917 = vmatprep.subr.mxu0 0.0
    %918 = vmatpush1.msra.mxu0 0.0
    %919 = vmatprep.subr.mxu0 0.0
    %920 = vmatpush1.msra.mxu0 0.0
    %921 = vmatprep.subr.mxu0 0.0
    %922 = vmatpush1.msra.mxu0 0.0
    %923 = vmatprep.subr.mxu0 0.0
    %924 = vmatpush1.msra.mxu0 0.0
    %925 = vmatprep.subr.mxu0 0.0
    %926 = vmatpush1.msra.mxu0 0.0
    %927 = vmatprep.subr.mxu0 0.0
    %928 = vmatpush1.msra.mxu0 0.0
    %929 = vmatprep.subr.mxu0 0.0
    %930 = vmatpush1.msra.mxu0 0.0
    %931 = vmatprep.subr.mxu0 0.0
    %932 = vmatpush1.msra.mxu0 0.0
    %933 = vmatprep.subr.mxu0 0.0
    %934 = vmatpush1.msra.mxu0 0.0
    %935 = vmatprep.subr.mxu0 0.0
    %936 = vmatpush1.msra.mxu0 0.0
    %937 = vmatprep.subr.mxu0 0.0
    %938 = vmatpush1.msra.mxu0 0.0
    %939 = vmatprep.subr.mxu0 0.0
    %940 = vmatpush1.msra.mxu0 0.0
    %941 = vmatprep.subr.mxu0 0.0
    %942 = vmatpush1.msra.mxu0 0.0
    %943 = vmatprep.subr.mxu0 0.0
    %944 = vmatpush1.msra.mxu0 0.0
    %945 = vmatprep.mubr.f32.mxu0 0.0
    %946 = vmatmul.mubr.f32.gmra.mrb[0].mxu0 %v879
    %v947 = vpop.f32.mrb[0].mxu0
    %v948 = vadd.f32 0.0, %v947
    %v949 = vpop.f32.mrb[0].mxu0
    %950 = vdwg.mxu0
    %952 = vrot.lane.b32.xlu0 %v948, 24
    %v953 = vpop.permute.xlu0 %952
    %vm955 = vcmask 261312
    %956 = vst.msk [vmem:[#allocation2] sm:$0xff] %vm955, %v953
    %958 = vrot.lane.b32.xlu0 %v157, 96
    %v959 = vpop.permute.xlu0 %958
    %v960 = vsel %vm168, %v157, 0
    %v962 = vsel %vm168, %v959, 0
    %964 = vmatprep.subr.mxu0 0.0
    %965 = vmatpush1.xpose.msra.mxu0 %v962
    %966 = vmatprep.subr.mxu0 0.0
    %967 = vmatpush1.xpose.msra.mxu0 0.0
    %968 = vmatprep.subr.mxu0 0.0
    %969 = vmatpush1.xpose.msra.mxu0 0.0
    %970 = vmatprep.subr.mxu0 0.0
    %971 = vmatpush1.xpose.msra.mxu0 0.0
    %972 = vmatprep.subr.mxu0 0.0
    %973 = vmatpush1.xpose.msra.mxu0 0.0
    %974 = vmatprep.subr.mxu0 0.0
    %975 = vmatpush1.xpose.msra.mxu0 0.0
    %976 = vmatprep.subr.mxu0 0.0
    %977 = vmatpush1.xpose.msra.mxu0 0.0
    %978 = vmatprep.subr.mxu0 0.0
    %979 = vmatpush1.xpose.msra.mxu0 0.0
    %980 = vmatprep.subr.mxu0 0.0
    %981 = vmatpush1.xpose.msra.mxu0 0.0
    %982 = vmatprep.subr.mxu0 0.0
    %983 = vmatpush1.xpose.msra.mxu0 0.0
    %984 = vmatprep.subr.mxu0 0.0
    %985 = vmatpush1.xpose.msra.mxu0 0.0
    %986 = vmatprep.subr.mxu0 0.0
    %987 = vmatpush1.xpose.msra.mxu0 0.0
    %988 = vmatprep.subr.mxu0 0.0
    %989 = vmatpush1.xpose.msra.mxu0 0.0
    %990 = vmatprep.subr.mxu0 0.0
    %991 = vmatpush1.xpose.msra.mxu0 0.0
    %992 = vmatprep.subr.mxu0 0.0
    %993 = vmatpush1.xpose.msra.mxu0 0.0
    %994 = vmatprep.subr.mxu0 0.0
    %995 = vmatpush1.xpose.msra.mxu0 0.0
    %996 = vmatprep.subr.mxu0 0.0
    %997 = vmatpush1.xpose.msra.mxu0 0.0
    %998 = vmatprep.subr.mxu0 0.0
    %999 = vmatpush1.xpose.msra.mxu0 0.0
    %1000 = vmatprep.subr.mxu0 0.0
    %1001 = vmatpush1.xpose.msra.mxu0 0.0
    %1002 = vmatprep.subr.mxu0 0.0
    %1003 = vmatpush1.xpose.msra.mxu0 0.0
    %1004 = vmatprep.subr.mxu0 0.0
    %1005 = vmatpush1.xpose.msra.mxu0 0.0
    %1006 = vmatprep.subr.mxu0 0.0
    %1007 = vmatpush1.xpose.msra.mxu0 0.0
    %1008 = vmatprep.subr.mxu0 0.0
    %1009 = vmatpush1.xpose.msra.mxu0 0.0
    %1010 = vmatprep.subr.mxu0 0.0
    %1011 = vmatpush1.xpose.msra.mxu0 0.0
    %1012 = vmatprep.subr.mxu0 0.0
    %1013 = vmatpush1.xpose.msra.mxu0 0.0
    %1014 = vmatprep.subr.mxu0 0.0
    %1015 = vmatpush1.xpose.msra.mxu0 0.0
    %1016 = vmatprep.subr.mxu0 0.0
    %1017 = vmatpush1.xpose.msra.mxu0 0.0
    %1018 = vmatprep.subr.mxu0 0.0
    %1019 = vmatpush1.xpose.msra.mxu0 0.0
    %1020 = vmatprep.subr.mxu0 0.0
    %1021 = vmatpush1.xpose.msra.mxu0 0.0
    %1022 = vmatprep.subr.mxu0 0.0
    %1023 = vmatpush1.xpose.msra.mxu0 0.0
    %1024 = vmatprep.subr.mxu0 0.0
    %1025 = vmatpush1.xpose.msra.mxu0 0.0
    %1026 = vmatprep.subr.mxu0 0.0
    %1027 = vmatpush1.xpose.msra.mxu0 0.0
    %1028 = vmatprep.mubr.f32.mxu0 0.0
    %1029 = vmatmul.mubr.f32.gmra.mrb[0].mxu0 %v960
    %v1030 = vpop.f32.mrb[0].mxu0
    %v1031 = vadd.f32 0.0, %v1030
    %v1032 = vpop.f32.mrb[0].mxu0
    %1033 = vdwg.mxu0
    %v1034 = vmul.f32 %v1031, 0.35355338
    %v1035 = vsel %vm164, %v1034, -inf
    %v1036 = vsel %vm168, %v1035, -inf
    %1037 = vmax.xlane.f32.xlu0 %v1036
    %v1038 = vpop.xlane.xlu0 %1037
    %v1039 = vsub.f32 %v1035, %v1038
    %v1040 = vmul.f32 %v1039, 1.442695
    %v1041 = vpow.pop %v1040
    %v1042 = vsel %vm168, %v1041, 0.0
    %1043 = vadd.xlane.f32.xlu0 %v1042
    %v1044 = vpop.xlane.xlu0 %1043
    %v1045 = vrcp.pop %v1044
    %v1046 = vmul.f32 %v1041, %v1045
    %v1047 = vsel %vm164, %v1039, 0.0
    %v1048 = vlog2.pop %v1044
    %v1049 = vmul.f32 %v1048, 0.6931472
    %v1050 = vsel %vm259, %v1049, 0.0
    %1051 = vadd.xlane.f32.xlu0 %v1050
    %v1052 = vpop.xlane.xlu0 %1051
    %v1053 = vrot.slane %v1052, 4
    %v1054 = vadd.f32 %v1052, %v1053
    %v1055 = vrot.slane %v1054, 2
    %v1056 = vadd.f32 %v1054, %v1055
    %v1057 = vrot.slane %v1056, 1
    %v1058 = vadd.f32 %v1056, %v1057
    %s1059 = vtos %v1058
    %v1060 = vmul.f32 %v1046, %v1047
    %v1061 = vsel %vm168, %v1060, 0.0
    %1062 = vadd.xlane.f32.xlu0 %v1061
    %v1063 = vpop.xlane.xlu0 %1062
    %v1064 = vrot.slane %v1063, 4
    %v1065 = vadd.f32 %v1063, %v1064
    %v1066 = vrot.slane %v1065, 2
    %v1067 = vadd.f32 %v1065, %v1066
    %v1068 = vrot.slane %v1067, 1
    %v1069 = vadd.f32 %v1067, %v1068
    %s1070 = vtos %v1069
    %s1071 = ssub.f32 %s1059, %s1070
    %s1072 = sadd.f32 %s874, %s1071
    %1073 = vrot.lane.b32.xlu0 %v157, 64
    %v1074 = vpop.permute.xlu0 %1073
    %v1077 = vsel %vm168, %v1046, 0
    %1079 = vmatprep.subr.mxu0 0.0
    %1080 = vmatpush1.msra.mxu0 %v1074
    %1081 = vmatprep.subr.mxu0 0.0
    %1082 = vmatpush1.msra.mxu0 0.0
    %1083 = vmatprep.subr.mxu0 0.0
    %1084 = vmatpush1.msra.mxu0 0.0
    %1085 = vmatprep.subr.mxu0 0.0
    %1086 = vmatpush1.msra.mxu0 0.0
    %1087 = vmatprep.subr.mxu0 0.0
    %1088 = vmatpush1.msra.mxu0 0.0
    %1089 = vmatprep.subr.mxu0 0.0
    %1090 = vmatpush1.msra.mxu0 0.0
    %1091 = vmatprep.subr.mxu0 0.0
    %1092 = vmatpush1.msra.mxu0 0.0
    %1093 = vmatprep.subr.mxu0 0.0
    %1094 = vmatpush1.msra.mxu0 0.0
    %1095 = vmatprep.subr.mxu0 0.0
    %1096 = vmatpush1.msra.mxu0 0.0
    %1097 = vmatprep.subr.mxu0 0.0
    %1098 = vmatpush1.msra.mxu0 0.0
    %1099 = vmatprep.subr.mxu0 0.0
    %1100 = vmatpush1.msra.mxu0 0.0
    %1101 = vmatprep.subr.mxu0 0.0
    %1102 = vmatpush1.msra.mxu0 0.0
    %1103 = vmatprep.subr.mxu0 0.0
    %1104 = vmatpush1.msra.mxu0 0.0
    %1105 = vmatprep.subr.mxu0 0.0
    %1106 = vmatpush1.msra.mxu0 0.0
    %1107 = vmatprep.subr.mxu0 0.0
    %1108 = vmatpush1.msra.mxu0 0.0
    %1109 = vmatprep.subr.mxu0 0.0
    %1110 = vmatpush1.msra.mxu0 0.0
    %1111 = vmatprep.subr.mxu0 0.0
    %1112 = vmatpush1.msra.mxu0 0.0
    %1113 = vmatprep.subr.mxu0 0.0
    %1114 = vmatpush1.msra.mxu0 0.0
    %1115 = vmatprep.subr.mxu0 0.0
    %1116 = vmatpush1.msra.mxu0 0.0
    %1117 = vmatprep.subr.mxu0 0.0
    %1118 = vmatpush1.msra.mxu0 0.0
    %1119 = vmatprep.subr.mxu0 0.0
    %1120 = vmatpush1.msra.mxu0 0.0
    %1121 = vmatprep.subr.mxu0 0.0
    %1122 = vmatpush1.msra.mxu0 0.0
    %1123 = vmatprep.subr.mxu0 0.0
    %1124 = vmatpush1.msra.mxu0 0.0
    %1125 = vmatprep.subr.mxu0 0.0
    %1126 = vmatpush1.msra.mxu0 0.0
    %1127 = vmatprep.subr.mxu0 0.0
    %1128 = vmatpush1.msra.mxu0 0.0
    %1129 = vmatprep.subr.mxu0 0.0
    %1130 = vmatpush1.msra.mxu0 0.0
    %1131 = vmatprep.subr.mxu0 0.0
    %1132 = vmatpush1.msra.mxu0 0.0
    %1133 = vmatprep.subr.mxu0 0.0
    %1134 = vmatpush1.msra.mxu0 0.0
    %1135 = vmatprep.subr.mxu0 0.0
    %1136 = vmatpush1.msra.mxu0 0.0
    %1137 = vmatprep.subr.mxu0 0.0
    %1138 = vmatpush1.msra.mxu0 0.0
    %1139 = vmatprep.subr.mxu0 0.0
    %1140 = vmatpush1.msra.mxu0 0.0
    %1141 = vmatprep.subr.mxu0 0.0
    %1142 = vmatpush1.msra.mxu0 0.0
    %1143 = vmatprep.mubr.f32.mxu0 0.0
    %1144 = vmatmul.mubr.f32.gmra.mrb[0].mxu0 %v1077
    %v1145 = vpop.f32.mrb[0].mxu0
    %v1146 = vadd.f32 0.0, %v1145
    %v1147 = vpop.f32.mrb[0].mxu0
    %1148 = vdwg.mxu0
    %1149 = vst.msk [vmem:[#allocation2 + $0x8] sm:$0xff] %vm168, %v1146
    %1150 = vrot.lane.b32.xlu0 %v157, 120
    %v1151 = vpop.permute.xlu0 %1150
    %1152 = vrot.lane.b32.xlu0 %v157, 88
    %v1153 = vpop.permute.xlu0 %1152
    %v1154 = vsel %vm168, %v1151, 0
    %v1156 = vsel %vm168, %v1153, 0
    %1158 = vmatprep.subr.mxu0 0.0
    %1159 = vmatpush1.xpose.msra.mxu0 %v1156
    %1160 = vmatprep.subr.mxu0 0.0
    %1161 = vmatpush1.xpose.msra.mxu0 0.0
    %1162 = vmatprep.subr.mxu0 0.0
    %1163 = vmatpush1.xpose.msra.mxu0 0.0
    %1164 = vmatprep.subr.mxu0 0.0
    %1165 = vmatpush1.xpose.msra.mxu0 0.0
    %1166 = vmatprep.subr.mxu0 0.0
    %1167 = vmatpush1.xpose.msra.mxu0 0.0
    %1168 = vmatprep.subr.mxu0 0.0
    %1169 = vmatpush1.xpose.msra.mxu0 0.0
    %1170 = vmatprep.subr.mxu0 0.0
    %1171 = vmatpush1.xpose.msra.mxu0 0.0
    %1172 = vmatprep.subr.mxu0 0.0
    %1173 = vmatpush1.xpose.msra.mxu0 0.0
    %1174 = vmatprep.subr.mxu0 0.0
    %1175 = vmatpush1.xpose.msra.mxu0 0.0
    %1176 = vmatprep.subr.mxu0 0.0
    %1177 = vmatpush1.xpose.msra.mxu0 0.0
    %1178 = vmatprep.subr.mxu0 0.0
    %1179 = vmatpush1.xpose.msra.mxu0 0.0
    %1180 = vmatprep.subr.mxu0 0.0
    %1181 = vmatpush1.xpose.msra.mxu0 0.0
    %1182 = vmatprep.subr.mxu0 0.0
    %1183 = vmatpush1.xpose.msra.mxu0 0.0
    %1184 = vmatprep.subr.mxu0 0.0
    %1185 = vmatpush1.xpose.msra.mxu0 0.0
    %1186 = vmatprep.subr.mxu0 0.0
    %1187 = vmatpush1.xpose.msra.mxu0 0.0
    %1188 = vmatprep.subr.mxu0 0.0
    %1189 = vmatpush1.xpose.msra.mxu0 0.0
    %1190 = vmatprep.subr.mxu0 0.0
    %1191 = vmatpush1.xpose.msra.mxu0 0.0
    %1192 = vmatprep.subr.mxu0 0.0
    %1193 = vmatpush1.xpose.msra.mxu0 0.0
    %1194 = vmatprep.subr.mxu0 0.0
    %1195 = vmatpush1.xpose.msra.mxu0 0.0
    %1196 = vmatprep.subr.mxu0 0.0
    %1197 = vmatpush1.xpose.msra.mxu0 0.0
    %1198 = vmatprep.subr.mxu0 0.0
    %1199 = vmatpush1.xpose.msra.mxu0 0.0
    %1200 = vmatprep.subr.mxu0 0.0
    %1201 = vmatpush1.xpose.msra.mxu0 0.0
    %1202 = vmatprep.subr.mxu0 0.0
    %1203 = vmatpush1.xpose.msra.mxu0 0.0
    %1204 = vmatprep.subr.mxu0 0.0
    %1205 = vmatpush1.xpose.msra.mxu0 0.0
    %1206 = vmatprep.subr.mxu0 0.0
    %1207 = vmatpush1.xpose.msra.mxu0 0.0
    %1208 = vmatprep.subr.mxu0 0.0
    %1209 = vmatpush1.xpose.msra.mxu0 0.0
    %1210 = vmatprep.subr.mxu0 0.0
    %1211 = vmatpush1.xpose.msra.mxu0 0.0
    %1212 = vmatprep.subr.mxu0 0.0
    %1213 = vmatpush1.xpose.msra.mxu0 0.0
    %1214 = vmatprep.subr.mxu0 0.0
    %1215 = vmatpush1.xpose.msra.mxu0 0.0
    %1216 = vmatprep.subr.mxu0 0.0
    %1217 = vmatpush1.xpose.msra.mxu0 0.0
    %1218 = vmatprep.subr.mxu0 0.0
    %1219 = vmatpush1.xpose.msra.mxu0 0.0
    %1220 = vmatprep.subr.mxu0 0.0
    %1221 = vmatpush1.xpose.msra.mxu0 0.0
    %1222 = vmatprep.mubr.f32.mxu0 0.0
    %1223 = vmatmul.mubr.f32.gmra.mrb[0].mxu0 %v1154
    %v1224 = vpop.f32.mrb[0].mxu0
    %v1225 = vadd.f32 0.0, %v1224
    %v1226 = vpop.f32.mrb[0].mxu0
    %1227 = vdwg.mxu0
    %v1228 = vmul.f32 %v1225, 0.35355338
    %v1229 = vsel %vm164, %v1228, -inf
    %v1230 = vsel %vm168, %v1229, -inf
    %1231 = vmax.xlane.f32.xlu0 %v1230
    %v1232 = vpop.xlane.xlu0 %1231
    %v1233 = vsub.f32 %v1229, %v1232
    %v1234 = vmul.f32 %v1233, 1.442695
    %v1235 = vpow.pop %v1234
    %v1236 = vsel %vm168, %v1235, 0.0
    %1237 = vadd.xlane.f32.xlu0 %v1236
    %v1238 = vpop.xlane.xlu0 %1237
    %v1239 = vrcp.pop %v1238
    %v1240 = vmul.f32 %v1235, %v1239
    %v1241 = vsel %vm164, %v1233, 0.0
    %v1242 = vlog2.pop %v1238
    %v1243 = vmul.f32 %v1242, 0.6931472
    %v1244 = vsel %vm259, %v1243, 0.0
    %1245 = vadd.xlane.f32.xlu0 %v1244
    %v1246 = vpop.xlane.xlu0 %1245
    %v1247 = vrot.slane %v1246, 4
    %v1248 = vadd.f32 %v1246, %v1247
    %v1249 = vrot.slane %v1248, 2
    %v1250 = vadd.f32 %v1248, %v1249
    %v1251 = vrot.slane %v1250, 1
    %v1252 = vadd.f32 %v1250, %v1251
    %s1253 = vtos %v1252
    %v1254 = vmul.f32 %v1240, %v1241
    %v1255 = vsel %vm168, %v1254, 0.0
    %1256 = vadd.xlane.f32.xlu0 %v1255
    %v1257 = vpop.xlane.xlu0 %1256
    %v1258 = vrot.slane %v1257, 4
    %v1259 = vadd.f32 %v1257, %v1258
    %v1260 = vrot.slane %v1259, 2
    %v1261 = vadd.f32 %v1259, %v1260
    %v1262 = vrot.slane %v1261, 1
    %v1263 = vadd.f32 %v1261, %v1262
    %s1264 = vtos %v1263
    %s1265 = ssub.f32 %s1253, %s1264
    %s1266 = sadd.f32 %s1072, %s1265
    %1267 = vrot.lane.b32.xlu0 %v157, 56
    %v1268 = vpop.permute.xlu0 %1267
    %v1271 = vsel %vm168, %v1240, 0
    %1273 = vmatprep.subr.mxu0 0.0
    %1274 = vmatpush1.msra.mxu0 %v1268
    %1275 = vmatprep.subr.mxu0 0.0
    %1276 = vmatpush1.msra.mxu0 0.0
    %1277 = vmatprep.subr.mxu0 0.0
    %1278 = vmatpush1.msra.mxu0 0.0
    %1279 = vmatprep.subr.mxu0 0.0
    %1280 = vmatpush1.msra.mxu0 0.0
    %1281 = vmatprep.subr.mxu0 0.0
    %1282 = vmatpush1.msra.mxu0 0.0
    %1283 = vmatprep.subr.mxu0 0.0
    %1284 = vmatpush1.msra.mxu0 0.0
    %1285 = vmatprep.subr.mxu0 0.0
    %1286 = vmatpush1.msra.mxu0 0.0
    %1287 = vmatprep.subr.mxu0 0.0
    %1288 = vmatpush1.msra.mxu0 0.0
    %1289 = vmatprep.subr.mxu0 0.0
    %1290 = vmatpush1.msra.mxu0 0.0
    %1291 = vmatprep.subr.mxu0 0.0
    %1292 = vmatpush1.msra.mxu0 0.0
    %1293 = vmatprep.subr.mxu0 0.0
    %1294 = vmatpush1.msra.mxu0 0.0
    %1295 = vmatprep.subr.mxu0 0.0
    %1296 = vmatpush1.msra.mxu0 0.0
    %1297 = vmatprep.subr.mxu0 0.0
    %1298 = vmatpush1.msra.mxu0 0.0
    %1299 = vmatprep.subr.mxu0 0.0
    %1300 = vmatpush1.msra.mxu0 0.0
    %1301 = vmatprep.subr.mxu0 0.0
    %1302 = vmatpush1.msra.mxu0 0.0
    %1303 = vmatprep.subr.mxu0 0.0
    %1304 = vmatpush1.msra.mxu0 0.0
    %1305 = vmatprep.subr.mxu0 0.0
    %1306 = vmatpush1.msra.mxu0 0.0
    %1307 = vmatprep.subr.mxu0 0.0
    %1308 = vmatpush1.msra.mxu0 0.0
    %1309 = vmatprep.subr.mxu0 0.0
    %1310 = vmatpush1.msra.mxu0 0.0
    %1311 = vmatprep.subr.mxu0 0.0
    %1312 = vmatpush1.msra.mxu0 0.0
    %1313 = vmatprep.subr.mxu0 0.0
    %1314 = vmatpush1.msra.mxu0 0.0
    %1315 = vmatprep.subr.mxu0 0.0
    %1316 = vmatpush1.msra.mxu0 0.0
    %1317 = vmatprep.subr.mxu0 0.0
    %1318 = vmatpush1.msra.mxu0 0.0
    %1319 = vmatprep.subr.mxu0 0.0
    %1320 = vmatpush1.msra.mxu0 0.0
    %1321 = vmatprep.subr.mxu0 0.0
    %1322 = vmatpush1.msra.mxu0 0.0
    %1323 = vmatprep.subr.mxu0 0.0
    %1324 = vmatpush1.msra.mxu0 0.0
    %1325 = vmatprep.subr.mxu0 0.0
    %1326 = vmatpush1.msra.mxu0 0.0
    %1327 = vmatprep.subr.mxu0 0.0
    %1328 = vmatpush1.msra.mxu0 0.0
    %1329 = vmatprep.subr.mxu0 0.0
    %1330 = vmatpush1.msra.mxu0 0.0
    %1331 = vmatprep.subr.mxu0 0.0
    %1332 = vmatpush1.msra.mxu0 0.0
    %1333 = vmatprep.subr.mxu0 0.0
    %1334 = vmatpush1.msra.mxu0 0.0
    %1335 = vmatprep.subr.mxu0 0.0
    %1336 = vmatpush1.msra.mxu0 0.0
    %1337 = vmatprep.mubr.f32.mxu0 0.0
    %1338 = vmatmul.mubr.f32.gmra.mrb[0].mxu0 %v1271
    %v1339 = vpop.f32.mrb[0].mxu0
    %v1340 = vadd.f32 0.0, %v1339
    %v1341 = vpop.f32.mrb[0].mxu0
    %1342 = vdwg.mxu0
    %1344 = vrot.lane.b32.xlu0 %v1340, 8
    %v1345 = vpop.permute.xlu0 %1344
    %1347 = vst.msk [vmem:[#allocation2 + $0x8] sm:$0xff] %vm557, %v1345
    %1348 = vrot.lane.b32.xlu0 %v157, 112
    %v1349 = vpop.permute.xlu0 %1348
    %1350 = vrot.lane.b32.xlu0 %v157, 80
    %v1351 = vpop.permute.xlu0 %1350
    %v1352 = vsel %vm168, %v1349, 0
    %v1354 = vsel %vm168, %v1351, 0
    %1356 = vmatprep.subr.mxu0 0.0
    %1357 = vmatpush1.xpose.msra.mxu0 %v1354
    %1358 = vmatprep.subr.mxu0 0.0
    %1359 = vmatpush1.xpose.msra.mxu0 0.0
    %1360 = vmatprep.subr.mxu0 0.0
    %1361 = vmatpush1.xpose.msra.mxu0 0.0
    %1362 = vmatprep.subr.mxu0 0.0
    %1363 = vmatpush1.xpose.msra.mxu0 0.0
    %1364 = vmatprep.subr.mxu0 0.0
    %1365 = vmatpush1.xpose.msra.mxu0 0.0
    %1366 = vmatprep.subr.mxu0 0.0
    %1367 = vmatpush1.xpose.msra.mxu0 0.0
    %1368 = vmatprep.subr.mxu0 0.0
    %1369 = vmatpush1.xpose.msra.mxu0 0.0
    %1370 = vmatprep.subr.mxu0 0.0
    %1371 = vmatpush1.xpose.msra.mxu0 0.0
    %1372 = vmatprep.subr.mxu0 0.0
    %1373 = vmatpush1.xpose.msra.mxu0 0.0
    %1374 = vmatprep.subr.mxu0 0.0
    %1375 = vmatpush1.xpose.msra.mxu0 0.0
    %1376 = vmatprep.subr.mxu0 0.0
    %1377 = vmatpush1.xpose.msra.mxu0 0.0
    %1378 = vmatprep.subr.mxu0 0.0
    %1379 = vmatpush1.xpose.msra.mxu0 0.0
    %1380 = vmatprep.subr.mxu0 0.0
    %1381 = vmatpush1.xpose.msra.mxu0 0.0
    %1382 = vmatprep.subr.mxu0 0.0
    %1383 = vmatpush1.xpose.msra.mxu0 0.0
    %1384 = vmatprep.subr.mxu0 0.0
    %1385 = vmatpush1.xpose.msra.mxu0 0.0
    %1386 = vmatprep.subr.mxu0 0.0
    %1387 = vmatpush1.xpose.msra.mxu0 0.0
    %1388 = vmatprep.subr.mxu0 0.0
    %1389 = vmatpush1.xpose.msra.mxu0 0.0
    %1390 = vmatprep.subr.mxu0 0.0
    %1391 = vmatpush1.xpose.msra.mxu0 0.0
    %1392 = vmatprep.subr.mxu0 0.0
    %1393 = vmatpush1.xpose.msra.mxu0 0.0
    %1394 = vmatprep.subr.mxu0 0.0
    %1395 = vmatpush1.xpose.msra.mxu0 0.0
    %1396 = vmatprep.subr.mxu0 0.0
    %1397 = vmatpush1.xpose.msra.mxu0 0.0
    %1398 = vmatprep.subr.mxu0 0.0
    %1399 = vmatpush1.xpose.msra.mxu0 0.0
    %1400 = vmatprep.subr.mxu0 0.0
    %1401 = vmatpush1.xpose.msra.mxu0 0.0
    %1402 = vmatprep.subr.mxu0 0.0
    %1403 = vmatpush1.xpose.msra.mxu0 0.0
    %1404 = vmatprep.subr.mxu0 0.0
    %1405 = vmatpush1.xpose.msra.mxu0 0.0
    %1406 = vmatprep.subr.mxu0 0.0
    %1407 = vmatpush1.xpose.msra.mxu0 0.0
    %1408 = vmatprep.subr.mxu0 0.0
    %1409 = vmatpush1.xpose.msra.mxu0 0.0
    %1410 = vmatprep.subr.mxu0 0.0
    %1411 = vmatpush1.xpose.msra.mxu0 0.0
    %1412 = vmatprep.subr.mxu0 0.0
    %1413 = vmatpush1.xpose.msra.mxu0 0.0
    %1414 = vmatprep.subr.mxu0 0.0
    %1415 = vmatpush1.xpose.msra.mxu0 0.0
    %1416 = vmatprep.subr.mxu0 0.0
    %1417 = vmatpush1.xpose.msra.mxu0 0.0
    %1418 = vmatprep.subr.mxu0 0.0
    %1419 = vmatpush1.xpose.msra.mxu0 0.0
    %1420 = vmatprep.mubr.f32.mxu0 0.0
    %1421 = vmatmul.mubr.f32.gmra.mrb[0].mxu0 %v1352
    %v1422 = vpop.f32.mrb[0].mxu0
    %v1423 = vadd.f32 0.0, %v1422
    %v1424 = vpop.f32.mrb[0].mxu0
    %1425 = vdwg.mxu0
    %v1426 = vmul.f32 %v1423, 0.35355338
    %v1427 = vsel %vm164, %v1426, -inf
    %v1428 = vsel %vm168, %v1427, -inf
    %1429 = vmax.xlane.f32.xlu0 %v1428
    %v1430 = vpop.xlane.xlu0 %1429
    %v1431 = vsub.f32 %v1427, %v1430
    %v1432 = vmul.f32 %v1431, 1.442695
    %v1433 = vpow.pop %v1432
    %v1434 = vsel %vm168, %v1433, 0.0
    %1435 = vadd.xlane.f32.xlu0 %v1434
    %v1436 = vpop.xlane.xlu0 %1435
    %v1437 = vrcp.pop %v1436
    %v1438 = vmul.f32 %v1433, %v1437
    %v1439 = vsel %vm164, %v1431, 0.0
    %v1440 = vlog2.pop %v1436
    %v1441 = vmul.f32 %v1440, 0.6931472
    %v1442 = vsel %vm259, %v1441, 0.0
    %1443 = vadd.xlane.f32.xlu0 %v1442
    %v1444 = vpop.xlane.xlu0 %1443
    %v1445 = vrot.slane %v1444, 4
    %v1446 = vadd.f32 %v1444, %v1445
    %v1447 = vrot.slane %v1446, 2
    %v1448 = vadd.f32 %v1446, %v1447
    %v1449 = vrot.slane %v1448, 1
    %v1450 = vadd.f32 %v1448, %v1449
    %s1451 = vtos %v1450
    %v1452 = vmul.f32 %v1438, %v1439
    %v1453 = vsel %vm168, %v1452, 0.0
    %1454 = vadd.xlane.f32.xlu0 %v1453
    %v1455 = vpop.xlane.xlu0 %1454
    %v1456 = vrot.slane %v1455, 4
    %v1457 = vadd.f32 %v1455, %v1456
    %v1458 = vrot.slane %v1457, 2
    %v1459 = vadd.f32 %v1457, %v1458
    %v1460 = vrot.slane %v1459, 1
    %v1461 = vadd.f32 %v1459, %v1460
    %s1462 = vtos %v1461
    %s1463 = ssub.f32 %s1451, %s1462
    %s1464 = sadd.f32 %s1266, %s1463
    %1465 = vrot.lane.b32.xlu0 %v157, 48
    %v1466 = vpop.permute.xlu0 %1465
    %v1469 = vsel %vm168, %v1438, 0
    %1471 = vmatprep.subr.mxu0 0.0
    %1472 = vmatpush1.msra.mxu0 %v1466
    %1473 = vmatprep.subr.mxu0 0.0
    %1474 = vmatpush1.msra.mxu0 0.0
    %1475 = vmatprep.subr.mxu0 0.0
    %1476 = vmatpush1.msra.mxu0 0.0
    %1477 = vmatprep.subr.mxu0 0.0
    %1478 = vmatpush1.msra.mxu0 0.0
    %1479 = vmatprep.subr.mxu0 0.0
    %1480 = vmatpush1.msra.mxu0 0.0
    %1481 = vmatprep.subr.mxu0 0.0
    %1482 = vmatpush1.msra.mxu0 0.0
    %1483 = vmatprep.subr.mxu0 0.0
    %1484 = vmatpush1.msra.mxu0 0.0
    %1485 = vmatprep.subr.mxu0 0.0
    %1486 = vmatpush1.msra.mxu0 0.0
    %1487 = vmatprep.subr.mxu0 0.0
    %1488 = vmatpush1.msra.mxu0 0.0
    %1489 = vmatprep.subr.mxu0 0.0
    %1490 = vmatpush1.msra.mxu0 0.0
    %1491 = vmatprep.subr.mxu0 0.0
    %1492 = vmatpush1.msra.mxu0 0.0
    %1493 = vmatprep.subr.mxu0 0.0
    %1494 = vmatpush1.msra.mxu0 0.0
    %1495 = vmatprep.subr.mxu0 0.0
    %1496 = vmatpush1.msra.mxu0 0.0
    %1497 = vmatprep.subr.mxu0 0.0
    %1498 = vmatpush1.msra.mxu0 0.0
    %1499 = vmatprep.subr.mxu0 0.0
    %1500 = vmatpush1.msra.mxu0 0.0
    %1501 = vmatprep.subr.mxu0 0.0
    %1502 = vmatpush1.msra.mxu0 0.0
    %1503 = vmatprep.subr.mxu0 0.0
    %1504 = vmatpush1.msra.mxu0 0.0
    %1505 = vmatprep.subr.mxu0 0.0
    %1506 = vmatpush1.msra.mxu0 0.0
    %1507 = vmatprep.subr.mxu0 0.0
    %1508 = vmatpush1.msra.mxu0 0.0
    %1509 = vmatprep.subr.mxu0 0.0
    %1510 = vmatpush1.msra.mxu0 0.0
    %1511 = vmatprep.subr.mxu0 0.0
    %1512 = vmatpush1.msra.mxu0 0.0
    %1513 = vmatprep.subr.mxu0 0.0
    %1514 = vmatpush1.msra.mxu0 0.0
    %1515 = vmatprep.subr.mxu0 0.0
    %1516 = vmatpush1.msra.mxu0 0.0
    %1517 = vmatprep.subr.mxu0 0.0
    %1518 = vmatpush1.msra.mxu0 0.0
    %1519 = vmatprep.subr.mxu0 0.0
    %1520 = vmatpush1.msra.mxu0 0.0
    %1521 = vmatprep.subr.mxu0 0.0
    %1522 = vmatpush1.msra.mxu0 0.0
    %1523 = vmatprep.subr.mxu0 0.0
    %1524 = vmatpush1.msra.mxu0 0.0
    %1525 = vmatprep.subr.mxu0 0.0
    %1526 = vmatpush1.msra.mxu0 0.0
    %1527 = vmatprep.subr.mxu0 0.0
    %1528 = vmatpush1.msra.mxu0 0.0
    %1529 = vmatprep.subr.mxu0 0.0
    %1530 = vmatpush1.msra.mxu0 0.0
    %1531 = vmatprep.subr.mxu0 0.0
    %1532 = vmatpush1.msra.mxu0 0.0
    %1533 = vmatprep.subr.mxu0 0.0
    %1534 = vmatpush1.msra.mxu0 0.0
    %1535 = vmatprep.mubr.f32.mxu0 0.0
    %1536 = vmatmul.mubr.f32.gmra.mrb[0].mxu0 %v1469
    %v1537 = vpop.f32.mrb[0].mxu0
    %v1538 = vadd.f32 0.0, %v1537
    %v1539 = vpop.f32.mrb[0].mxu0
    %1540 = vdwg.mxu0
    %1542 = vrot.lane.b32.xlu0 %v1538, 16
    %v1543 = vpop.permute.xlu0 %1542
    %1545 = vst.msk [vmem:[#allocation2 + $0x8] sm:$0xff] %vm756, %v1543
    %1546 = vrot.lane.b32.xlu0 %v157, 104
    %v1547 = vpop.permute.xlu0 %1546
    %1548 = vrot.lane.b32.xlu0 %v157, 72
    %v1549 = vpop.permute.xlu0 %1548
    %v1550 = vsel %vm168, %v1547, 0
    %v1552 = vsel %vm168, %v1549, 0
    %1554 = vmatprep.subr.mxu0 0.0
    %1555 = vmatpush1.xpose.msra.mxu0 %v1552
    %1556 = vmatprep.subr.mxu0 0.0
    %1557 = vmatpush1.xpose.msra.mxu0 0.0
    %1558 = vmatprep.subr.mxu0 0.0
    %1559 = vmatpush1.xpose.msra.mxu0 0.0
    %1560 = vmatprep.subr.mxu0 0.0
    %1561 = vmatpush1.xpose.msra.mxu0 0.0
    %1562 = vmatprep.subr.mxu0 0.0
    %1563 = vmatpush1.xpose.msra.mxu0 0.0
    %1564 = vmatprep.subr.mxu0 0.0
    %1565 = vmatpush1.xpose.msra.mxu0 0.0
    %1566 = vmatprep.subr.mxu0 0.0
    %1567 = vmatpush1.xpose.msra.mxu0 0.0
    %1568 = vmatprep.subr.mxu0 0.0
    %1569 = vmatpush1.xpose.msra.mxu0 0.0
    %1570 = vmatprep.subr.mxu0 0.0
    %1571 = vmatpush1.xpose.msra.mxu0 0.0
    %1572 = vmatprep.subr.mxu0 0.0
    %1573 = vmatpush1.xpose.msra.mxu0 0.0
    %1574 = vmatprep.subr.mxu0 0.0
    %1575 = vmatpush1.xpose.msra.mxu0 0.0
    %1576 = vmatprep.subr.mxu0 0.0
    %1577 = vmatpush1.xpose.msra.mxu0 0.0
    %1578 = vmatprep.subr.mxu0 0.0
    %1579 = vmatpush1.xpose.msra.mxu0 0.0
    %1580 = vmatprep.subr.mxu0 0.0
    %1581 = vmatpush1.xpose.msra.mxu0 0.0
    %1582 = vmatprep.subr.mxu0 0.0
    %1583 = vmatpush1.xpose.msra.mxu0 0.0
    %1584 = vmatprep.subr.mxu0 0.0
    %1585 = vmatpush1.xpose.msra.mxu0 0.0
    %1586 = vmatprep.subr.mxu0 0.0
    %1587 = vmatpush1.xpose.msra.mxu0 0.0
    %1588 = vmatprep.subr.mxu0 0.0
    %1589 = vmatpush1.xpose.msra.mxu0 0.0
    %1590 = vmatprep.subr.mxu0 0.0
    %1591 = vmatpush1.xpose.msra.mxu0 0.0
    %1592 = vmatprep.subr.mxu0 0.0
    %1593 = vmatpush1.xpose.msra.mxu0 0.0
    %1594 = vmatprep.subr.mxu0 0.0
    %1595 = vmatpush1.xpose.msra.mxu0 0.0
    %1596 = vmatprep.subr.mxu0 0.0
    %1597 = vmatpush1.xpose.msra.mxu0 0.0
    %1598 = vmatprep.subr.mxu0 0.0
    %1599 = vmatpush1.xpose.msra.mxu0 0.0
    %1600 = vmatprep.subr.mxu0 0.0
    %1601 = vmatpush1.xpose.msra.mxu0 0.0
    %1602 = vmatprep.subr.mxu0 0.0
    %1603 = vmatpush1.xpose.msra.mxu0 0.0
    %1604 = vmatprep.subr.mxu0 0.0
    %1605 = vmatpush1.xpose.msra.mxu0 0.0
    %1606 = vmatprep.subr.mxu0 0.0
    %1607 = vmatpush1.xpose.msra.mxu0 0.0
    %1608 = vmatprep.subr.mxu0 0.0
    %1609 = vmatpush1.xpose.msra.mxu0 0.0
    %1610 = vmatprep.subr.mxu0 0.0
    %1611 = vmatpush1.xpose.msra.mxu0 0.0
    %1612 = vmatprep.subr.mxu0 0.0
    %1613 = vmatpush1.xpose.msra.mxu0 0.0
    %1614 = vmatprep.subr.mxu0 0.0
    %1615 = vmatpush1.xpose.msra.mxu0 0.0
    %1616 = vmatprep.subr.mxu0 0.0
    %1617 = vmatpush1.xpose.msra.mxu0 0.0
    %1618 = vmatprep.mubr.f32.mxu0 0.0
    %1619 = vmatmul.mubr.f32.gmra.mrb[0].mxu0 %v1550
    %v1620 = vpop.f32.mrb[0].mxu0
    %v1621 = vadd.f32 0.0, %v1620
    %v1622 = vpop.f32.mrb[0].mxu0
    %1623 = vdwg.mxu0
    %v1624 = vmul.f32 %v1621, 0.35355338
    %v1625 = vsel %vm164, %v1624, -inf
    %v1626 = vsel %vm168, %v1625, -inf
    %1627 = vmax.xlane.f32.xlu0 %v1626
    %v1628 = vpop.xlane.xlu0 %1627
    %v1629 = vsub.f32 %v1625, %v1628
    %v1630 = vmul.f32 %v1629, 1.442695
    %v1631 = vpow.pop %v1630
    %v1632 = vsel %vm168, %v1631, 0.0
    %1633 = vadd.xlane.f32.xlu0 %v1632
    %v1634 = vpop.xlane.xlu0 %1633
    %v1635 = vrcp.pop %v1634
    %v1636 = vmul.f32 %v1631, %v1635
    %v1637 = vsel %vm164, %v1629, 0.0
    %v1638 = vlog2.pop %v1634
    %v1639 = vmul.f32 %v1638, 0.6931472
    %v1640 = vsel %vm259, %v1639, 0.0
    %1641 = vadd.xlane.f32.xlu0 %v1640
    %v1642 = vpop.xlane.xlu0 %1641
    %v1643 = vrot.slane %v1642, 4
    %v1644 = vadd.f32 %v1642, %v1643
    %v1645 = vrot.slane %v1644, 2
    %v1646 = vadd.f32 %v1644, %v1645
    %v1647 = vrot.slane %v1646, 1
    %v1648 = vadd.f32 %v1646, %v1647
    %s1649 = vtos %v1648
    %v1650 = vmul.f32 %v1636, %v1637
    %v1651 = vsel %vm168, %v1650, 0.0
    %1652 = vadd.xlane.f32.xlu0 %v1651
    %v1653 = vpop.xlane.xlu0 %1652
    %v1654 = vrot.slane %v1653, 4
    %v1655 = vadd.f32 %v1653, %v1654
    %v1656 = vrot.slane %v1655, 2
    %v1657 = vadd.f32 %v1655, %v1656
    %v1658 = vrot.slane %v1657, 1
    %v1659 = vadd.f32 %v1657, %v1658
    %s1660 = vtos %v1659
    %s1661 = ssub.f32 %s1649, %s1660
    %s1662 = sadd.f32 %s1464, %s1661
    %1663 = vrot.lane.b32.xlu0 %v157, 40
    %v1664 = vpop.permute.xlu0 %1663
    %v1667 = vsel %vm168, %v1636, 0
    %1669 = vmatprep.subr.mxu0 0.0
    %1670 = vmatpush1.msra.mxu0 %v1664
    %1671 = vmatprep.subr.mxu0 0.0
    %1672 = vmatpush1.msra.mxu0 0.0
    %1673 = vmatprep.subr.mxu0 0.0
    %1674 = vmatpush1.msra.mxu0 0.0
    %1675 = vmatprep.subr.mxu0 0.0
    %1676 = vmatpush1.msra.mxu0 0.0
    %1677 = vmatprep.subr.mxu0 0.0
    %1678 = vmatpush1.msra.mxu0 0.0
    %1679 = vmatprep.subr.mxu0 0.0
    %1680 = vmatpush1.msra.mxu0 0.0
    %1681 = vmatprep.subr.mxu0 0.0
    %1682 = vmatpush1.msra.mxu0 0.0
    %1683 = vmatprep.subr.mxu0 0.0
    %1684 = vmatpush1.msra.mxu0 0.0
    %1685 = vmatprep.subr.mxu0 0.0
    %1686 = vmatpush1.msra.mxu0 0.0
    %1687 = vmatprep.subr.mxu0 0.0
    %1688 = vmatpush1.msra.mxu0 0.0
    %1689 = vmatprep.subr.mxu0 0.0
    %1690 = vmatpush1.msra.mxu0 0.0
    %1691 = vmatprep.subr.mxu0 0.0
    %1692 = vmatpush1.msra.mxu0 0.0
    %1693 = vmatprep.subr.mxu0 0.0
    %1694 = vmatpush1.msra.mxu0 0.0
    %1695 = vmatprep.subr.mxu0 0.0
    %1696 = vmatpush1.msra.mxu0 0.0
    %1697 = vmatprep.subr.mxu0 0.0
    %1698 = vmatpush1.msra.mxu0 0.0
    %1699 = vmatprep.subr.mxu0 0.0
    %1700 = vmatpush1.msra.mxu0 0.0
    %1701 = vmatprep.subr.mxu0 0.0
    %1702 = vmatpush1.msra.mxu0 0.0
    %1703 = vmatprep.subr.mxu0 0.0
    %1704 = vmatpush1.msra.mxu0 0.0
    %1705 = vmatprep.subr.mxu0 0.0
    %1706 = vmatpush1.msra.mxu0 0.0
    %1707 = vmatprep.subr.mxu0 0.0
    %1708 = vmatpush1.msra.mxu0 0.0
    %1709 = vmatprep.subr.mxu0 0.0
    %1710 = vmatpush1.msra.mxu0 0.0
    %1711 = vmatprep.subr.mxu0 0.0
    %1712 = vmatpush1.msra.mxu0 0.0
    %1713 = vmatprep.subr.mxu0 0.0
    %1714 = vmatpush1.msra.mxu0 0.0
    %1715 = vmatprep.subr.mxu0 0.0
    %1716 = vmatpush1.msra.mxu0 0.0
    %1717 = vmatprep.subr.mxu0 0.0
    %1718 = vmatpush1.msra.mxu0 0.0
    %1719 = vmatprep.subr.mxu0 0.0
    %1720 = vmatpush1.msra.mxu0 0.0
    %1721 = vmatprep.subr.mxu0 0.0
    %1722 = vmatpush1.msra.mxu0 0.0
    %1723 = vmatprep.subr.mxu0 0.0
    %1724 = vmatpush1.msra.mxu0 0.0
    %1725 = vmatprep.subr.mxu0 0.0
    %1726 = vmatpush1.msra.mxu0 0.0
    %1727 = vmatprep.subr.mxu0 0.0
    %1728 = vmatpush1.msra.mxu0 0.0
    %1729 = vmatprep.subr.mxu0 0.0
    %1730 = vmatpush1.msra.mxu0 0.0
    %1731 = vmatprep.subr.mxu0 0.0
    %1732 = vmatpush1.msra.mxu0 0.0
    %1733 = vmatprep.mubr.f32.mxu0 0.0
    %1734 = vmatmul.mubr.f32.gmra.mrb[0].mxu0 %v1667
    %v1735 = vpop.f32.mrb[0].mxu0
    %v1736 = vadd.f32 0.0, %v1735
    %v1737 = vpop.f32.mrb[0].mxu0
    %1738 = vdwg.mxu0
    %1740 = vrot.lane.b32.xlu0 %v1736, 24
    %v1741 = vpop.permute.xlu0 %1740
    %1743 = vst.msk [vmem:[#allocation2 + $0x8] sm:$0xff] %vm955, %v1741
    %v1744 = vld [vmem:[#allocation2] sm:$0xff]
    %v1745 = vld [vmem:[#allocation2 + $0x8] sm:$0xff]
    %v1746 = vld [vmem:[#allocation8] sm:$0xff]
    %v1747 = vld [vmem:[#allocation8 + $0x8] sm:$0xff]
    %v1748 = vld [vmem:[#allocation8 + $0x10] sm:$0xff]
    %v1749 = vld [vmem:[#allocation8 + $0x18] sm:$0xff]
    %v1750 = vld [vmem:[%s4] sm:$0x1]
    %v1752 = vlaneseq
    %v1753 = vshrl.u32 %v1752, 7
    %v1754 = vsub.s32 0, %v1753
    %v1755 = vrot.slane %v1750, %v1754
    %v1758 = vsel %vm78, %v1744, 0
    %v1761 = vsel %vm78, %v1745, 0
    %1763 = vmatprep.subr.mxu0 0.0
    %1764 = vmatpush1.msra.mxu0 %v1746
    %1765 = vmatprep.subr.mxu0 0.0
    %1766 = vmatpush1.msra.mxu0 %v1747
    %1767 = vmatprep.subr.mxu0 0.0
    %1768 = vmatpush1.msra.mxu0 %v1748
    %1769 = vmatprep.subr.mxu0 0.0
    %1770 = vmatpush1.msra.mxu0 %v1749
    %1771 = vmatprep.subr.mxu0 0.0
    %1772 = vmatpush1.msra.mxu0 0.0
    %1773 = vmatprep.subr.mxu0 0.0
    %1774 = vmatpush1.msra.mxu0 0.0
    %1775 = vmatprep.subr.mxu0 0.0
    %1776 = vmatpush1.msra.mxu0 0.0
    %1777 = vmatprep.subr.mxu0 0.0
    %1778 = vmatpush1.msra.mxu0 0.0
    %1779 = vmatprep.subr.mxu0 0.0
    %1780 = vmatpush1.msra.mxu0 0.0
    %1781 = vmatprep.subr.mxu0 0.0
    %1782 = vmatpush1.msra.mxu0 0.0
    %1783 = vmatprep.subr.mxu0 0.0
    %1784 = vmatpush1.msra.mxu0 0.0
    %1785 = vmatprep.subr.mxu0 0.0
    %1786 = vmatpush1.msra.mxu0 0.0
    %1787 = vmatprep.subr.mxu0 0.0
    %1788 = vmatpush1.msra.mxu0 0.0
    %1789 = vmatprep.subr.mxu0 0.0
    %1790 = vmatpush1.msra.mxu0 0.0
    %1791 = vmatprep.subr.mxu0 0.0
    %1792 = vmatpush1.msra.mxu0 0.0
    %1793 = vmatprep.subr.mxu0 0.0
    %1794 = vmatpush1.msra.mxu0 0.0
    %1795 = vmatprep.subr.mxu0 0.0
    %1796 = vmatpush1.msra.mxu0 0.0
    %1797 = vmatprep.subr.mxu0 0.0
    %1798 = vmatpush1.msra.mxu0 0.0
    %1799 = vmatprep.subr.mxu0 0.0
    %1800 = vmatpush1.msra.mxu0 0.0
    %1801 = vmatprep.subr.mxu0 0.0
    %1802 = vmatpush1.msra.mxu0 0.0
    %1803 = vmatprep.subr.mxu0 0.0
    %1804 = vmatpush1.msra.mxu0 0.0
    %1805 = vmatprep.subr.mxu0 0.0
    %1806 = vmatpush1.msra.mxu0 0.0
    %1807 = vmatprep.subr.mxu0 0.0
    %1808 = vmatpush1.msra.mxu0 0.0
    %1809 = vmatprep.subr.mxu0 0.0
    %1810 = vmatpush1.msra.mxu0 0.0
    %1811 = vmatprep.subr.mxu0 0.0
    %1812 = vmatpush1.msra.mxu0 0.0
    %1813 = vmatprep.subr.mxu0 0.0
    %1814 = vmatpush1.msra.mxu0 0.0
    %1815 = vmatprep.subr.mxu0 0.0
    %1816 = vmatpush1.msra.mxu0 0.0
    %1817 = vmatprep.subr.mxu0 0.0
    %1818 = vmatpush1.msra.mxu0 0.0
    %1819 = vmatprep.subr.mxu0 0.0
    %1820 = vmatpush1.msra.mxu0 0.0
    %1821 = vmatprep.subr.mxu0 0.0
    %1822 = vmatpush1.msra.mxu0 0.0
    %1823 = vmatprep.subr.mxu0 0.0
    %1824 = vmatpush1.msra.mxu0 0.0
    %1825 = vmatprep.subr.mxu0 0.0
    %1826 = vmatpush1.msra.mxu0 0.0
    %1827 = vmatprep.mubr.f32.mxu0 0.0
    %1828 = vmatmul.mubr.f32.gmra.mrb[0].mxu0 %v1758
    %v1829 = vpop.f32.mrb[0].mxu0
    %v1830 = vadd.f32 %v1755, %v1829
    %v1831 = vpop.f32.mrb[0].mxu0
    %1832 = vmatprep.mubr.f32.mxu0 0.0
    %1833 = vmatmul.mubr.f32.gmra.mrb[0].mxu0 %v1761
    %v1834 = vpop.f32.mrb[0].mxu0
    %v1835 = vadd.f32 %v1755, %v1834
    %v1836 = vpop.f32.mrb[0].mxu0
    %1837 = vdwg.mxu0
    %1838 = vst.msk [vmem:[#allocation9] sm:$0xff] %vm78, %v1830
    %1839 = vst.msk [vmem:[#allocation9 + $0x8] sm:$0xff] %vm78, %v1835
    %v1840 = vrcp.pop 64.0
    %s1841 = vtos %v1840
    %s1842 = smul.f32 %s1662, %s1841
    %v1843 = vstv %s1842
    %1844 = vst [vmem:[#allocation10] sm:$0x1] %v1843
    // Predicated region
    $region34: #{tpu_custom_call.1} parent=1 // pred_check
      _
    $region35: #{tpu_custom_call.1} parent=1 // pred_check_branch
      %1846 = sbr.rel (0) target = $region37
    $region36: #{tpu_custom_call.1} parent=1 // pred_region
      %s1848 = ssub.s32 256, 256
      %1849 = vsyncadd [#allocation5], %s1848
      %s1850 = sshll.u32 [#allocation9], 4
      %s1851 = int_to_ptr.vmem [resolvable:$true] %s1850
      %1856 = dma.vmem_to_hbm [thread:$0]  %s1851, 256, %s5, [#allocation5], 128, 128, 8
    $region37: #{tpu_custom_call.1} parent=1 // pred_fallthru
      _
    // Predicated region
    $region38: #{tpu_custom_call.1} parent=1 // pred_check
      _
    $region39: #{tpu_custom_call.1} parent=1 // pred_check_branch
      %1858 = sbr.rel (0) target = $region41
    $region40: #{tpu_custom_call.1} parent=1 // pred_region
      %s1860 = ssub.s32 16, 16
      %1861 = vsyncadd [#allocation11], %s1860
      %s1863 = sshll.u32 [#allocation10], 4
      %s1864 = int_to_ptr.vmem [resolvable:$true] %s1863
      %1866 = dma.vmem_to_hbm [thread:$0]  %s1864, 16, %s6, [#allocation11]
    $region41: #{tpu_custom_call.1} parent=1 // pred_fallthru
      _
    // Predicated region
    $region42: #{tpu_custom_call.1} parent=1 // pred_check
      _
    $region43: #{tpu_custom_call.1} parent=1 // pred_check_branch
      %1868 = sbr.rel (0) target = $region45
    $region44: #{tpu_custom_call.1} parent=1 // pred_region
      %1869 = dma.done [#allocation5], 256
    $region45: #{tpu_custom_call.1} parent=1 // pred_fallthru
      _
    // Predicated region
    $region46: #{tpu_custom_call.1} parent=1 // pred_check
      _
    $region47: #{tpu_custom_call.1} parent=1 // pred_check_branch
      %1871 = sbr.rel (0) target = $region49
    $region48: #{tpu_custom_call.1} parent=1 // pred_region
      %1872 = dma.done [#allocation11], 16
    $region49: #{tpu_custom_call.1} parent=1 // pred_fallthru
      _
    %1873 = vsyncpa [#allocation4], 1
    %1874 = vsyncpa [#allocation7], 1
    %1875 = vsyncpa [#allocation5], 1
    %1876 = vsyncpa [#allocation11], 1

</llo_original>
